<compile_context>
chip_gen: v7x
topology: tpu7x:2x2x1
jax: 0.10.0
libtpu: 0.0.40
codegen_flags: <defaults>
</compile_context>

<pallas_src>
import numpy as np
import jax
import jax.numpy as jnp
from jax import lax
from jax.experimental import pallas as pl
from jax.experimental.pallas import tpu as pltpu

LANE = 128
NEG_INF = -1e30  # large-finite "minus infinity" for masked softmax lanes


def _round_up(n, m):
    return ((n + m - 1) // m) * m


def _pad2(a, rows, cols, fill=0.0):
    """Zero-(or fill-)pad a 2-D array up to (rows, cols)."""
    r, c = a.shape
    return jnp.pad(a, ((0, rows - r), (0, cols - c)), constant_values=fill)


def _make_kernel(T, PH, PL, unroll):
    """Fused decode kernel. PH/PL are the 128-padded hidden / max_length widths."""

    def kernel(x_ref, h0_ref, enc_ref,
               wx_ref, wh_ref, wa_ref, wi_ref, wo_ref,
               bx_ref, bh_ref, bi_ref, bo_ref,
               attn_ref, logp_ref, hout_ref,
               hs_scr):
        f32, bf16 = jnp.float32, jnp.bfloat16

        def step(t, h):
            # h: (1, PH) f32 carried hidden state (padded lanes stay ~0).
            # TODO(synk): dropout on the embedding is eval-mode identity here.
            x = x_ref[pl.ds(t, 1), :].astype(bf16)                      # (1, PH)

            # Fused x-projection [attn_x | comb_x] and h-projection
            # [attn_h | hh_r | hh_z | hh_n]; bf16 operands straight into the MXU.
            xw = jnp.dot(x, wx_ref[...],
                         preferred_element_type=f32) + bx_ref[...]     # (1, PL+PH)
            hw = jnp.dot(h.astype(bf16), wh_ref[...],
                         preferred_element_type=f32) + bh_ref[...]     # (1, PL+3PH)

            # attn_weights = softmax(attn(cat(x, h)))  (padded lanes biased -1e30)
            logits_a = xw[:, :PL] + hw[:, :PL]                          # (1, PL)
            m = jnp.max(logits_a, axis=-1, keepdims=True)
            e = jnp.exp(logits_a - m)
            attn_w = e / jnp.sum(e, axis=-1, keepdims=True)             # exact division
            attn_ref[pl.ds(t, 1), :] = attn_w                           # resident output row

            # attn_applied = bmm(attn_weights, encoder_outputs)
            attn_applied = jnp.dot(attn_w.astype(bf16), enc_ref[...],
                                   preferred_element_type=f32)          # (1, PH)

            # output = relu(attn_combine(cat(x, attn_applied)))
            comb = xw[:, PL:] + jnp.dot(attn_applied.astype(bf16), wa_ref[...],
                                        preferred_element_type=f32)
            g = jnp.maximum(comb, 0.0)                                  # (1, PH)

            # Single-step GRU cell (PyTorch gate order r, z, n); slices 128-aligned.
            gi = jnp.dot(g.astype(bf16), wi_ref[...],
                         preferred_element_type=f32) + bi_ref[...]     # (1, 3PH)
            gh = hw[:, PL:]                                             # (1, 3PH)
            r = jax.nn.sigmoid(gi[:, :PH] + gh[:, :PH])
            z = jax.nn.sigmoid(gi[:, PH:2 * PH] + gh[:, PH:2 * PH])
            n = jnp.tanh(gi[:, 2 * PH:] + r * gh[:, 2 * PH:])
            h_new = (1.0 - z) * n + z * h                               # (1, PH) f32

            hs_scr[pl.ds(t, 1), :] = h_new                              # stash for batched out-proj
            return h_new

        h_final = lax.fori_loop(0, T, step, h0_ref[...], unroll=unroll)
        hout_ref[...] = h_final                                         # stored once, after the loop

        # Deferred output projection + log_softmax: ONE batched matmul (M=T, not T matmuls with M=1).
        hs = hs_scr[...].astype(bf16)                                   # (T, PH)
        logits = jnp.dot(hs, wo_ref[...],
                         preferred_element_type=f32) + bo_ref[...]      # (T, PO), pad lanes ~ -1e30
        mo = jnp.max(logits, axis=-1, keepdims=True)
        logp_ref[...] = (logits - mo) - jnp.log(
            jnp.sum(jnp.exp(logits - mo), axis=-1, keepdims=True))

    return kernel


def attn_decoder_forward_seq(input_ids, hidden, encoder_outputs, params):
    """Run T teacher-forced AttnDecoderRNN steps in a single pallas_call.

    input_ids: (T,) int32; hidden: (1, 1, H); encoder_outputs: (L, H).
    Returns (log_probs (T, O), final hidden (1, 1, H), attn_weights (T, L)).
    """
    f32, bf16 = jnp.float32, jnp.bfloat16
    H = params["w_comb_x"].shape[0]
    O = params["w_out"].shape[1]
    L = encoder_outputs.shape[0]
    T = int(input_ids.shape[0])

    PH = _round_up(H, LANE)
    PL = _round_up(L, LANE)
    PO = _round_up(O, LANE)

    ids = jnp.asarray(input_ids, jnp.int32)

    # Pre-gather embedding rows host-side; zero-pad lanes to PH.
    x_emb = _pad2(jnp.take(params["embedding"].astype(f32), ids, axis=0), T, PH)
    h0 = _pad2(hidden.reshape(1, H).astype(f32), 1, PH)
    enc = _pad2(encoder_outputs.astype(f32), PL, PH).astype(bf16)

    # --- pack 128-lane-aligned bf16 weight slabs (rows zero-padded H -> PH) ---
    def wseg(w, cols):
        return _pad2(w.astype(f32), PH, cols)

    w_hh, w_ih = params["w_hh"], params["w_ih"]
    wx = jnp.concatenate([wseg(params["w_attn_x"], PL),
                          wseg(params["w_comb_x"], PH)], axis=1).astype(bf16)        # (PH, PL+PH)
    wh = jnp.concatenate([wseg(params["w_attn_h"], PL),
                          wseg(w_hh[:, 0:H], PH), wseg(w_hh[:, H:2 * H], PH),
                          wseg(w_hh[:, 2 * H:3 * H], PH)], axis=1).astype(bf16)      # (PH, PL+3PH)
    wa = wseg(params["w_comb_a"], PH).astype(bf16)                                   # (PH, PH)
    wi = jnp.concatenate([wseg(w_ih[:, 0:H], PH), wseg(w_ih[:, H:2 * H], PH),
                          wseg(w_ih[:, 2 * H:3 * H], PH)], axis=1).astype(bf16)      # (PH, 3PH)
    wo = wseg(params["w_out"], PO).astype(bf16)                                      # (PH, PO)

    # --- f32 bias slabs; padded attention / output lanes carry -1e30 (softmax mask) ---
    def bseg(b, cols, fill=0.0):
        return _pad2(b.astype(f32), 1, cols, fill=fill)

    b_hh, b_ih = params["b_hh"], params["b_ih"]
    bx = jnp.concatenate([bseg(params["b_attn"], PL, NEG_INF),
                          bseg(params["b_comb"], PH)], axis=1)                       # (1, PL+PH)
    bh = jnp.concatenate([jnp.zeros((1, PL), f32),
                          bseg(b_hh[:, 0:H], PH), bseg(b_hh[:, H:2 * H], PH),
                          bseg(b_hh[:, 2 * H:3 * H], PH)], axis=1)                   # (1, PL+3PH)
    bi = jnp.concatenate([bseg(b_ih[:, 0:H], PH), bseg(b_ih[:, H:2 * H], PH),
                          bseg(b_ih[:, 2 * H:3 * H], PH)], axis=1)                   # (1, 3PH)
    bo = bseg(params["b_out"], PO, NEG_INF)                                          # (1, PO)

    kernel = _make_kernel(T, PH, PL, unroll=(T <= 16))

    operands = (x_emb, h0, enc, wx, wh, wa, wi, wo, bx, bh, bi, bo)
    in_specs = [pl.BlockSpec(op.shape, lambda i: (0, 0)) for op in operands]

    out_shapes = (jax.ShapeDtypeStruct((T, PL), f32),   # attention weights (lane-dense)
                  jax.ShapeDtypeStruct((T, PO), f32),   # log-probs (lane-dense)
                  jax.ShapeDtypeStruct((1, PH), f32))   # final hidden
    out_specs = (pl.BlockSpec((T, PL), lambda i: (0, 0)),
                 pl.BlockSpec((T, PO), lambda i: (0, 0)),
                 pl.BlockSpec((1, PH), lambda i: (0, 0)))

    attn_p, logp_p, h_p = pl.pallas_call(
        kernel,
        out_shape=out_shapes,
        grid=(1,),                       # single invocation: all inputs resident, one writeback
        in_specs=in_specs,
        out_specs=out_specs,
        scratch_shapes=[pltpu.VMEM((T, PH), jnp.float32)],   # per-step hidden states
        compiler_params=pltpu.CompilerParams(
            dimension_semantics=("arbitrary",)),
    )(*operands)

    return logp_p[:, :O], h_p[:, :H].reshape(1, 1, H), attn_p[:, :L]


def attn_decoder_forward(input_idx, hidden, encoder_outputs, params):
    """Single decode step — same contract as AttnDecoderRNN.forward (T=1)."""
    ids = jnp.asarray(input_idx, jnp.int32).reshape(-1)
    return attn_decoder_forward_seq(ids, hidden, encoder_outputs, params)


def attn_decoder_reference(input_ids, hidden, encoder_outputs, params):
    """Pure-JAX f32 reference of the same math."""
    f32 = jnp.float32
    H = params["w_comb_x"].shape[0]
    emb = params["embedding"].astype(f32)
    w_ax, w_ah = params["w_attn_x"].astype(f32), params["w_attn_h"].astype(f32)
    w_cx, w_ca = params["w_comb_x"].astype(f32), params["w_comb_a"].astype(f32)
    w_ih, w_hh = params["w_ih"].astype(f32), params["w_hh"].astype(f32)
    w_out = params["w_out"].astype(f32)
    b_attn, b_comb = params["b_attn"].astype(f32), params["b_comb"].astype(f32)
    b_ih, b_hh = params["b_ih"].astype(f32), params["b_hh"].astype(f32)
    b_out = params["b_out"].astype(f32)

    h = hidden[0].astype(f32)
    enc = encoder_outputs.astype(f32)
    logps, attns = [], []
    for t in range(int(input_ids.shape[0])):
        x = emb[input_ids[t]][None, :]
        attn_w = jax.nn.softmax(x @ w_ax + h @ w_ah + b_attn, axis=-1)
        attn_applied = attn_w @ enc
        g = jax.nn.relu(x @ w_cx + attn_applied @ w_ca + b_comb)
        gi = x @ jnp.zeros_like(w_ih) + g @ w_ih + b_ih
        gh = h @ w_hh + b_hh
        r = jax.nn.sigmoid(gi[:, :H] + gh[:, :H])
        z = jax.nn.sigmoid(gi[:, H:2 * H] + gh[:, H:2 * H])
        n = jnp.tanh(gi[:, 2 * H:] + r * gh[:, 2 * H:])
        h = (1.0 - z) * n + z * h
        logps.append(jax.nn.log_softmax(h @ w_out + b_out, axis=-1))
        attns.append(attn_w)
    return jnp.concatenate(logps, 0), h.reshape(1, 1, H), jnp.concatenate(attns, 0)


def init_params(key, hidden_size, output_size, max_length):
    H, O, L = hidden_size, output_size, max_length
    ks = jax.random.split(key, 13)
    bf, f32 = jnp.bfloat16, jnp.float32

    def w(k, shape, fan_in, dtype):
        scale = 1.0 / jnp.sqrt(jnp.float32(fan_in))
        return jax.random.uniform(k, shape, jnp.float32, -scale, scale).astype(dtype)

    return {
        # Embedding(O, H); weights stored bf16 at rest (intentional precision contract).
        "embedding": jax.random.normal(ks[0], (O, H), jnp.float32).astype(bf),
        # attn: Linear(2H -> L), split into x-part and h-part (stored transposed).
        "w_attn_x": w(ks[1], (H, L), 2 * H, bf),
        "w_attn_h": w(ks[2], (H, L), 2 * H, bf),
        "b_attn":   w(ks[3], (1, L), 2 * H, f32),
        # attn_combine: Linear(2H -> H), split into x-part and attn-part.
        "w_comb_x": w(ks[4], (H, H), 2 * H, bf),
        "w_comb_a": w(ks[5], (H, H), 2 * H, bf),
        "b_comb":   w(ks[6], (1, H), 2 * H, f32),
        # GRU(H -> H): weight_ih/hh transposed to (H, 3H); gate order r, z, n.
        "w_ih": w(ks[7], (H, 3 * H), H, bf),
        "w_hh": w(ks[8], (H, 3 * H), H, bf),
        "b_ih": w(ks[9], (1, 3 * H), H, f32),
        "b_hh": w(ks[10], (1, 3 * H), H, f32),
        # out: Linear(H -> O), transposed.
        "w_out": w(ks[11], (H, O), H, bf),
        "b_out": w(ks[12], (1, O), H, f32),
    }


if __name__ == "__main__":
    hidden_size = 32
    output_size = 16
    max_length = 8
    num_steps = 4

    key = jax.random.PRNGKey(0)
    k_params, k_hidden, k_enc = jax.random.split(key, 3)

    params = init_params(k_params, hidden_size, output_size, max_length)
    hidden = jax.random.normal(k_hidden, (1, 1, hidden_size), jnp.float32)
    encoder_outputs = jax.random.normal(k_enc, (max_length, hidden_size), jnp.float32)

    # Multi-step (teacher-forced) decode: ONE pallas_call, one grid step,
    # in-kernel fori_loop recurrence with resident weights and deferred out-proj.
    input_ids = jnp.array([3, 7, 1, 5], dtype=jnp.int32)
    logp, new_hidden, attn_weights = attn_decoder_forward_seq(
        input_ids, hidden, encoder_outputs, params)
    jax.block_until_ready((logp, new_hidden, attn_weights))

    assert logp.shape == (num_steps, output_size)
    assert new_hidden.shape == (1, 1, hidden_size)
    assert attn_weights.shape == (num_steps, max_length)

    # Numerical check against the pure-JAX f32 reference.
    ref_logp, ref_hidden, ref_attn = attn_decoder_reference(
        input_ids, hidden, encoder_outputs, params)
    np.testing.assert_allclose(np.asarray(logp), np.asarray(ref_logp), rtol=2e-2, atol=2e-2)
    np.testing.assert_allclose(np.asarray(new_hidden), np.asarray(ref_hidden), rtol=2e-2, atol=2e-2)
    np.testing.assert_allclose(np.asarray(attn_weights), np.asarray(ref_attn), rtol=2e-2, atol=2e-2)

    # Single decode step == the original AttnDecoderRNN.forward contract.
    logp1, hidden1, attn1 = attn_decoder_forward(
        jnp.array([3], dtype=jnp.int32), hidden, encoder_outputs, params)
    jax.block_until_ready((logp1, hidden1, attn1))
    assert logp1.shape == (1, output_size)
    assert hidden1.shape == (1, 1, hidden_size)
    assert attn1.shape == (1, max_length)

    print("KERNEL_OK")
</pallas_src>

<mosaic_0001>
module attributes {stable_mosaic.version = 11 : i64} {
  func.func @kernel(%arg0: i32, %arg1: memref<4x128xf32, #tpu.memory_space<vmem>>, %arg2: memref<1x128xf32, #tpu.memory_space<vmem>>, %arg3: memref<128x128xbf16, #tpu.memory_space<vmem>>, %arg4: memref<128x256xbf16, #tpu.memory_space<vmem>>, %arg5: memref<128x512xbf16, #tpu.memory_space<vmem>>, %arg6: memref<128x128xbf16, #tpu.memory_space<vmem>>, %arg7: memref<128x384xbf16, #tpu.memory_space<vmem>>, %arg8: memref<128x128xbf16, #tpu.memory_space<vmem>>, %arg9: memref<1x256xf32, #tpu.memory_space<vmem>>, %arg10: memref<1x512xf32, #tpu.memory_space<vmem>>, %arg11: memref<1x384xf32, #tpu.memory_space<vmem>>, %arg12: memref<1x128xf32, #tpu.memory_space<vmem>>, %arg13: memref<4x128xf32, #tpu.memory_space<vmem>>, %arg14: memref<4x128xf32, #tpu.memory_space<vmem>>, %arg15: memref<1x128xf32, #tpu.memory_space<vmem>>, %arg16: memref<4x128xf32, #tpu.memory_space<vmem>>) attributes {dimension_semantics = [#tpu.dimension_semantics<arbitrary>], iteration_bounds = array<i64: 1>, scalar_prefetch = 0 : i64, scratch_operands = 1 : i64, tpu.core_type = #tpu.core_type<tc>, window_params = [{pipeline_mode = #tpu.pipeline_mode<synchronous>, transform_indices = @transform_0, window_bounds = array<i64: 4, 128>}, {pipeline_mode = #tpu.pipeline_mode<synchronous>, transform_indices = @transform_1, window_bounds = array<i64: 1, 128>}, {pipeline_mode = #tpu.pipeline_mode<synchronous>, transform_indices = @transform_2, window_bounds = array<i64: 128, 128>}, {pipeline_mode = #tpu.pipeline_mode<synchronous>, transform_indices = @transform_3, window_bounds = array<i64: 128, 256>}, {pipeline_mode = #tpu.pipeline_mode<synchronous>, transform_indices = @transform_4, window_bounds = array<i64: 128, 512>}, {pipeline_mode = #tpu.pipeline_mode<synchronous>, transform_indices = @transform_5, window_bounds = array<i64: 128, 128>}, {pipeline_mode = #tpu.pipeline_mode<synchronous>, transform_indices = @transform_6, window_bounds = array<i64: 128, 384>}, {pipeline_mode = #tpu.pipeline_mode<synchronous>, transform_indices = @transform_7, window_bounds = array<i64: 128, 128>}, {pipeline_mode = #tpu.pipeline_mode<synchronous>, transform_indices = @transform_8, window_bounds = array<i64: 1, 256>}, {pipeline_mode = #tpu.pipeline_mode<synchronous>, transform_indices = @transform_9, window_bounds = array<i64: 1, 512>}, {pipeline_mode = #tpu.pipeline_mode<synchronous>, transform_indices = @transform_10, window_bounds = array<i64: 1, 384>}, {pipeline_mode = #tpu.pipeline_mode<synchronous>, transform_indices = @transform_11, window_bounds = array<i64: 1, 128>}, {pipeline_mode = #tpu.pipeline_mode<synchronous>, transform_indices = @transform_12, window_bounds = array<i64: 4, 128>}, {pipeline_mode = #tpu.pipeline_mode<synchronous>, transform_indices = @transform_13, window_bounds = array<i64: 4, 128>}, {pipeline_mode = #tpu.pipeline_mode<synchronous>, transform_indices = @transform_14, window_bounds = array<i64: 1, 128>}]} {
    %c0 = arith.constant 0 : index
    %c0_0 = arith.constant 0 : index
    %0 = vector.load %arg2[%c0, %c0_0] : memref<1x128xf32, #tpu.memory_space<vmem>>, vector<1x128xf32>
    %c0_i32 = arith.constant 0 : i32
    %1 = arith.index_cast %c0_i32 : i32 to index
    %c0_1 = arith.constant 0 : index
    %2 = vector.load %arg1[%1, %c0_1] : memref<4x128xf32, #tpu.memory_space<vmem>>, vector<1x128xf32>
    %3 = arith.truncf %2 : vector<1x128xf32> to vector<1x128xbf16>
    %c0_2 = arith.constant 0 : index
    %c0_3 = arith.constant 0 : index
    %4 = vector.load %arg4[%c0_2, %c0_3] : memref<128x256xbf16, #tpu.memory_space<vmem>>, vector<128x256xbf16>
    %cst = arith.constant dense<0.000000e+00> : vector<1x256xf32>
    %5 = tpu.matmul %3, %4, %cst {dimension_numbers = #tpu.dot_dimension_numbers<[1], [0], [0], [1], [0, 0, 1, 1], [], []>} : vector<1x128xbf16>, vector<128x256xbf16>, vector<1x256xf32> -> vector<1x256xf32>
    %c0_4 = arith.constant 0 : index
    %c0_5 = arith.constant 0 : index
    %6 = vector.load %arg9[%c0_4, %c0_5] : memref<1x256xf32, #tpu.memory_space<vmem>>, vector<1x256xf32>
    %7 = arith.addf %5, %6 : vector<1x256xf32>
    %8 = arith.truncf %0 : vector<1x128xf32> to vector<1x128xbf16>
    %c0_6 = arith.constant 0 : index
    %c0_7 = arith.constant 0 : index
    %9 = vector.load %arg5[%c0_6, %c0_7] : memref<128x512xbf16, #tpu.memory_space<vmem>>, vector<128x512xbf16>
    %cst_8 = arith.constant dense<0.000000e+00> : vector<1x512xf32>
    %10 = tpu.matmul %8, %9, %cst_8 {dimension_numbers = #tpu.dot_dimension_numbers<[1], [0], [0], [1], [0, 0, 1, 1], [], []>} : vector<1x128xbf16>, vector<128x512xbf16>, vector<1x512xf32> -> vector<1x512xf32>
    %c0_9 = arith.constant 0 : index
    %c0_10 = arith.constant 0 : index
    %11 = vector.load %arg10[%c0_9, %c0_10] : memref<1x512xf32, #tpu.memory_space<vmem>>, vector<1x512xf32>
    %12 = arith.addf %10, %11 : vector<1x512xf32>
    %13 = vector.extract_strided_slice %7 {offsets = [0, 0], sizes = [1, 128], strides = [1, 1]} : vector<1x256xf32> to vector<1x128xf32>
    %14 = vector.extract_strided_slice %12 {offsets = [0, 0], sizes = [1, 128], strides = [1, 1]} : vector<1x512xf32> to vector<1x128xf32>
    %15 = arith.addf %13, %14 : vector<1x128xf32>
    %cst_11 = arith.constant dense<0xFF800000> : vector<1xf32>
    %16 = vector.multi_reduction <maximumf>, %15, %cst_11 [1] : vector<1x128xf32> to vector<1xf32>
    %17 = vector.shape_cast %16 : vector<1xf32> to vector<1x1xf32>
    %18 = vector.broadcast %17 : vector<1x1xf32> to vector<1x128xf32>
    %19 = arith.subf %15, %18 : vector<1x128xf32>
    %20 = math.exp %19 : vector<1x128xf32>
    %cst_12 = arith.constant dense<0.000000e+00> : vector<1xf32>
    %21 = vector.multi_reduction <add>, %20, %cst_12 [1] : vector<1x128xf32> to vector<1xf32>
    %22 = vector.shape_cast %21 : vector<1xf32> to vector<1x1xf32>
    %23 = vector.broadcast %22 : vector<1x1xf32> to vector<1x128xf32>
    %24 = arith.divf %20, %23 : vector<1x128xf32>
    %25 = arith.index_cast %c0_i32 : i32 to index
    %c0_13 = arith.constant 0 : index
    %26 = vector.load %arg13[%25, %c0_13] : memref<4x128xf32, #tpu.memory_space<vmem>>, vector<1x128xf32>
    tpu.vector_store %arg13[%25, %c0_13], %24 {strides = array<i32>} : memref<4x128xf32, #tpu.memory_space<vmem>>, vector<1x128xf32>,
    %27 = arith.truncf %24 : vector<1x128xf32> to vector<1x128xbf16>
    %c0_14 = arith.constant 0 : index
    %c0_15 = arith.constant 0 : index
    %28 = vector.load %arg3[%c0_14, %c0_15] : memref<128x128xbf16, #tpu.memory_space<vmem>>, vector<128x128xbf16>
    %cst_16 = arith.constant dense<0.000000e+00> : vector<1x128xf32>
    %29 = tpu.matmul %27, %28, %cst_16 {dimension_numbers = #tpu.dot_dimension_numbers<[1], [0], [0], [1], [0, 0, 1, 1], [], []>} : vector<1x128xbf16>, vector<128x128xbf16>, vector<1x128xf32> -> vector<1x128xf32>
    %30 = vector.extract_strided_slice %7 {offsets = [0, 128], sizes = [1, 128], strides = [1, 1]} : vector<1x256xf32> to vector<1x128xf32>
    %31 = arith.truncf %29 : vector<1x128xf32> to vector<1x128xbf16>
    %c0_17 = arith.constant 0 : index
    %c0_18 = arith.constant 0 : index
    %32 = vector.load %arg6[%c0_17, %c0_18] : memref<128x128xbf16, #tpu.memory_space<vmem>>, vector<128x128xbf16>
    %cst_19 = arith.constant dense<0.000000e+00> : vector<1x128xf32>
    %33 = tpu.matmul %31, %32, %cst_19 {dimension_numbers = #tpu.dot_dimension_numbers<[1], [0], [0], [1], [0, 0, 1, 1], [], []>} : vector<1x128xbf16>, vector<128x128xbf16>, vector<1x128xf32> -> vector<1x128xf32>
    %34 = arith.addf %30, %33 : vector<1x128xf32>
    %cst_20 = arith.constant 0.000000e+00 : f32
    %35 = vector.broadcast %cst_20 : f32 to vector<1x128xf32>
    %36 = arith.maximumf %34, %35 : vector<1x128xf32>
    %37 = arith.truncf %36 : vector<1x128xf32> to vector<1x128xbf16>
    %c0_21 = arith.constant 0 : index
    %c0_22 = arith.constant 0 : index
    %38 = vector.load %arg7[%c0_21, %c0_22] : memref<128x384xbf16, #tpu.memory_space<vmem>>, vector<128x384xbf16>
    %cst_23 = arith.constant dense<0.000000e+00> : vector<1x384xf32>
    %39 = tpu.matmul %37, %38, %cst_23 {dimension_numbers = #tpu.dot_dimension_numbers<[1], [0], [0], [1], [0, 0, 1, 1], [], []>} : vector<1x128xbf16>, vector<128x384xbf16>, vector<1x384xf32> -> vector<1x384xf32>
    %c0_24 = arith.constant 0 : index
    %c0_25 = arith.constant 0 : index
    %40 = vector.load %arg11[%c0_24, %c0_25] : memref<1x384xf32, #tpu.memory_space<vmem>>, vector<1x384xf32>
    %41 = arith.addf %39, %40 : vector<1x384xf32>
    %42 = vector.extract_strided_slice %12 {offsets = [0, 128], sizes = [1, 384], strides = [1, 1]} : vector<1x512xf32> to vector<1x384xf32>
    %43 = vector.extract_strided_slice %41 {offsets = [0, 0], sizes = [1, 128], strides = [1, 1]} : vector<1x384xf32> to vector<1x128xf32>
    %44 = vector.extract_strided_slice %42 {offsets = [0, 0], sizes = [1, 128], strides = [1, 1]} : vector<1x384xf32> to vector<1x128xf32>
    %45 = arith.addf %43, %44 : vector<1x128xf32>
    %46 = arith.negf %45 : vector<1x128xf32>
    %47 = math.exp %46 : vector<1x128xf32>
    %cst_26 = arith.constant 1.000000e+00 : f32
    %48 = vector.broadcast %cst_26 : f32 to vector<1x128xf32>
    %49 = arith.addf %48, %47 : vector<1x128xf32>
    %50 = arith.divf %48, %49 : vector<1x128xf32>
    %51 = vector.extract_strided_slice %41 {offsets = [0, 128], sizes = [1, 128], strides = [1, 1]} : vector<1x384xf32> to vector<1x128xf32>
    %52 = vector.extract_strided_slice %42 {offsets = [0, 128], sizes = [1, 128], strides = [1, 1]} : vector<1x384xf32> to vector<1x128xf32>
    %53 = arith.addf %51, %52 : vector<1x128xf32>
    %54 = arith.negf %53 : vector<1x128xf32>
    %55 = math.exp %54 : vector<1x128xf32>
    %cst_27 = arith.constant 1.000000e+00 : f32
    %56 = vector.broadcast %cst_27 : f32 to vector<1x128xf32>
    %57 = arith.addf %56, %55 : vector<1x128xf32>
    %58 = arith.divf %56, %57 : vector<1x128xf32>
    %59 = vector.extract_strided_slice %41 {offsets = [0, 256], sizes = [1, 128], strides = [1, 1]} : vector<1x384xf32> to vector<1x128xf32>
    %60 = vector.extract_strided_slice %42 {offsets = [0, 256], sizes = [1, 128], strides = [1, 1]} : vector<1x384xf32> to vector<1x128xf32>
    %61 = arith.mulf %50, %60 : vector<1x128xf32>
    %62 = arith.addf %59, %61 : vector<1x128xf32>
    %63 = math.tanh %62 : vector<1x128xf32>
    %cst_28 = arith.constant 1.000000e+00 : f32
    %64 = vector.broadcast %cst_28 : f32 to vector<1x128xf32>
    %65 = arith.subf %64, %58 : vector<1x128xf32>
    %66 = arith.mulf %65, %63 : vector<1x128xf32>
    %67 = arith.mulf %58, %0 : vector<1x128xf32>
    %68 = arith.addf %66, %67 : vector<1x128xf32>
    %69 = arith.index_cast %c0_i32 : i32 to index
    %c0_29 = arith.constant 0 : index
    %70 = vector.load %arg16[%69, %c0_29] : memref<4x128xf32, #tpu.memory_space<vmem>>, vector<1x128xf32>
    tpu.vector_store %arg16[%69, %c0_29], %68 {strides = array<i32>} : memref<4x128xf32, #tpu.memory_space<vmem>>, vector<1x128xf32>,
    %c1_i32 = arith.constant 1 : i32
    %71 = arith.index_cast %c1_i32 : i32 to index
    %c0_30 = arith.constant 0 : index
    %72 = vector.load %arg1[%71, %c0_30] : memref<4x128xf32, #tpu.memory_space<vmem>>, vector<1x128xf32>
    %73 = arith.truncf %72 : vector<1x128xf32> to vector<1x128xbf16>
    %c0_31 = arith.constant 0 : index
    %c0_32 = arith.constant 0 : index
    %74 = vector.load %arg4[%c0_31, %c0_32] : memref<128x256xbf16, #tpu.memory_space<vmem>>, vector<128x256xbf16>
    %cst_33 = arith.constant dense<0.000000e+00> : vector<1x256xf32>
    %75 = tpu.matmul %73, %74, %cst_33 {dimension_numbers = #tpu.dot_dimension_numbers<[1], [0], [0], [1], [0, 0, 1, 1], [], []>} : vector<1x128xbf16>, vector<128x256xbf16>, vector<1x256xf32> -> vector<1x256xf32>
    %c0_34 = arith.constant 0 : index
    %c0_35 = arith.constant 0 : index
    %76 = vector.load %arg9[%c0_34, %c0_35] : memref<1x256xf32, #tpu.memory_space<vmem>>, vector<1x256xf32>
    %77 = arith.addf %75, %76 : vector<1x256xf32>
    %78 = arith.truncf %68 : vector<1x128xf32> to vector<1x128xbf16>
    %c0_36 = arith.constant 0 : index
    %c0_37 = arith.constant 0 : index
    %79 = vector.load %arg5[%c0_36, %c0_37] : memref<128x512xbf16, #tpu.memory_space<vmem>>, vector<128x512xbf16>
    %cst_38 = arith.constant dense<0.000000e+00> : vector<1x512xf32>
    %80 = tpu.matmul %78, %79, %cst_38 {dimension_numbers = #tpu.dot_dimension_numbers<[1], [0], [0], [1], [0, 0, 1, 1], [], []>} : vector<1x128xbf16>, vector<128x512xbf16>, vector<1x512xf32> -> vector<1x512xf32>
    %c0_39 = arith.constant 0 : index
    %c0_40 = arith.constant 0 : index
    %81 = vector.load %arg10[%c0_39, %c0_40] : memref<1x512xf32, #tpu.memory_space<vmem>>, vector<1x512xf32>
    %82 = arith.addf %80, %81 : vector<1x512xf32>
    %83 = vector.extract_strided_slice %77 {offsets = [0, 0], sizes = [1, 128], strides = [1, 1]} : vector<1x256xf32> to vector<1x128xf32>
    %84 = vector.extract_strided_slice %82 {offsets = [0, 0], sizes = [1, 128], strides = [1, 1]} : vector<1x512xf32> to vector<1x128xf32>
    %85 = arith.addf %83, %84 : vector<1x128xf32>
    %cst_41 = arith.constant dense<0xFF800000> : vector<1xf32>
    %86 = vector.multi_reduction <maximumf>, %85, %cst_41 [1] : vector<1x128xf32> to vector<1xf32>
    %87 = vector.shape_cast %86 : vector<1xf32> to vector<1x1xf32>
    %88 = vector.broadcast %87 : vector<1x1xf32> to vector<1x128xf32>
    %89 = arith.subf %85, %88 : vector<1x128xf32>
    %90 = math.exp %89 : vector<1x128xf32>
    %cst_42 = arith.constant dense<0.000000e+00> : vector<1xf32>
    %91 = vector.multi_reduction <add>, %90, %cst_42 [1] : vector<1x128xf32> to vector<1xf32>
    %92 = vector.shape_cast %91 : vector<1xf32> to vector<1x1xf32>
    %93 = vector.broadcast %92 : vector<1x1xf32> to vector<1x128xf32>
    %94 = arith.divf %90, %93 : vector<1x128xf32>
    %95 = arith.index_cast %c1_i32 : i32 to index
    %c0_43 = arith.constant 0 : index
    %96 = vector.load %arg13[%95, %c0_43] : memref<4x128xf32, #tpu.memory_space<vmem>>, vector<1x128xf32>
    tpu.vector_store %arg13[%95, %c0_43], %94 {strides = array<i32>} : memref<4x128xf32, #tpu.memory_space<vmem>>, vector<1x128xf32>,
    %97 = arith.truncf %94 : vector<1x128xf32> to vector<1x128xbf16>
    %c0_44 = arith.constant 0 : index
    %c0_45 = arith.constant 0 : index
    %98 = vector.load %arg3[%c0_44, %c0_45] : memref<128x128xbf16, #tpu.memory_space<vmem>>, vector<128x128xbf16>
    %cst_46 = arith.constant dense<0.000000e+00> : vector<1x128xf32>
    %99 = tpu.matmul %97, %98, %cst_46 {dimension_numbers = #tpu.dot_dimension_numbers<[1], [0], [0], [1], [0, 0, 1, 1], [], []>} : vector<1x128xbf16>, vector<128x128xbf16>, vector<1x128xf32> -> vector<1x128xf32>
    %100 = vector.extract_strided_slice %77 {offsets = [0, 128], sizes = [1, 128], strides = [1, 1]} : vector<1x256xf32> to vector<1x128xf32>
    %101 = arith.truncf %99 : vector<1x128xf32> to vector<1x128xbf16>
    %c0_47 = arith.constant 0 : index
    %c0_48 = arith.constant 0 : index
    %102 = vector.load %arg6[%c0_47, %c0_48] : memref<128x128xbf16, #tpu.memory_space<vmem>>, vector<128x128xbf16>
    %cst_49 = arith.constant dense<0.000000e+00> : vector<1x128xf32>
    %103 = tpu.matmul %101, %102, %cst_49 {dimension_numbers = #tpu.dot_dimension_numbers<[1], [0], [0], [1], [0, 0, 1, 1], [], []>} : vector<1x128xbf16>, vector<128x128xbf16>, vector<1x128xf32> -> vector<1x128xf32>
    %104 = arith.addf %100, %103 : vector<1x128xf32>
    %cst_50 = arith.constant 0.000000e+00 : f32
    %105 = vector.broadcast %cst_50 : f32 to vector<1x128xf32>
    %106 = arith.maximumf %104, %105 : vector<1x128xf32>
    %107 = arith.truncf %106 : vector<1x128xf32> to vector<1x128xbf16>
    %c0_51 = arith.constant 0 : index
    %c0_52 = arith.constant 0 : index
    %108 = vector.load %arg7[%c0_51, %c0_52] : memref<128x384xbf16, #tpu.memory_space<vmem>>, vector<128x384xbf16>
    %cst_53 = arith.constant dense<0.000000e+00> : vector<1x384xf32>
    %109 = tpu.matmul %107, %108, %cst_53 {dimension_numbers = #tpu.dot_dimension_numbers<[1], [0], [0], [1], [0, 0, 1, 1], [], []>} : vector<1x128xbf16>, vector<128x384xbf16>, vector<1x384xf32> -> vector<1x384xf32>
    %c0_54 = arith.constant 0 : index
    %c0_55 = arith.constant 0 : index
    %110 = vector.load %arg11[%c0_54, %c0_55] : memref<1x384xf32, #tpu.memory_space<vmem>>, vector<1x384xf32>
    %111 = arith.addf %109, %110 : vector<1x384xf32>
    %112 = vector.extract_strided_slice %82 {offsets = [0, 128], sizes = [1, 384], strides = [1, 1]} : vector<1x512xf32> to vector<1x384xf32>
    %113 = vector.extract_strided_slice %111 {offsets = [0, 0], sizes = [1, 128], strides = [1, 1]} : vector<1x384xf32> to vector<1x128xf32>
    %114 = vector.extract_strided_slice %112 {offsets = [0, 0], sizes = [1, 128], strides = [1, 1]} : vector<1x384xf32> to vector<1x128xf32>
    %115 = arith.addf %113, %114 : vector<1x128xf32>
    %116 = arith.negf %115 : vector<1x128xf32>
    %117 = math.exp %116 : vector<1x128xf32>
    %cst_56 = arith.constant 1.000000e+00 : f32
    %118 = vector.broadcast %cst_56 : f32 to vector<1x128xf32>
    %119 = arith.addf %118, %117 : vector<1x128xf32>
    %120 = arith.divf %118, %119 : vector<1x128xf32>
    %121 = vector.extract_strided_slice %111 {offsets = [0, 128], sizes = [1, 128], strides = [1, 1]} : vector<1x384xf32> to vector<1x128xf32>
    %122 = vector.extract_strided_slice %112 {offsets = [0, 128], sizes = [1, 128], strides = [1, 1]} : vector<1x384xf32> to vector<1x128xf32>
    %123 = arith.addf %121, %122 : vector<1x128xf32>
    %124 = arith.negf %123 : vector<1x128xf32>
    %125 = math.exp %124 : vector<1x128xf32>
    %cst_57 = arith.constant 1.000000e+00 : f32
    %126 = vector.broadcast %cst_57 : f32 to vector<1x128xf32>
    %127 = arith.addf %126, %125 : vector<1x128xf32>
    %128 = arith.divf %126, %127 : vector<1x128xf32>
    %129 = vector.extract_strided_slice %111 {offsets = [0, 256], sizes = [1, 128], strides = [1, 1]} : vector<1x384xf32> to vector<1x128xf32>
    %130 = vector.extract_strided_slice %112 {offsets = [0, 256], sizes = [1, 128], strides = [1, 1]} : vector<1x384xf32> to vector<1x128xf32>
    %131 = arith.mulf %120, %130 : vector<1x128xf32>
    %132 = arith.addf %129, %131 : vector<1x128xf32>
    %133 = math.tanh %132 : vector<1x128xf32>
    %cst_58 = arith.constant 1.000000e+00 : f32
    %134 = vector.broadcast %cst_58 : f32 to vector<1x128xf32>
    %135 = arith.subf %134, %128 : vector<1x128xf32>
    %136 = arith.mulf %135, %133 : vector<1x128xf32>
    %137 = arith.mulf %128, %68 : vector<1x128xf32>
    %138 = arith.addf %136, %137 : vector<1x128xf32>
    %139 = arith.index_cast %c1_i32 : i32 to index
    %c0_59 = arith.constant 0 : index
    %140 = vector.load %arg16[%139, %c0_59] : memref<4x128xf32, #tpu.memory_space<vmem>>, vector<1x128xf32>
    tpu.vector_store %arg16[%139, %c0_59], %138 {strides = array<i32>} : memref<4x128xf32, #tpu.memory_space<vmem>>, vector<1x128xf32>,
    %c2_i32 = arith.constant 2 : i32
    %141 = arith.index_cast %c2_i32 : i32 to index
    %c0_60 = arith.constant 0 : index
    %142 = vector.load %arg1[%141, %c0_60] : memref<4x128xf32, #tpu.memory_space<vmem>>, vector<1x128xf32>
    %143 = arith.truncf %142 : vector<1x128xf32> to vector<1x128xbf16>
    %c0_61 = arith.constant 0 : index
    %c0_62 = arith.constant 0 : index
    %144 = vector.load %arg4[%c0_61, %c0_62] : memref<128x256xbf16, #tpu.memory_space<vmem>>, vector<128x256xbf16>
    %cst_63 = arith.constant dense<0.000000e+00> : vector<1x256xf32>
    %145 = tpu.matmul %143, %144, %cst_63 {dimension_numbers = #tpu.dot_dimension_numbers<[1], [0], [0], [1], [0, 0, 1, 1], [], []>} : vector<1x128xbf16>, vector<128x256xbf16>, vector<1x256xf32> -> vector<1x256xf32>
    %c0_64 = arith.constant 0 : index
    %c0_65 = arith.constant 0 : index
    %146 = vector.load %arg9[%c0_64, %c0_65] : memref<1x256xf32, #tpu.memory_space<vmem>>, vector<1x256xf32>
    %147 = arith.addf %145, %146 : vector<1x256xf32>
    %148 = arith.truncf %138 : vector<1x128xf32> to vector<1x128xbf16>
    %c0_66 = arith.constant 0 : index
    %c0_67 = arith.constant 0 : index
    %149 = vector.load %arg5[%c0_66, %c0_67] : memref<128x512xbf16, #tpu.memory_space<vmem>>, vector<128x512xbf16>
    %cst_68 = arith.constant dense<0.000000e+00> : vector<1x512xf32>
    %150 = tpu.matmul %148, %149, %cst_68 {dimension_numbers = #tpu.dot_dimension_numbers<[1], [0], [0], [1], [0, 0, 1, 1], [], []>} : vector<1x128xbf16>, vector<128x512xbf16>, vector<1x512xf32> -> vector<1x512xf32>
    %c0_69 = arith.constant 0 : index
    %c0_70 = arith.constant 0 : index
    %151 = vector.load %arg10[%c0_69, %c0_70] : memref<1x512xf32, #tpu.memory_space<vmem>>, vector<1x512xf32>
    %152 = arith.addf %150, %151 : vector<1x512xf32>
    %153 = vector.extract_strided_slice %147 {offsets = [0, 0], sizes = [1, 128], strides = [1, 1]} : vector<1x256xf32> to vector<1x128xf32>
    %154 = vector.extract_strided_slice %152 {offsets = [0, 0], sizes = [1, 128], strides = [1, 1]} : vector<1x512xf32> to vector<1x128xf32>
    %155 = arith.addf %153, %154 : vector<1x128xf32>
    %cst_71 = arith.constant dense<0xFF800000> : vector<1xf32>
    %156 = vector.multi_reduction <maximumf>, %155, %cst_71 [1] : vector<1x128xf32> to vector<1xf32>
    %157 = vector.shape_cast %156 : vector<1xf32> to vector<1x1xf32>
    %158 = vector.broadcast %157 : vector<1x1xf32> to vector<1x128xf32>
    %159 = arith.subf %155, %158 : vector<1x128xf32>
    %160 = math.exp %159 : vector<1x128xf32>
    %cst_72 = arith.constant dense<0.000000e+00> : vector<1xf32>
    %161 = vector.multi_reduction <add>, %160, %cst_72 [1] : vector<1x128xf32> to vector<1xf32>
    %162 = vector.shape_cast %161 : vector<1xf32> to vector<1x1xf32>
    %163 = vector.broadcast %162 : vector<1x1xf32> to vector<1x128xf32>
    %164 = arith.divf %160, %163 : vector<1x128xf32>
    %165 = arith.index_cast %c2_i32 : i32 to index
    %c0_73 = arith.constant 0 : index
    %166 = vector.load %arg13[%165, %c0_73] : memref<4x128xf32, #tpu.memory_space<vmem>>, vector<1x128xf32>
    tpu.vector_store %arg13[%165, %c0_73], %164 {strides = array<i32>} : memref<4x128xf32, #tpu.memory_space<vmem>>, vector<1x128xf32>,
    %167 = arith.truncf %164 : vector<1x128xf32> to vector<1x128xbf16>
    %c0_74 = arith.constant 0 : index
    %c0_75 = arith.constant 0 : index
    %168 = vector.load %arg3[%c0_74, %c0_75] : memref<128x128xbf16, #tpu.memory_space<vmem>>, vector<128x128xbf16>
    %cst_76 = arith.constant dense<0.000000e+00> : vector<1x128xf32>
    %169 = tpu.matmul %167, %168, %cst_76 {dimension_numbers = #tpu.dot_dimension_numbers<[1], [0], [0], [1], [0, 0, 1, 1], [], []>} : vector<1x128xbf16>, vector<128x128xbf16>, vector<1x128xf32> -> vector<1x128xf32>
    %170 = vector.extract_strided_slice %147 {offsets = [0, 128], sizes = [1, 128], strides = [1, 1]} : vector<1x256xf32> to vector<1x128xf32>
    %171 = arith.truncf %169 : vector<1x128xf32> to vector<1x128xbf16>
    %c0_77 = arith.constant 0 : index
    %c0_78 = arith.constant 0 : index
    %172 = vector.load %arg6[%c0_77, %c0_78] : memref<128x128xbf16, #tpu.memory_space<vmem>>, vector<128x128xbf16>
    %cst_79 = arith.constant dense<0.000000e+00> : vector<1x128xf32>
    %173 = tpu.matmul %171, %172, %cst_79 {dimension_numbers = #tpu.dot_dimension_numbers<[1], [0], [0], [1], [0, 0, 1, 1], [], []>} : vector<1x128xbf16>, vector<128x128xbf16>, vector<1x128xf32> -> vector<1x128xf32>
    %174 = arith.addf %170, %173 : vector<1x128xf32>
    %cst_80 = arith.constant 0.000000e+00 : f32
    %175 = vector.broadcast %cst_80 : f32 to vector<1x128xf32>
    %176 = arith.maximumf %174, %175 : vector<1x128xf32>
    %177 = arith.truncf %176 : vector<1x128xf32> to vector<1x128xbf16>
    %c0_81 = arith.constant 0 : index
    %c0_82 = arith.constant 0 : index
    %178 = vector.load %arg7[%c0_81, %c0_82] : memref<128x384xbf16, #tpu.memory_space<vmem>>, vector<128x384xbf16>
    %cst_83 = arith.constant dense<0.000000e+00> : vector<1x384xf32>
    %179 = tpu.matmul %177, %178, %cst_83 {dimension_numbers = #tpu.dot_dimension_numbers<[1], [0], [0], [1], [0, 0, 1, 1], [], []>} : vector<1x128xbf16>, vector<128x384xbf16>, vector<1x384xf32> -> vector<1x384xf32>
    %c0_84 = arith.constant 0 : index
    %c0_85 = arith.constant 0 : index
    %180 = vector.load %arg11[%c0_84, %c0_85] : memref<1x384xf32, #tpu.memory_space<vmem>>, vector<1x384xf32>
    %181 = arith.addf %179, %180 : vector<1x384xf32>
    %182 = vector.extract_strided_slice %152 {offsets = [0, 128], sizes = [1, 384], strides = [1, 1]} : vector<1x512xf32> to vector<1x384xf32>
    %183 = vector.extract_strided_slice %181 {offsets = [0, 0], sizes = [1, 128], strides = [1, 1]} : vector<1x384xf32> to vector<1x128xf32>
    %184 = vector.extract_strided_slice %182 {offsets = [0, 0], sizes = [1, 128], strides = [1, 1]} : vector<1x384xf32> to vector<1x128xf32>
    %185 = arith.addf %183, %184 : vector<1x128xf32>
    %186 = arith.negf %185 : vector<1x128xf32>
    %187 = math.exp %186 : vector<1x128xf32>
    %cst_86 = arith.constant 1.000000e+00 : f32
    %188 = vector.broadcast %cst_86 : f32 to vector<1x128xf32>
    %189 = arith.addf %188, %187 : vector<1x128xf32>
    %190 = arith.divf %188, %189 : vector<1x128xf32>
    %191 = vector.extract_strided_slice %181 {offsets = [0, 128], sizes = [1, 128], strides = [1, 1]} : vector<1x384xf32> to vector<1x128xf32>
    %192 = vector.extract_strided_slice %182 {offsets = [0, 128], sizes = [1, 128], strides = [1, 1]} : vector<1x384xf32> to vector<1x128xf32>
    %193 = arith.addf %191, %192 : vector<1x128xf32>
    %194 = arith.negf %193 : vector<1x128xf32>
    %195 = math.exp %194 : vector<1x128xf32>
    %cst_87 = arith.constant 1.000000e+00 : f32
    %196 = vector.broadcast %cst_87 : f32 to vector<1x128xf32>
    %197 = arith.addf %196, %195 : vector<1x128xf32>
    %198 = arith.divf %196, %197 : vector<1x128xf32>
    %199 = vector.extract_strided_slice %181 {offsets = [0, 256], sizes = [1, 128], strides = [1, 1]} : vector<1x384xf32> to vector<1x128xf32>
    %200 = vector.extract_strided_slice %182 {offsets = [0, 256], sizes = [1, 128], strides = [1, 1]} : vector<1x384xf32> to vector<1x128xf32>
    %201 = arith.mulf %190, %200 : vector<1x128xf32>
    %202 = arith.addf %199, %201 : vector<1x128xf32>
    %203 = math.tanh %202 : vector<1x128xf32>
    %cst_88 = arith.constant 1.000000e+00 : f32
    %204 = vector.broadcast %cst_88 : f32 to vector<1x128xf32>
    %205 = arith.subf %204, %198 : vector<1x128xf32>
    %206 = arith.mulf %205, %203 : vector<1x128xf32>
    %207 = arith.mulf %198, %138 : vector<1x128xf32>
    %208 = arith.addf %206, %207 : vector<1x128xf32>
    %209 = arith.index_cast %c2_i32 : i32 to index
    %c0_89 = arith.constant 0 : index
    %210 = vector.load %arg16[%209, %c0_89] : memref<4x128xf32, #tpu.memory_space<vmem>>, vector<1x128xf32>
    tpu.vector_store %arg16[%209, %c0_89], %208 {strides = array<i32>} : memref<4x128xf32, #tpu.memory_space<vmem>>, vector<1x128xf32>,
    %c3_i32 = arith.constant 3 : i32
    %211 = arith.index_cast %c3_i32 : i32 to index
    %c0_90 = arith.constant 0 : index
    %212 = vector.load %arg1[%211, %c0_90] : memref<4x128xf32, #tpu.memory_space<vmem>>, vector<1x128xf32>
    %213 = arith.truncf %212 : vector<1x128xf32> to vector<1x128xbf16>
    %c0_91 = arith.constant 0 : index
    %c0_92 = arith.constant 0 : index
    %214 = vector.load %arg4[%c0_91, %c0_92] : memref<128x256xbf16, #tpu.memory_space<vmem>>, vector<128x256xbf16>
    %cst_93 = arith.constant dense<0.000000e+00> : vector<1x256xf32>
    %215 = tpu.matmul %213, %214, %cst_93 {dimension_numbers = #tpu.dot_dimension_numbers<[1], [0], [0], [1], [0, 0, 1, 1], [], []>} : vector<1x128xbf16>, vector<128x256xbf16>, vector<1x256xf32> -> vector<1x256xf32>
    %c0_94 = arith.constant 0 : index
    %c0_95 = arith.constant 0 : index
    %216 = vector.load %arg9[%c0_94, %c0_95] : memref<1x256xf32, #tpu.memory_space<vmem>>, vector<1x256xf32>
    %217 = arith.addf %215, %216 : vector<1x256xf32>
    %218 = arith.truncf %208 : vector<1x128xf32> to vector<1x128xbf16>
    %c0_96 = arith.constant 0 : index
    %c0_97 = arith.constant 0 : index
    %219 = vector.load %arg5[%c0_96, %c0_97] : memref<128x512xbf16, #tpu.memory_space<vmem>>, vector<128x512xbf16>
    %cst_98 = arith.constant dense<0.000000e+00> : vector<1x512xf32>
    %220 = tpu.matmul %218, %219, %cst_98 {dimension_numbers = #tpu.dot_dimension_numbers<[1], [0], [0], [1], [0, 0, 1, 1], [], []>} : vector<1x128xbf16>, vector<128x512xbf16>, vector<1x512xf32> -> vector<1x512xf32>
    %c0_99 = arith.constant 0 : index
    %c0_100 = arith.constant 0 : index
    %221 = vector.load %arg10[%c0_99, %c0_100] : memref<1x512xf32, #tpu.memory_space<vmem>>, vector<1x512xf32>
    %222 = arith.addf %220, %221 : vector<1x512xf32>
    %223 = vector.extract_strided_slice %217 {offsets = [0, 0], sizes = [1, 128], strides = [1, 1]} : vector<1x256xf32> to vector<1x128xf32>
    %224 = vector.extract_strided_slice %222 {offsets = [0, 0], sizes = [1, 128], strides = [1, 1]} : vector<1x512xf32> to vector<1x128xf32>
    %225 = arith.addf %223, %224 : vector<1x128xf32>
    %cst_101 = arith.constant dense<0xFF800000> : vector<1xf32>
    %226 = vector.multi_reduction <maximumf>, %225, %cst_101 [1] : vector<1x128xf32> to vector<1xf32>
    %227 = vector.shape_cast %226 : vector<1xf32> to vector<1x1xf32>
    %228 = vector.broadcast %227 : vector<1x1xf32> to vector<1x128xf32>
    %229 = arith.subf %225, %228 : vector<1x128xf32>
    %230 = math.exp %229 : vector<1x128xf32>
    %cst_102 = arith.constant dense<0.000000e+00> : vector<1xf32>
    %231 = vector.multi_reduction <add>, %230, %cst_102 [1] : vector<1x128xf32> to vector<1xf32>
    %232 = vector.shape_cast %231 : vector<1xf32> to vector<1x1xf32>
    %233 = vector.broadcast %232 : vector<1x1xf32> to vector<1x128xf32>
    %234 = arith.divf %230, %233 : vector<1x128xf32>
    %235 = arith.index_cast %c3_i32 : i32 to index
    %c0_103 = arith.constant 0 : index
    %236 = vector.load %arg13[%235, %c0_103] : memref<4x128xf32, #tpu.memory_space<vmem>>, vector<1x128xf32>
    tpu.vector_store %arg13[%235, %c0_103], %234 {strides = array<i32>} : memref<4x128xf32, #tpu.memory_space<vmem>>, vector<1x128xf32>,
    %237 = arith.truncf %234 : vector<1x128xf32> to vector<1x128xbf16>
    %c0_104 = arith.constant 0 : index
    %c0_105 = arith.constant 0 : index
    %238 = vector.load %arg3[%c0_104, %c0_105] : memref<128x128xbf16, #tpu.memory_space<vmem>>, vector<128x128xbf16>
    %cst_106 = arith.constant dense<0.000000e+00> : vector<1x128xf32>
    %239 = tpu.matmul %237, %238, %cst_106 {dimension_numbers = #tpu.dot_dimension_numbers<[1], [0], [0], [1], [0, 0, 1, 1], [], []>} : vector<1x128xbf16>, vector<128x128xbf16>, vector<1x128xf32> -> vector<1x128xf32>
    %240 = vector.extract_strided_slice %217 {offsets = [0, 128], sizes = [1, 128], strides = [1, 1]} : vector<1x256xf32> to vector<1x128xf32>
    %241 = arith.truncf %239 : vector<1x128xf32> to vector<1x128xbf16>
    %c0_107 = arith.constant 0 : index
    %c0_108 = arith.constant 0 : index
    %242 = vector.load %arg6[%c0_107, %c0_108] : memref<128x128xbf16, #tpu.memory_space<vmem>>, vector<128x128xbf16>
    %cst_109 = arith.constant dense<0.000000e+00> : vector<1x128xf32>
    %243 = tpu.matmul %241, %242, %cst_109 {dimension_numbers = #tpu.dot_dimension_numbers<[1], [0], [0], [1], [0, 0, 1, 1], [], []>} : vector<1x128xbf16>, vector<128x128xbf16>, vector<1x128xf32> -> vector<1x128xf32>
    %244 = arith.addf %240, %243 : vector<1x128xf32>
    %cst_110 = arith.constant 0.000000e+00 : f32
    %245 = vector.broadcast %cst_110 : f32 to vector<1x128xf32>
    %246 = arith.maximumf %244, %245 : vector<1x128xf32>
    %247 = arith.truncf %246 : vector<1x128xf32> to vector<1x128xbf16>
    %c0_111 = arith.constant 0 : index
    %c0_112 = arith.constant 0 : index
    %248 = vector.load %arg7[%c0_111, %c0_112] : memref<128x384xbf16, #tpu.memory_space<vmem>>, vector<128x384xbf16>
    %cst_113 = arith.constant dense<0.000000e+00> : vector<1x384xf32>
    %249 = tpu.matmul %247, %248, %cst_113 {dimension_numbers = #tpu.dot_dimension_numbers<[1], [0], [0], [1], [0, 0, 1, 1], [], []>} : vector<1x128xbf16>, vector<128x384xbf16>, vector<1x384xf32> -> vector<1x384xf32>
    %c0_114 = arith.constant 0 : index
    %c0_115 = arith.constant 0 : index
    %250 = vector.load %arg11[%c0_114, %c0_115] : memref<1x384xf32, #tpu.memory_space<vmem>>, vector<1x384xf32>
    %251 = arith.addf %249, %250 : vector<1x384xf32>
    %252 = vector.extract_strided_slice %222 {offsets = [0, 128], sizes = [1, 384], strides = [1, 1]} : vector<1x512xf32> to vector<1x384xf32>
    %253 = vector.extract_strided_slice %251 {offsets = [0, 0], sizes = [1, 128], strides = [1, 1]} : vector<1x384xf32> to vector<1x128xf32>
    %254 = vector.extract_strided_slice %252 {offsets = [0, 0], sizes = [1, 128], strides = [1, 1]} : vector<1x384xf32> to vector<1x128xf32>
    %255 = arith.addf %253, %254 : vector<1x128xf32>
    %256 = arith.negf %255 : vector<1x128xf32>
    %257 = math.exp %256 : vector<1x128xf32>
    %cst_116 = arith.constant 1.000000e+00 : f32
    %258 = vector.broadcast %cst_116 : f32 to vector<1x128xf32>
    %259 = arith.addf %258, %257 : vector<1x128xf32>
    %260 = arith.divf %258, %259 : vector<1x128xf32>
    %261 = vector.extract_strided_slice %251 {offsets = [0, 128], sizes = [1, 128], strides = [1, 1]} : vector<1x384xf32> to vector<1x128xf32>
    %262 = vector.extract_strided_slice %252 {offsets = [0, 128], sizes = [1, 128], strides = [1, 1]} : vector<1x384xf32> to vector<1x128xf32>
    %263 = arith.addf %261, %262 : vector<1x128xf32>
    %264 = arith.negf %263 : vector<1x128xf32>
    %265 = math.exp %264 : vector<1x128xf32>
    %cst_117 = arith.constant 1.000000e+00 : f32
    %266 = vector.broadcast %cst_117 : f32 to vector<1x128xf32>
    %267 = arith.addf %266, %265 : vector<1x128xf32>
    %268 = arith.divf %266, %267 : vector<1x128xf32>
    %269 = vector.extract_strided_slice %251 {offsets = [0, 256], sizes = [1, 128], strides = [1, 1]} : vector<1x384xf32> to vector<1x128xf32>
    %270 = vector.extract_strided_slice %252 {offsets = [0, 256], sizes = [1, 128], strides = [1, 1]} : vector<1x384xf32> to vector<1x128xf32>
    %271 = arith.mulf %260, %270 : vector<1x128xf32>
    %272 = arith.addf %269, %271 : vector<1x128xf32>
    %273 = math.tanh %272 : vector<1x128xf32>
    %cst_118 = arith.constant 1.000000e+00 : f32
    %274 = vector.broadcast %cst_118 : f32 to vector<1x128xf32>
    %275 = arith.subf %274, %268 : vector<1x128xf32>
    %276 = arith.mulf %275, %273 : vector<1x128xf32>
    %277 = arith.mulf %268, %208 : vector<1x128xf32>
    %278 = arith.addf %276, %277 : vector<1x128xf32>
    %279 = arith.index_cast %c3_i32 : i32 to index
    %c0_119 = arith.constant 0 : index
    %280 = vector.load %arg16[%279, %c0_119] : memref<4x128xf32, #tpu.memory_space<vmem>>, vector<1x128xf32>
    tpu.vector_store %arg16[%279, %c0_119], %278 {strides = array<i32>} : memref<4x128xf32, #tpu.memory_space<vmem>>, vector<1x128xf32>,
    %c4_i32 = arith.constant 4 : i32
    %c0_120 = arith.constant 0 : index
    %c0_121 = arith.constant 0 : index
    %281 = vector.load %arg15[%c0_120, %c0_121] : memref<1x128xf32, #tpu.memory_space<vmem>>, vector<1x128xf32>
    tpu.vector_store %arg15[%c0_120, %c0_121], %278 {strides = array<i32>} : memref<1x128xf32, #tpu.memory_space<vmem>>, vector<1x128xf32>,
    %c0_122 = arith.constant 0 : index
    %c0_123 = arith.constant 0 : index
    %282 = vector.load %arg16[%c0_122, %c0_123] : memref<4x128xf32, #tpu.memory_space<vmem>>, vector<4x128xf32>
    %283 = arith.truncf %282 : vector<4x128xf32> to vector<4x128xbf16>
    %c0_124 = arith.constant 0 : index
    %c0_125 = arith.constant 0 : index
    %284 = vector.load %arg8[%c0_124, %c0_125] : memref<128x128xbf16, #tpu.memory_space<vmem>>, vector<128x128xbf16>
    %cst_126 = arith.constant dense<0.000000e+00> : vector<4x128xf32>
    %285 = tpu.matmul %283, %284, %cst_126 {dimension_numbers = #tpu.dot_dimension_numbers<[1], [0], [0], [1], [0, 0, 1, 1], [], []>} : vector<4x128xbf16>, vector<128x128xbf16>, vector<4x128xf32> -> vector<4x128xf32>
    %c0_127 = arith.constant 0 : index
    %c0_128 = arith.constant 0 : index
    %286 = vector.load %arg12[%c0_127, %c0_128] : memref<1x128xf32, #tpu.memory_space<vmem>>, vector<1x128xf32>
    %287 = vector.broadcast %286 : vector<1x128xf32> to vector<4x128xf32>
    %288 = arith.addf %285, %287 : vector<4x128xf32>
    %cst_129 = arith.constant dense<0xFF800000> : vector<4xf32>
    %289 = vector.multi_reduction <maximumf>, %288, %cst_129 [1] : vector<4x128xf32> to vector<4xf32>
    %290 = vector.shape_cast %289 : vector<4xf32> to vector<4x1xf32>
    %291 = vector.broadcast %290 : vector<4x1xf32> to vector<4x128xf32>
    %292 = arith.subf %288, %291 : vector<4x128xf32>
    %293 = vector.broadcast %290 : vector<4x1xf32> to vector<4x128xf32>
    %294 = arith.subf %288, %293 : vector<4x128xf32>
    %295 = math.exp %294 : vector<4x128xf32>
    %cst_130 = arith.constant dense<0.000000e+00> : vector<4xf32>
    %296 = vector.multi_reduction <add>, %295, %cst_130 [1] : vector<4x128xf32> to vector<4xf32>
    %297 = vector.shape_cast %296 : vector<4xf32> to vector<4x1xf32>
    %298 = math.log %297 : vector<4x1xf32>
    %299 = vector.broadcast %298 : vector<4x1xf32> to vector<4x128xf32>
    %300 = arith.subf %292, %299 : vector<4x128xf32>
    %c0_131 = arith.constant 0 : index
    %c0_132 = arith.constant 0 : index
    %301 = vector.load %arg14[%c0_131, %c0_132] : memref<4x128xf32, #tpu.memory_space<vmem>>, vector<4x128xf32>
    tpu.vector_store %arg14[%c0_131, %c0_132], %300 {strides = array<i32>} : memref<4x128xf32, #tpu.memory_space<vmem>>, vector<4x128xf32>,
    return
  }
  func.func @transform_0(%arg0: i32) -> (i32, i32) {
    %c0_i32 = arith.constant 0 : i32
    %c0_i32_0 = arith.constant 0 : i32
    %c0_i32_1 = arith.constant 0 : i32
    return %c0_i32, %c0_i32_0 : i32, i32
  }
  func.func @transform_1(%arg0: i32) -> (i32, i32) {
    %c0_i32 = arith.constant 0 : i32
    %c0_i32_0 = arith.constant 0 : i32
    %c0_i32_1 = arith.constant 0 : i32
    return %c0_i32, %c0_i32_0 : i32, i32
  }
  func.func @transform_2(%arg0: i32) -> (i32, i32) {
    %c0_i32 = arith.constant 0 : i32
    %c0_i32_0 = arith.constant 0 : i32
    %c0_i32_1 = arith.constant 0 : i32
    return %c0_i32, %c0_i32_0 : i32, i32
  }
  func.func @transform_3(%arg0: i32) -> (i32, i32) {
    %c0_i32 = arith.constant 0 : i32
    %c0_i32_0 = arith.constant 0 : i32
    %c0_i32_1 = arith.constant 0 : i32
    return %c0_i32, %c0_i32_0 : i32, i32
  }
  func.func @transform_4(%arg0: i32) -> (i32, i32) {
    %c0_i32 = arith.constant 0 : i32
    %c0_i32_0 = arith.constant 0 : i32
    %c0_i32_1 = arith.constant 0 : i32
    return %c0_i32, %c0_i32_0 : i32, i32
  }
  func.func @transform_5(%arg0: i32) -> (i32, i32) {
    %c0_i32 = arith.constant 0 : i32
    %c0_i32_0 = arith.constant 0 : i32
    %c0_i32_1 = arith.constant 0 : i32
    return %c0_i32, %c0_i32_0 : i32, i32
  }
  func.func @transform_6(%arg0: i32) -> (i32, i32) {
    %c0_i32 = arith.constant 0 : i32
    %c0_i32_0 = arith.constant 0 : i32
    %c0_i32_1 = arith.constant 0 : i32
    return %c0_i32, %c0_i32_0 : i32, i32
  }
  func.func @transform_7(%arg0: i32) -> (i32, i32) {
    %c0_i32 = arith.constant 0 : i32
    %c0_i32_0 = arith.constant 0 : i32
    %c0_i32_1 = arith.constant 0 : i32
    return %c0_i32, %c0_i32_0 : i32, i32
  }
  func.func @transform_8(%arg0: i32) -> (i32, i32) {
    %c0_i32 = arith.constant 0 : i32
    %c0_i32_0 = arith.constant 0 : i32
    %c0_i32_1 = arith.constant 0 : i32
    return %c0_i32, %c0_i32_0 : i32, i32
  }
  func.func @transform_9(%arg0: i32) -> (i32, i32) {
    %c0_i32 = arith.constant 0 : i32
    %c0_i32_0 = arith.constant 0 : i32
    %c0_i32_1 = arith.constant 0 : i32
    return %c0_i32, %c0_i32_0 : i32, i32
  }
  func.func @transform_10(%arg0: i32) -> (i32, i32) {
    %c0_i32 = arith.constant 0 : i32
    %c0_i32_0 = arith.constant 0 : i32
    %c0_i32_1 = arith.constant 0 : i32
    return %c0_i32, %c0_i32_0 : i32, i32
  }
  func.func @transform_11(%arg0: i32) -> (i32, i32) {
    %c0_i32 = arith.constant 0 : i32
    %c0_i32_0 = arith.constant 0 : i32
    %c0_i32_1 = arith.constant 0 : i32
    return %c0_i32, %c0_i32_0 : i32, i32
  }
  func.func @transform_12(%arg0: i32) -> (i32, i32) {
    %c0_i32 = arith.constant 0 : i32
    %c0_i32_0 = arith.constant 0 : i32
    %c0_i32_1 = arith.constant 0 : i32
    return %c0_i32, %c0_i32_0 : i32, i32
  }
  func.func @transform_13(%arg0: i32) -> (i32, i32) {
    %c0_i32 = arith.constant 0 : i32
    %c0_i32_0 = arith.constant 0 : i32
    %c0_i32_1 = arith.constant 0 : i32
    return %c0_i32, %c0_i32_0 : i32, i32
  }
  func.func @transform_14(%arg0: i32) -> (i32, i32) {
    %c0_i32 = arith.constant 0 : i32
    %c0_i32_0 = arith.constant 0 : i32
    %c0_i32_1 = arith.constant 0 : i32
    return %c0_i32, %c0_i32_0 : i32, i32
  }
}

</mosaic_0001>

<llo_original>
// kernel: tpu_custom_call.1
$region0: #{tpu_custom_call.1}
  #allocation0 [shape = 'u32[]', space=smem, size = 0x4, offset = 0x4, fixed_abs, tag = 'smem constant byte address 0x4 - core index']
  #allocation1 [shape = 'u32[144,128]{1,0:T(1,128)}', space=vmem, size = 0x12000, scoped, tag = 'internal scratch']
  #allocation2 [shape = 'f32[4,128]{1,0:T(4,128)}', space=vmem, size = 0x800, scoped, tag = 'scratch operand']
  %s0 = inlined_call_operand.hbm [shape: f32[4,128], index: 0, kind: input, shape index: {}]
  %s1 = inlined_call_operand.hbm [shape: f32[1,128], index: 1, kind: input, shape index: {}]
  %s2 = inlined_call_operand.hbm [shape: bf16[128,128], index: 2, kind: input, shape index: {}]
  %s3 = inlined_call_operand.hbm [shape: bf16[128,256], index: 3, kind: input, shape index: {}]
  %s4 = inlined_call_operand.hbm [shape: bf16[128,512], index: 4, kind: input, shape index: {}]
  %s5 = inlined_call_operand.hbm [shape: bf16[128,128], index: 5, kind: input, shape index: {}]
  %s6 = inlined_call_operand.hbm [shape: bf16[128,384], index: 6, kind: input, shape index: {}]
  %s7 = inlined_call_operand.hbm [shape: bf16[128,128], index: 7, kind: input, shape index: {}]
  %s8 = inlined_call_operand.vmem [shape: f32[1,256], index: 8, kind: input, shape index: {}]
  %s9 = inlined_call_operand.vmem [shape: f32[1,512], index: 9, kind: input, shape index: {}]
  %s10 = inlined_call_operand.vmem [shape: f32[1,384], index: 10, kind: input, shape index: {}]
  %s11 = inlined_call_operand.vmem [shape: f32[1,128], index: 11, kind: input, shape index: {}]
  %s12 = inlined_call_operand.hbm [shape: f32[4,128], index: 12, kind: output, shape index: {0}]
  %s13 = inlined_call_operand.hbm [shape: f32[4,128], index: 13, kind: output, shape index: {1}]
  %s14 = inlined_call_operand.hbm [shape: f32[1,128], index: 14, kind: output, shape index: {2}]
  %15 = xla_tuple %s12, %s13, %s14
  %s16 = sld [smem:[#allocation0]]
  $region106: #{tpu_custom_call.1} parent=0
    _
  %s18 = ssub.s32 1, %s16
  %s19 = scalar_select 0, %s18, %s16
  $region1: #{tpu_custom_call.1} parent=0
    #allocation3 [shape = 'u8[2048]{0}', space=vmem, size = 0x800, scoped, tag = 'input window, operand 0, single buffered']
    #allocation4 [shape = 's32[1]{0}', space=sflag, size = 0x4, scoped, tag = 'scoped memory for tpu_custom_call.1']
    #allocation5 [shape = 's32[1]{0}', space=sflag, size = 0x4, scoped, tag = 'scoped memory for tpu_custom_call.1']
    #allocation6 [shape = 'u8[512]{0}', space=vmem, size = 0x400, scoped, tag = 'input window, operand 1, single buffered']
    #allocation7 [shape = 's32[1]{0}', space=sflag, size = 0x4, scoped, tag = 'scoped memory for tpu_custom_call.1']
    #allocation8 [shape = 'u8[32768]{0}', space=vmem, size = 0x8000, scoped, tag = 'input window, operand 2, single buffered']
    #allocation9 [shape = 'u8[65536]{0}', space=vmem, size = 0x10000, scoped, tag = 'input window, operand 3, single buffered']
    #allocation10 [shape = 's32[1]{0}', space=sflag, size = 0x4, scoped, tag = 'scoped memory for tpu_custom_call.1']
    #allocation11 [shape = 'u8[131072]{0}', space=vmem, size = 0x20000, scoped, tag = 'input window, operand 4, single buffered']
    #allocation12 [shape = 'u8[32768]{0}', space=vmem, size = 0x8000, scoped, tag = 'input window, operand 5, single buffered']
    #allocation13 [shape = 's32[1]{0}', space=sflag, size = 0x4, scoped, tag = 'scoped memory for tpu_custom_call.1']
    #allocation14 [shape = 'u8[98304]{0}', space=vmem, size = 0x18000, scoped, tag = 'input window, operand 6, single buffered']
    #allocation15 [shape = 'u8[32768]{0}', space=vmem, size = 0x8000, scoped, tag = 'input window, operand 7, single buffered']
    #allocation16 [shape = 's32[1]{0}', space=sflag, size = 0x4, scoped, tag = 'scoped memory for tpu_custom_call.1']
    #allocation17 [shape = 'u8[2048]{0}', space=vmem, size = 0x800, scoped, tag = 'output window, operand 0, single buffered']
    #allocation18 [shape = 'u8[2048]{0}', space=vmem, size = 0x800, scoped, tag = 'output window, operand 1, single buffered']
    #allocation19 [shape = 's32[1]{0}', space=sflag, size = 0x4, scoped, tag = 'scoped memory for tpu_custom_call.1']
    #allocation20 [shape = 'u8[512]{0}', space=vmem, size = 0x400, scoped, tag = 'output window, operand 2, single buffered']
    %20 = vsyncpa [#allocation4], 0
    %21 = vsyncpa [#allocation7], 0
    %22 = vsyncpa [#allocation10], 0
    %23 = vsyncpa [#allocation13], 0
    %24 = vsyncpa [#allocation16], 0
    %25 = vsyncpa [#allocation5], 0
    %26 = vsyncpa [#allocation19], 0
    // Predicated region
    $region2: #{tpu_custom_call.1} parent=1 // pred_check
      _
    $region3: #{tpu_custom_call.1} parent=1 // pred_check_branch
      %28 = sbr.rel (0) target = $region5
    $region4: #{tpu_custom_call.1} parent=1 // pred_region
      %s30 = ssub.s32 64, 64
      %31 = vsyncadd [#allocation4], %s30
      %s33 = sshll.u32 [#allocation3], 4
      %s34 = int_to_ptr.vmem [resolvable:$true] %s33
      %36 = dma.hbm_to_vmem [thread:$0]  %s0, 64, %s34, [#allocation4]
    $region5: #{tpu_custom_call.1} parent=1 // pred_fallthru
      _
    // Predicated region
    $region6: #{tpu_custom_call.1} parent=1 // pred_check
      _
    $region7: #{tpu_custom_call.1} parent=1 // pred_check_branch
      %38 = sbr.rel (0) target = $region9
    $region8: #{tpu_custom_call.1} parent=1 // pred_region
      %s40 = ssub.s32 16, 16
      %41 = vsyncadd [#allocation7], %s40
      %s43 = sshll.u32 [#allocation6], 4
      %s44 = int_to_ptr.vmem [resolvable:$true] %s43
      %46 = dma.hbm_to_vmem [thread:$0]  %s1, 16, %s44, [#allocation7]
    $region9: #{tpu_custom_call.1} parent=1 // pred_fallthru
      _
    // Predicated region
    $region10: #{tpu_custom_call.1} parent=1 // pred_check
      _
    $region11: #{tpu_custom_call.1} parent=1 // pred_check_branch
      %48 = sbr.rel (0) target = $region13
    $region12: #{tpu_custom_call.1} parent=1 // pred_region
      %s50 = ssub.s32 1024, 1024
      %51 = vsyncadd [#allocation7], %s50
      %s52 = sshll.u32 [#allocation8], 4
      %s53 = int_to_ptr.vmem [resolvable:$true] %s52
      %58 = dma.hbm_to_vmem [thread:$0]  %s2, 1024, %s53, [#allocation7], 64, 64, 4
    $region13: #{tpu_custom_call.1} parent=1 // pred_fallthru
      _
    // Predicated region
    $region14: #{tpu_custom_call.1} parent=1 // pred_check
      _
    $region15: #{tpu_custom_call.1} parent=1 // pred_check_branch
      %60 = sbr.rel (0) target = $region17
    $region16: #{tpu_custom_call.1} parent=1 // pred_region
      %s62 = ssub.s32 2048, 2048
      %63 = vsyncadd [#allocation10], %s62
      %s64 = sshll.u32 [#allocation9], 4
      %s65 = int_to_ptr.vmem [resolvable:$true] %s64
      %70 = dma.hbm_to_vmem [thread:$0]  %s3, 2048, %s65, [#allocation10], 128, 128, 8
    $region17: #{tpu_custom_call.1} parent=1 // pred_fallthru
      _
    // Predicated region
    $region18: #{tpu_custom_call.1} parent=1 // pred_check
      _
    $region19: #{tpu_custom_call.1} parent=1 // pred_check_branch
      %72 = sbr.rel (0) target = $region21
    $region20: #{tpu_custom_call.1} parent=1 // pred_region
      %s74 = ssub.s32 4096, 4096
      %75 = vsyncadd [#allocation10], %s74
      %s76 = sshll.u32 [#allocation11], 4
      %s77 = int_to_ptr.vmem [resolvable:$true] %s76
      %82 = dma.hbm_to_vmem [thread:$0]  %s4, 4096, %s77, [#allocation10], 256, 256, 16
    $region21: #{tpu_custom_call.1} parent=1 // pred_fallthru
      _
    // Predicated region
    $region22: #{tpu_custom_call.1} parent=1 // pred_check
      _
    $region23: #{tpu_custom_call.1} parent=1 // pred_check_branch
      %84 = sbr.rel (0) target = $region25
    $region24: #{tpu_custom_call.1} parent=1 // pred_region
      %s86 = ssub.s32 1024, 1024
      %87 = vsyncadd [#allocation13], %s86
      %s88 = sshll.u32 [#allocation12], 4
      %s89 = int_to_ptr.vmem [resolvable:$true] %s88
      %94 = dma.hbm_to_vmem [thread:$0]  %s5, 1024, %s89, [#allocation13], 64, 64, 4
    $region25: #{tpu_custom_call.1} parent=1 // pred_fallthru
      _
    // Predicated region
    $region26: #{tpu_custom_call.1} parent=1 // pred_check
      _
    $region27: #{tpu_custom_call.1} parent=1 // pred_check_branch
      %96 = sbr.rel (0) target = $region29
    $region28: #{tpu_custom_call.1} parent=1 // pred_region
      %s98 = ssub.s32 3072, 3072
      %99 = vsyncadd [#allocation13], %s98
      %s100 = sshll.u32 [#allocation14], 4
      %s101 = int_to_ptr.vmem [resolvable:$true] %s100
      %106 = dma.hbm_to_vmem [thread:$0]  %s6, 3072, %s101, [#allocation13], 192, 192, 12
    $region29: #{tpu_custom_call.1} parent=1 // pred_fallthru
      _
    // Predicated region
    $region30: #{tpu_custom_call.1} parent=1 // pred_check
      _
    $region31: #{tpu_custom_call.1} parent=1 // pred_check_branch
      %108 = sbr.rel (0) target = $region33
    $region32: #{tpu_custom_call.1} parent=1 // pred_region
      %s110 = ssub.s32 1024, 1024
      %111 = vsyncadd [#allocation16], %s110
      %s112 = sshll.u32 [#allocation15], 4
      %s113 = int_to_ptr.vmem [resolvable:$true] %s112
      %118 = dma.hbm_to_vmem [thread:$0]  %s7, 1024, %s113, [#allocation16], 64, 64, 4
    $region33: #{tpu_custom_call.1} parent=1 // pred_fallthru
      _
    // Predicated region
    $region34: #{tpu_custom_call.1} parent=1 // pred_check
      _
    $region35: #{tpu_custom_call.1} parent=1 // pred_check_branch
      %120 = sbr.rel (0) target = $region37
    $region36: #{tpu_custom_call.1} parent=1 // pred_region
      _
    $region37: #{tpu_custom_call.1} parent=1 // pred_fallthru
      _
    // Predicated region
    $region38: #{tpu_custom_call.1} parent=1 // pred_check
      _
    $region39: #{tpu_custom_call.1} parent=1 // pred_check_branch
      %122 = sbr.rel (0) target = $region41
    $region40: #{tpu_custom_call.1} parent=1 // pred_region
      _
    $region41: #{tpu_custom_call.1} parent=1 // pred_fallthru
      _
    // Predicated region
    $region42: #{tpu_custom_call.1} parent=1 // pred_check
      _
    $region43: #{tpu_custom_call.1} parent=1 // pred_check_branch
      %124 = sbr.rel (0) target = $region45
    $region44: #{tpu_custom_call.1} parent=1 // pred_region
      _
    $region45: #{tpu_custom_call.1} parent=1 // pred_fallthru
      _
    // Predicated region
    $region46: #{tpu_custom_call.1} parent=1 // pred_check
      _
    $region47: #{tpu_custom_call.1} parent=1 // pred_check_branch
      %126 = sbr.rel (0) target = $region49
    $region48: #{tpu_custom_call.1} parent=1 // pred_region
      _
    $region49: #{tpu_custom_call.1} parent=1 // pred_fallthru
      _
    // Predicated region
    $region50: #{tpu_custom_call.1} parent=1 // pred_check
      _
    $region51: #{tpu_custom_call.1} parent=1 // pred_check_branch
      %128 = sbr.rel (0) target = $region53
    $region52: #{tpu_custom_call.1} parent=1 // pred_region
      %129 = dma.done [#allocation4], 64
    $region53: #{tpu_custom_call.1} parent=1 // pred_fallthru
      _
    // Predicated region
    $region54: #{tpu_custom_call.1} parent=1 // pred_check
      _
    $region55: #{tpu_custom_call.1} parent=1 // pred_check_branch
      %131 = sbr.rel (0) target = $region57
    $region56: #{tpu_custom_call.1} parent=1 // pred_region
      %132 = dma.done [#allocation7], 16
    $region57: #{tpu_custom_call.1} parent=1 // pred_fallthru
      _
    // Predicated region
    $region58: #{tpu_custom_call.1} parent=1 // pred_check
      _
    $region59: #{tpu_custom_call.1} parent=1 // pred_check_branch
      %134 = sbr.rel (0) target = $region61
    $region60: #{tpu_custom_call.1} parent=1 // pred_region
      %135 = dma.done [#allocation7], 1024
    $region61: #{tpu_custom_call.1} parent=1 // pred_fallthru
      _
    // Predicated region
    $region62: #{tpu_custom_call.1} parent=1 // pred_check
      _
    $region63: #{tpu_custom_call.1} parent=1 // pred_check_branch
      %137 = sbr.rel (0) target = $region65
    $region64: #{tpu_custom_call.1} parent=1 // pred_region
      %138 = dma.done [#allocation10], 2048
    $region65: #{tpu_custom_call.1} parent=1 // pred_fallthru
      _
    // Predicated region
    $region66: #{tpu_custom_call.1} parent=1 // pred_check
      _
    $region67: #{tpu_custom_call.1} parent=1 // pred_check_branch
      %140 = sbr.rel (0) target = $region69
    $region68: #{tpu_custom_call.1} parent=1 // pred_region
      %141 = dma.done [#allocation10], 4096
    $region69: #{tpu_custom_call.1} parent=1 // pred_fallthru
      _
    // Predicated region
    $region70: #{tpu_custom_call.1} parent=1 // pred_check
      _
    $region71: #{tpu_custom_call.1} parent=1 // pred_check_branch
      %143 = sbr.rel (0) target = $region73
    $region72: #{tpu_custom_call.1} parent=1 // pred_region
      %144 = dma.done [#allocation13], 1024
    $region73: #{tpu_custom_call.1} parent=1 // pred_fallthru
      _
    // Predicated region
    $region74: #{tpu_custom_call.1} parent=1 // pred_check
      _
    $region75: #{tpu_custom_call.1} parent=1 // pred_check_branch
      %146 = sbr.rel (0) target = $region77
    $region76: #{tpu_custom_call.1} parent=1 // pred_region
      %147 = dma.done [#allocation13], 3072
    $region77: #{tpu_custom_call.1} parent=1 // pred_fallthru
      _
    // Predicated region
    $region78: #{tpu_custom_call.1} parent=1 // pred_check
      _
    $region79: #{tpu_custom_call.1} parent=1 // pred_check_branch
      %149 = sbr.rel (0) target = $region81
    $region80: #{tpu_custom_call.1} parent=1 // pred_region
      %150 = dma.done [#allocation16], 1024
    $region81: #{tpu_custom_call.1} parent=1 // pred_fallthru
      _
    %v152 = vld [vmem:[#allocation6] sm:$0x1]
    %v153 = vld [vmem:[#allocation3] sm:$0x1]
    %v154 = vpack.c.bf16 %v153, %v153
    %v155 = vld [vmem:[#allocation9] sm:$0xff]
    %v156 = vld [vmem:[#allocation9 + $0x8] sm:$0xff]
    %v157 = vld [vmem:[#allocation9 + $0x10] sm:$0xff]
    %v158 = vld [vmem:[#allocation9 + $0x18] sm:$0xff]
    %v159 = vld [vmem:[#allocation9 + $0x20] sm:$0xff]
    %v160 = vld [vmem:[#allocation9 + $0x28] sm:$0xff]
    %v161 = vld [vmem:[#allocation9 + $0x30] sm:$0xff]
    %v162 = vld [vmem:[#allocation9 + $0x38] sm:$0xff]
    %v163 = vld [vmem:[#allocation9 + $0x40] sm:$0xff]
    %v164 = vld [vmem:[#allocation9 + $0x48] sm:$0xff]
    %v165 = vld [vmem:[#allocation9 + $0x50] sm:$0xff]
    %v166 = vld [vmem:[#allocation9 + $0x58] sm:$0xff]
    %v167 = vld [vmem:[#allocation9 + $0x60] sm:$0xff]
    %v168 = vld [vmem:[#allocation9 + $0x68] sm:$0xff]
    %v169 = vld [vmem:[#allocation9 + $0x70] sm:$0xff]
    %v170 = vld [vmem:[#allocation9 + $0x78] sm:$0xff]
    %v171 = vld [vmem:[%s8] sm:$0x3]
    %v188 = vunpack.c.l.b16 %v155
    %v189 = vunpack.c.h.b16 %v155
    %v190 = vunpack.c.l.b16 %v156
    %v191 = vunpack.c.h.b16 %v156
    %v192 = vunpack.c.l.b16 %v157
    %v193 = vunpack.c.h.b16 %v157
    %v194 = vunpack.c.l.b16 %v158
    %v195 = vunpack.c.h.b16 %v158
    %v196 = vunpack.c.l.b16 %v159
    %v197 = vunpack.c.h.b16 %v159
    %v198 = vunpack.c.l.b16 %v160
    %v199 = vunpack.c.h.b16 %v160
    %v200 = vunpack.c.l.b16 %v161
    %v201 = vunpack.c.h.b16 %v161
    %v202 = vunpack.c.l.b16 %v162
    %v203 = vunpack.c.h.b16 %v162
    %v204 = vunpack.c.l.b16 %v163
    %v205 = vunpack.c.h.b16 %v163
    %v206 = vunpack.c.l.b16 %v164
    %v207 = vunpack.c.h.b16 %v164
    %v208 = vunpack.c.l.b16 %v165
    %v209 = vunpack.c.h.b16 %v165
    %v210 = vunpack.c.l.b16 %v166
    %v211 = vunpack.c.h.b16 %v166
    %v212 = vunpack.c.l.b16 %v167
    %v213 = vunpack.c.h.b16 %v167
    %v214 = vunpack.c.l.b16 %v168
    %v215 = vunpack.c.h.b16 %v168
    %v216 = vunpack.c.l.b16 %v169
    %v217 = vunpack.c.h.b16 %v169
    %v218 = vunpack.c.l.b16 %v170
    %v219 = vunpack.c.h.b16 %v170
    %v220 = vpack.c.b16 %v190, %v188
    %v221 = vpack.c.b16 %v191, %v189
    %v222 = vpack.c.b16 %v194, %v192
    %v223 = vpack.c.b16 %v195, %v193
    %v224 = vpack.c.b16 %v198, %v196
    %v225 = vpack.c.b16 %v199, %v197
    %v226 = vpack.c.b16 %v202, %v200
    %v227 = vpack.c.b16 %v203, %v201
    %v228 = vpack.c.b16 %v206, %v204
    %v229 = vpack.c.b16 %v207, %v205
    %v230 = vpack.c.b16 %v210, %v208
    %v231 = vpack.c.b16 %v211, %v209
    %v232 = vpack.c.b16 %v214, %v212
    %v233 = vpack.c.b16 %v215, %v213
    %v234 = vpack.c.b16 %v218, %v216
    %v235 = vpack.c.b16 %v219, %v217
    %v253 = vlaneseq
    %v254 = vshrl.u32 %v253, 7
    %v255 = vsub.s32 0, %v254
    %v256 = vrot.slane %v171, %v255
    %v257 = vlaneseq
    %v258 = vshrl.u32 %v257, 7
    %v259 = vsub.s32 1, %v258
    %v260 = vrot.slane %v171, %v259
    %263 = vmatprep.subr.bf16.mxu0 %v221
    %264 = vmatpush1.bf16.msra.mxu0 %v220
    %265 = vmatprep.subr.bf16.mxu0 %v223
    %266 = vmatpush1.bf16.msra.mxu0 %v222
    %267 = vmatprep.subr.bf16.mxu0 %v225
    %268 = vmatpush1.bf16.msra.mxu0 %v224
    %269 = vmatprep.subr.bf16.mxu0 %v227
    %270 = vmatpush1.bf16.msra.mxu0 %v226
    %271 = vmatprep.subr.bf16.mxu0 %v229
    %272 = vmatpush1.bf16.msra.mxu0 %v228
    %273 = vmatprep.subr.bf16.mxu0 %v231
    %274 = vmatpush1.bf16.msra.mxu0 %v230
    %275 = vmatprep.subr.bf16.mxu0 %v233
    %276 = vmatpush1.bf16.msra.mxu0 %v232
    %277 = vmatprep.subr.bf16.mxu0 %v235
    %278 = vmatpush1.bf16.msra.mxu0 %v234
    %279 = vmatprep.subr.bf16.mxu0 0
    %280 = vmatpush1.bf16.msra.mxu0 0
    %281 = vmatprep.subr.bf16.mxu0 0
    %282 = vmatpush1.bf16.msra.mxu0 0
    %283 = vmatprep.subr.bf16.mxu0 0
    %284 = vmatpush1.bf16.msra.mxu0 0
    %285 = vmatprep.subr.bf16.mxu0 0
    %286 = vmatpush1.bf16.msra.mxu0 0
    %287 = vmatprep.subr.bf16.mxu0 0
    %288 = vmatpush1.bf16.msra.mxu0 0
    %289 = vmatprep.subr.bf16.mxu0 0
    %290 = vmatpush1.bf16.msra.mxu0 0
    %291 = vmatprep.subr.bf16.mxu0 0
    %292 = vmatpush1.bf16.msra.mxu0 0
    %293 = vmatprep.subr.bf16.mxu0 0
    %294 = vmatpush1.bf16.msra.mxu0 0
    %295 = vmatprep.mubr.bf16.mxu0 0
    %296 = vmatmul.mubr.bf16.gmra.mrb[0].mxu0 %v154
    %v297 = vpop.f32.mrb[0].mxu0
    %v298 = vadd.f32 %v256, %v297
    %v299 = vpop.f32.mrb[0].mxu0
    %v300 = vadd.f32 %v260, %v299
    %v301 = vpop.f32.mrb[0].mxu0
    %v302 = vpop.f32.mrb[0].mxu0
    %303 = vdwg.mxu0
    %v304 = vpack.c.bf16 %v152, %v152
    %v305 = vld [vmem:[#allocation11] sm:$0xff]
    %v306 = vld [vmem:[#allocation11 + $0x8] sm:$0xff]
    %v307 = vld [vmem:[#allocation11 + $0x10] sm:$0xff]
    %v308 = vld [vmem:[#allocation11 + $0x18] sm:$0xff]
    %v309 = vld [vmem:[#allocation11 + $0x20] sm:$0xff]
    %v310 = vld [vmem:[#allocation11 + $0x28] sm:$0xff]
    %v311 = vld [vmem:[#allocation11 + $0x30] sm:$0xff]
    %v312 = vld [vmem:[#allocation11 + $0x38] sm:$0xff]
    %v313 = vld [vmem:[#allocation11 + $0x40] sm:$0xff]
    %v314 = vld [vmem:[#allocation11 + $0x48] sm:$0xff]
    %v315 = vld [vmem:[#allocation11 + $0x50] sm:$0xff]
    %v316 = vld [vmem:[#allocation11 + $0x58] sm:$0xff]
    %v317 = vld [vmem:[#allocation11 + $0x60] sm:$0xff]
    %v318 = vld [vmem:[#allocation11 + $0x68] sm:$0xff]
    %v319 = vld [vmem:[#allocation11 + $0x70] sm:$0xff]
    %v320 = vld [vmem:[#allocation11 + $0x78] sm:$0xff]
    %v321 = vld [vmem:[#allocation11 + $0x80] sm:$0xff]
    %v322 = vld [vmem:[#allocation11 + $0x88] sm:$0xff]
    %v323 = vld [vmem:[#allocation11 + $0x90] sm:$0xff]
    %v324 = vld [vmem:[#allocation11 + $0x98] sm:$0xff]
    %v325 = vld [vmem:[#allocation11 + $0xa0] sm:$0xff]
    %v326 = vld [vmem:[#allocation11 + $0xa8] sm:$0xff]
    %v327 = vld [vmem:[#allocation11 + $0xb0] sm:$0xff]
    %v328 = vld [vmem:[#allocation11 + $0xb8] sm:$0xff]
    %v329 = vld [vmem:[#allocation11 + $0xc0] sm:$0xff]
    %v330 = vld [vmem:[#allocation11 + $0xc8] sm:$0xff]
    %v331 = vld [vmem:[#allocation11 + $0xd0] sm:$0xff]
    %v332 = vld [vmem:[#allocation11 + $0xd8] sm:$0xff]
    %v333 = vld [vmem:[#allocation11 + $0xe0] sm:$0xff]
    %v334 = vld [vmem:[#allocation11 + $0xe8] sm:$0xff]
    %v335 = vld [vmem:[#allocation11 + $0xf0] sm:$0xff]
    %v336 = vld [vmem:[#allocation11 + $0xf8] sm:$0xff]
    %v337 = vld [vmem:[%s9] sm:$0xf]
    %v370 = vunpack.c.l.b16 %v305
    %v371 = vunpack.c.h.b16 %v305
    %v372 = vunpack.c.l.b16 %v306
    %v373 = vunpack.c.h.b16 %v306
    %v374 = vunpack.c.l.b16 %v307
    %v375 = vunpack.c.h.b16 %v307
    %v376 = vunpack.c.l.b16 %v308
    %v377 = vunpack.c.h.b16 %v308
    %v378 = vunpack.c.l.b16 %v309
    %v379 = vunpack.c.h.b16 %v309
    %v380 = vunpack.c.l.b16 %v310
    %v381 = vunpack.c.h.b16 %v310
    %v382 = vunpack.c.l.b16 %v311
    %v383 = vunpack.c.h.b16 %v311
    %v384 = vunpack.c.l.b16 %v312
    %v385 = vunpack.c.h.b16 %v312
    %v386 = vunpack.c.l.b16 %v313
    %v387 = vunpack.c.h.b16 %v313
    %v388 = vunpack.c.l.b16 %v314
    %v389 = vunpack.c.h.b16 %v314
    %v390 = vunpack.c.l.b16 %v315
    %v391 = vunpack.c.h.b16 %v315
    %v392 = vunpack.c.l.b16 %v316
    %v393 = vunpack.c.h.b16 %v316
    %v394 = vunpack.c.l.b16 %v317
    %v395 = vunpack.c.h.b16 %v317
    %v396 = vunpack.c.l.b16 %v318
    %v397 = vunpack.c.h.b16 %v318
    %v398 = vunpack.c.l.b16 %v319
    %v399 = vunpack.c.h.b16 %v319
    %v400 = vunpack.c.l.b16 %v320
    %v401 = vunpack.c.h.b16 %v320
    %v402 = vunpack.c.l.b16 %v321
    %v403 = vunpack.c.h.b16 %v321
    %v404 = vunpack.c.l.b16 %v322
    %v405 = vunpack.c.h.b16 %v322
    %v406 = vunpack.c.l.b16 %v323
    %v407 = vunpack.c.h.b16 %v323
    %v408 = vunpack.c.l.b16 %v324
    %v409 = vunpack.c.h.b16 %v324
    %v410 = vunpack.c.l.b16 %v325
    %v411 = vunpack.c.h.b16 %v325
    %v412 = vunpack.c.l.b16 %v326
    %v413 = vunpack.c.h.b16 %v326
    %v414 = vunpack.c.l.b16 %v327
    %v415 = vunpack.c.h.b16 %v327
    %v416 = vunpack.c.l.b16 %v328
    %v417 = vunpack.c.h.b16 %v328
    %v418 = vunpack.c.l.b16 %v329
    %v419 = vunpack.c.h.b16 %v329
    %v420 = vunpack.c.l.b16 %v330
    %v421 = vunpack.c.h.b16 %v330
    %v422 = vunpack.c.l.b16 %v331
    %v423 = vunpack.c.h.b16 %v331
    %v424 = vunpack.c.l.b16 %v332
    %v425 = vunpack.c.h.b16 %v332
    %v426 = vunpack.c.l.b16 %v333
    %v427 = vunpack.c.h.b16 %v333
    %v428 = vunpack.c.l.b16 %v334
    %v429 = vunpack.c.h.b16 %v334
    %v430 = vunpack.c.l.b16 %v335
    %v431 = vunpack.c.h.b16 %v335
    %v432 = vunpack.c.l.b16 %v336
    %v433 = vunpack.c.h.b16 %v336
    %v434 = vpack.c.b16 %v374, %v370
    %v435 = vpack.c.b16 %v375, %v371
    %v436 = vpack.c.b16 %v376, %v372
    %v437 = vpack.c.b16 %v377, %v373
    %v438 = vpack.c.b16 %v382, %v378
    %v439 = vpack.c.b16 %v383, %v379
    %v440 = vpack.c.b16 %v384, %v380
    %v441 = vpack.c.b16 %v385, %v381
    %v442 = vpack.c.b16 %v390, %v386
    %v443 = vpack.c.b16 %v391, %v387
    %v444 = vpack.c.b16 %v392, %v388
    %v445 = vpack.c.b16 %v393, %v389
    %v446 = vpack.c.b16 %v398, %v394
    %v447 = vpack.c.b16 %v399, %v395
    %v448 = vpack.c.b16 %v400, %v396
    %v449 = vpack.c.b16 %v401, %v397
    %v450 = vpack.c.b16 %v406, %v402
    %v451 = vpack.c.b16 %v407, %v403
    %v452 = vpack.c.b16 %v408, %v404
    %v453 = vpack.c.b16 %v409, %v405
    %v454 = vpack.c.b16 %v414, %v410
    %v455 = vpack.c.b16 %v415, %v411
    %v456 = vpack.c.b16 %v416, %v412
    %v457 = vpack.c.b16 %v417, %v413
    %v458 = vpack.c.b16 %v422, %v418
    %v459 = vpack.c.b16 %v423, %v419
    %v460 = vpack.c.b16 %v424, %v420
    %v461 = vpack.c.b16 %v425, %v421
    %v462 = vpack.c.b16 %v430, %v426
    %v463 = vpack.c.b16 %v431, %v427
    %v464 = vpack.c.b16 %v432, %v428
    %v465 = vpack.c.b16 %v433, %v429
    %v499 = vlaneseq
    %v500 = vshrl.u32 %v499, 7
    %v501 = vsub.s32 0, %v500
    %v502 = vrot.slane %v337, %v501
    %v503 = vlaneseq
    %v504 = vshrl.u32 %v503, 7
    %v505 = vsub.s32 1, %v504
    %v506 = vrot.slane %v337, %v505
    %v507 = vlaneseq
    %v508 = vshrl.u32 %v507, 7
    %v509 = vsub.s32 2, %v508
    %v510 = vrot.slane %v337, %v509
    %v511 = vlaneseq
    %v512 = vshrl.u32 %v511, 7
    %v513 = vsub.s32 3, %v512
    %v514 = vrot.slane %v337, %v513
    %519 = vmatprep.subr.bf16.mxu0 %v435
    %520 = vmatpush1.bf16.msra.mxu0 %v434
    %521 = vmatprep.subr.bf16.mxu0 %v439
    %522 = vmatpush1.bf16.msra.mxu0 %v438
    %523 = vmatprep.subr.bf16.mxu0 %v443
    %524 = vmatpush1.bf16.msra.mxu0 %v442
    %525 = vmatprep.subr.bf16.mxu0 %v447
    %526 = vmatpush1.bf16.msra.mxu0 %v446
    %527 = vmatprep.subr.bf16.mxu0 %v451
    %528 = vmatpush1.bf16.msra.mxu0 %v450
    %529 = vmatprep.subr.bf16.mxu0 %v455
    %530 = vmatpush1.bf16.msra.mxu0 %v454
    %531 = vmatprep.subr.bf16.mxu0 %v459
    %532 = vmatpush1.bf16.msra.mxu0 %v458
    %533 = vmatprep.subr.bf16.mxu0 %v463
    %534 = vmatpush1.bf16.msra.mxu0 %v462
    %535 = vmatprep.subr.bf16.mxu0 0
    %536 = vmatpush1.bf16.msra.mxu0 0
    %537 = vmatprep.subr.bf16.mxu0 0
    %538 = vmatpush1.bf16.msra.mxu0 0
    %539 = vmatprep.subr.bf16.mxu0 0
    %540 = vmatpush1.bf16.msra.mxu0 0
    %541 = vmatprep.subr.bf16.mxu0 0
    %542 = vmatpush1.bf16.msra.mxu0 0
    %543 = vmatprep.subr.bf16.mxu0 0
    %544 = vmatpush1.bf16.msra.mxu0 0
    %545 = vmatprep.subr.bf16.mxu0 0
    %546 = vmatpush1.bf16.msra.mxu0 0
    %547 = vmatprep.subr.bf16.mxu0 0
    %548 = vmatpush1.bf16.msra.mxu0 0
    %549 = vmatprep.subr.bf16.mxu0 0
    %550 = vmatpush1.bf16.msra.mxu0 0
    %551 = vmatprep.mubr.bf16.mxu0 0
    %552 = vmatmul.mubr.bf16.gmra.mrb[0].mxu0 %v304
    %v553 = vpop.f32.mrb[0].mxu0
    %v554 = vadd.f32 %v502, %v553
    %v555 = vpop.f32.mrb[0].mxu0
    %v556 = vadd.f32 %v506, %v555
    %v557 = vpop.f32.mrb[0].mxu0
    %v558 = vpop.f32.mrb[0].mxu0
    %559 = vdwg.mxu0
    %560 = vmatprep.subr.bf16.mxu0 %v437
    %561 = vmatpush1.bf16.msra.mxu0 %v436
    %562 = vmatprep.subr.bf16.mxu0 %v441
    %563 = vmatpush1.bf16.msra.mxu0 %v440
    %564 = vmatprep.subr.bf16.mxu0 %v445
    %565 = vmatpush1.bf16.msra.mxu0 %v444
    %566 = vmatprep.subr.bf16.mxu0 %v449
    %567 = vmatpush1.bf16.msra.mxu0 %v448
    %568 = vmatprep.subr.bf16.mxu0 %v453
    %569 = vmatpush1.bf16.msra.mxu0 %v452
    %570 = vmatprep.subr.bf16.mxu0 %v457
    %571 = vmatpush1.bf16.msra.mxu0 %v456
    %572 = vmatprep.subr.bf16.mxu0 %v461
    %573 = vmatpush1.bf16.msra.mxu0 %v460
    %574 = vmatprep.subr.bf16.mxu0 %v465
    %575 = vmatpush1.bf16.msra.mxu0 %v464
    %576 = vmatprep.subr.bf16.mxu0 0
    %577 = vmatpush1.bf16.msra.mxu0 0
    %578 = vmatprep.subr.bf16.mxu0 0
    %579 = vmatpush1.bf16.msra.mxu0 0
    %580 = vmatprep.subr.bf16.mxu0 0
    %581 = vmatpush1.bf16.msra.mxu0 0
    %582 = vmatprep.subr.bf16.mxu0 0
    %583 = vmatpush1.bf16.msra.mxu0 0
    %584 = vmatprep.subr.bf16.mxu0 0
    %585 = vmatpush1.bf16.msra.mxu0 0
    %586 = vmatprep.subr.bf16.mxu0 0
    %587 = vmatpush1.bf16.msra.mxu0 0
    %588 = vmatprep.subr.bf16.mxu0 0
    %589 = vmatpush1.bf16.msra.mxu0 0
    %590 = vmatprep.subr.bf16.mxu0 0
    %591 = vmatpush1.bf16.msra.mxu0 0
    %592 = vmatprep.mubr.bf16.mxu0 0
    %593 = vmatmul.mubr.bf16.gmra.mrb[0].mxu0 %v304
    %v594 = vpop.f32.mrb[0].mxu0
    %v595 = vadd.f32 %v510, %v594
    %v596 = vpop.f32.mrb[0].mxu0
    %v597 = vadd.f32 %v514, %v596
    %v598 = vpop.f32.mrb[0].mxu0
    %v599 = vpop.f32.mrb[0].mxu0
    %600 = vdwg.mxu0
    %v601 = vadd.f32 %v298, %v554
    %vm602 = vcmask 1040384
    %v603 = vsel %vm602, %v601, -inf
    %604 = vmax.xlane.f32.xlu0 %v603
    %v605 = vpop.xlane.xlu0 %604
    %v606 = vsub.f32 %v601, %v605
    %v607 = vmul.f32 %v606, 1.442695
    %v608 = vpow.pop %v607
    %v609 = vsel %vm602, %v608, 0.0
    %610 = vadd.xlane.f32.xlu0 %v609
    %v611 = vpop.xlane.xlu0 %610
    %v612 = vrcp.pop %v611
    %v613 = vmul.f32 %v608, %v612
    %614 = vst [vmem:[#allocation17] sm:$0x1] %v613
    %v615 = vpack.c.bf16 %v613, %v613
    %v616 = vld [vmem:[#allocation8] sm:$0xf]
    %v617 = vld [vmem:[#allocation8 + $0x4] sm:$0xf]
    %v618 = vld [vmem:[#allocation8 + $0x8] sm:$0xf]
    %v619 = vld [vmem:[#allocation8 + $0xc] sm:$0xf]
    %v620 = vld [vmem:[#allocation8 + $0x10] sm:$0xf]
    %v621 = vld [vmem:[#allocation8 + $0x14] sm:$0xf]
    %v622 = vld [vmem:[#allocation8 + $0x18] sm:$0xf]
    %v623 = vld [vmem:[#allocation8 + $0x1c] sm:$0xf]
    %v624 = vld [vmem:[#allocation8 + $0x20] sm:$0xf]
    %v625 = vld [vmem:[#allocation8 + $0x24] sm:$0xf]
    %v626 = vld [vmem:[#allocation8 + $0x28] sm:$0xf]
    %v627 = vld [vmem:[#allocation8 + $0x2c] sm:$0xf]
    %v628 = vld [vmem:[#allocation8 + $0x30] sm:$0xf]
    %v629 = vld [vmem:[#allocation8 + $0x34] sm:$0xf]
    %v630 = vld [vmem:[#allocation8 + $0x38] sm:$0xf]
    %v631 = vld [vmem:[#allocation8 + $0x3c] sm:$0xf]
    %v648 = vunpack.c.l.b16 %v616
    %v649 = vunpack.c.l.b16 %v617
    %v650 = vunpack.c.l.b16 %v618
    %v651 = vunpack.c.l.b16 %v619
    %v652 = vunpack.c.l.b16 %v620
    %v653 = vunpack.c.l.b16 %v621
    %v654 = vunpack.c.l.b16 %v622
    %v655 = vunpack.c.l.b16 %v623
    %v656 = vunpack.c.l.b16 %v624
    %v657 = vunpack.c.l.b16 %v625
    %v658 = vunpack.c.l.b16 %v626
    %v659 = vunpack.c.l.b16 %v627
    %v660 = vunpack.c.l.b16 %v628
    %v661 = vunpack.c.l.b16 %v629
    %v662 = vunpack.c.l.b16 %v630
    %v663 = vunpack.c.l.b16 %v631
    %v664 = vpack.c.b16 %v649, %v648
    %v665 = vpack.c.b16 %v651, %v650
    %v666 = vpack.c.b16 %v653, %v652
    %v667 = vpack.c.b16 %v655, %v654
    %v668 = vpack.c.b16 %v657, %v656
    %v669 = vpack.c.b16 %v659, %v658
    %v670 = vpack.c.b16 %v661, %v660
    %v671 = vpack.c.b16 %v663, %v662
    %680 = vmatprep.subr.bf16.mxu0 0
    %681 = vmatpush1.bf16.msra.mxu0 %v664
    %682 = vmatprep.subr.bf16.mxu0 0
    %683 = vmatpush1.bf16.msra.mxu0 %v665
    %684 = vmatprep.subr.bf16.mxu0 0
    %685 = vmatpush1.bf16.msra.mxu0 %v666
    %686 = vmatprep.subr.bf16.mxu0 0
    %687 = vmatpush1.bf16.msra.mxu0 %v667
    %688 = vmatprep.subr.bf16.mxu0 0
    %689 = vmatpush1.bf16.msra.mxu0 %v668
    %690 = vmatprep.subr.bf16.mxu0 0
    %691 = vmatpush1.bf16.msra.mxu0 %v669
    %692 = vmatprep.subr.bf16.mxu0 0
    %693 = vmatpush1.bf16.msra.mxu0 %v670
    %694 = vmatprep.subr.bf16.mxu0 0
    %695 = vmatpush1.bf16.msra.mxu0 %v671
    %696 = vmatprep.subr.bf16.mxu0 0
    %697 = vmatpush1.bf16.msra.mxu0 0
    %698 = vmatprep.subr.bf16.mxu0 0
    %699 = vmatpush1.bf16.msra.mxu0 0
    %700 = vmatprep.subr.bf16.mxu0 0
    %701 = vmatpush1.bf16.msra.mxu0 0
    %702 = vmatprep.subr.bf16.mxu0 0
    %703 = vmatpush1.bf16.msra.mxu0 0
    %704 = vmatprep.subr.bf16.mxu0 0
    %705 = vmatpush1.bf16.msra.mxu0 0
    %706 = vmatprep.subr.bf16.mxu0 0
    %707 = vmatpush1.bf16.msra.mxu0 0
    %708 = vmatprep.subr.bf16.mxu0 0
    %709 = vmatpush1.bf16.msra.mxu0 0
    %710 = vmatprep.subr.bf16.mxu0 0
    %711 = vmatpush1.bf16.msra.mxu0 0
    %712 = vmatprep.mubr.bf16.mxu0 0
    %713 = vmatmul.mubr.bf16.gmra.mrb[0].mxu0 %v615
    %v714 = vpop.f32.mrb[0].mxu0
    %v715 = vadd.f32 0.0, %v714
    %v716 = vpop.f32.mrb[0].mxu0
    %v717 = vpop.f32.mrb[0].mxu0
    %v718 = vpop.f32.mrb[0].mxu0
    %719 = vdwg.mxu0
    %v720 = vpack.c.bf16 %v715, %v715
    %v721 = vld [vmem:[#allocation12] sm:$0xf]
    %v722 = vld [vmem:[#allocation12 + $0x4] sm:$0xf]
    %v723 = vld [vmem:[#allocation12 + $0x8] sm:$0xf]
    %v724 = vld [vmem:[#allocation12 + $0xc] sm:$0xf]
    %v725 = vld [vmem:[#allocation12 + $0x10] sm:$0xf]
    %v726 = vld [vmem:[#allocation12 + $0x14] sm:$0xf]
    %v727 = vld [vmem:[#allocation12 + $0x18] sm:$0xf]
    %v728 = vld [vmem:[#allocation12 + $0x1c] sm:$0xf]
    %v729 = vld [vmem:[#allocation12 + $0x20] sm:$0xf]
    %v730 = vld [vmem:[#allocation12 + $0x24] sm:$0xf]
    %v731 = vld [vmem:[#allocation12 + $0x28] sm:$0xf]
    %v732 = vld [vmem:[#allocation12 + $0x2c] sm:$0xf]
    %v733 = vld [vmem:[#allocation12 + $0x30] sm:$0xf]
    %v734 = vld [vmem:[#allocation12 + $0x34] sm:$0xf]
    %v735 = vld [vmem:[#allocation12 + $0x38] sm:$0xf]
    %v736 = vld [vmem:[#allocation12 + $0x3c] sm:$0xf]
    %v753 = vunpack.c.l.b16 %v721
    %v754 = vunpack.c.l.b16 %v722
    %v755 = vunpack.c.l.b16 %v723
    %v756 = vunpack.c.l.b16 %v724
    %v757 = vunpack.c.l.b16 %v725
    %v758 = vunpack.c.l.b16 %v726
    %v759 = vunpack.c.l.b16 %v727
    %v760 = vunpack.c.l.b16 %v728
    %v761 = vunpack.c.l.b16 %v729
    %v762 = vunpack.c.l.b16 %v730
    %v763 = vunpack.c.l.b16 %v731
    %v764 = vunpack.c.l.b16 %v732
    %v765 = vunpack.c.l.b16 %v733
    %v766 = vunpack.c.l.b16 %v734
    %v767 = vunpack.c.l.b16 %v735
    %v768 = vunpack.c.l.b16 %v736
    %v769 = vpack.c.b16 %v754, %v753
    %v770 = vpack.c.b16 %v756, %v755
    %v771 = vpack.c.b16 %v758, %v757
    %v772 = vpack.c.b16 %v760, %v759
    %v773 = vpack.c.b16 %v762, %v761
    %v774 = vpack.c.b16 %v764, %v763
    %v775 = vpack.c.b16 %v766, %v765
    %v776 = vpack.c.b16 %v768, %v767
    %785 = vmatprep.subr.bf16.mxu0 0
    %786 = vmatpush1.bf16.msra.mxu0 %v769
    %787 = vmatprep.subr.bf16.mxu0 0
    %788 = vmatpush1.bf16.msra.mxu0 %v770
    %789 = vmatprep.subr.bf16.mxu0 0
    %790 = vmatpush1.bf16.msra.mxu0 %v771
    %791 = vmatprep.subr.bf16.mxu0 0
    %792 = vmatpush1.bf16.msra.mxu0 %v772
    %793 = vmatprep.subr.bf16.mxu0 0
    %794 = vmatpush1.bf16.msra.mxu0 %v773
    %795 = vmatprep.subr.bf16.mxu0 0
    %796 = vmatpush1.bf16.msra.mxu0 %v774
    %797 = vmatprep.subr.bf16.mxu0 0
    %798 = vmatpush1.bf16.msra.mxu0 %v775
    %799 = vmatprep.subr.bf16.mxu0 0
    %800 = vmatpush1.bf16.msra.mxu0 %v776
    %801 = vmatprep.subr.bf16.mxu0 0
    %802 = vmatpush1.bf16.msra.mxu0 0
    %803 = vmatprep.subr.bf16.mxu0 0
    %804 = vmatpush1.bf16.msra.mxu0 0
    %805 = vmatprep.subr.bf16.mxu0 0
    %806 = vmatpush1.bf16.msra.mxu0 0
    %807 = vmatprep.subr.bf16.mxu0 0
    %808 = vmatpush1.bf16.msra.mxu0 0
    %809 = vmatprep.subr.bf16.mxu0 0
    %810 = vmatpush1.bf16.msra.mxu0 0
    %811 = vmatprep.subr.bf16.mxu0 0
    %812 = vmatpush1.bf16.msra.mxu0 0
    %813 = vmatprep.subr.bf16.mxu0 0
    %814 = vmatpush1.bf16.msra.mxu0 0
    %815 = vmatprep.subr.bf16.mxu0 0
    %816 = vmatpush1.bf16.msra.mxu0 0
    %817 = vmatprep.mubr.bf16.mxu0 0
    %818 = vmatmul.mubr.bf16.gmra.mrb[0].mxu0 %v720
    %v819 = vpop.f32.mrb[0].mxu0
    %v820 = vadd.f32 0.0, %v819
    %v821 = vpop.f32.mrb[0].mxu0
    %v822 = vpop.f32.mrb[0].mxu0
    %v823 = vpop.f32.mrb[0].mxu0
    %824 = vdwg.mxu0
    %v825 = vadd.f32 %v300, %v820
    %v826 = vmax.f32 %v825, 0.0
    %v827 = vpack.c.bf16 %v826, %v826
    %v828 = vld [vmem:[#allocation14] sm:$0xff]
    %v829 = vld [vmem:[#allocation14 + $0x8] sm:$0xf]
    %v830 = vld [vmem:[#allocation14 + $0xc] sm:$0xff]
    %v831 = vld [vmem:[#allocation14 + $0x14] sm:$0xf]
    %v832 = vld [vmem:[#allocation14 + $0x18] sm:$0xff]
    %v833 = vld [vmem:[#allocation14 + $0x20] sm:$0xf]
    %v834 = vld [vmem:[#allocation14 + $0x24] sm:$0xff]
    %v835 = vld [vmem:[#allocation14 + $0x2c] sm:$0xf]
    %v836 = vld [vmem:[#allocation14 + $0x30] sm:$0xff]
    %v837 = vld [vmem:[#allocation14 + $0x38] sm:$0xf]
    %v838 = vld [vmem:[#allocation14 + $0x3c] sm:$0xff]
    %v839 = vld [vmem:[#allocation14 + $0x44] sm:$0xf]
    %v840 = vld [vmem:[#allocation14 + $0x48] sm:$0xff]
    %v841 = vld [vmem:[#allocation14 + $0x50] sm:$0xf]
    %v842 = vld [vmem:[#allocation14 + $0x54] sm:$0xff]
    %v843 = vld [vmem:[#allocation14 + $0x5c] sm:$0xf]
    %v844 = vld [vmem:[#allocation14 + $0x60] sm:$0xff]
    %v845 = vld [vmem:[#allocation14 + $0x68] sm:$0xf]
    %v846 = vld [vmem:[#allocation14 + $0x6c] sm:$0xff]
    %v847 = vld [vmem:[#allocation14 + $0x74] sm:$0xf]
    %v848 = vld [vmem:[#allocation14 + $0x78] sm:$0xff]
    %v849 = vld [vmem:[#allocation14 + $0x80] sm:$0xf]
    %v850 = vld [vmem:[#allocation14 + $0x84] sm:$0xff]
    %v851 = vld [vmem:[#allocation14 + $0x8c] sm:$0xf]
    %v852 = vld [vmem:[#allocation14 + $0x90] sm:$0xff]
    %v853 = vld [vmem:[#allocation14 + $0x98] sm:$0xf]
    %v854 = vld [vmem:[#allocation14 + $0x9c] sm:$0xff]
    %v855 = vld [vmem:[#allocation14 + $0xa4] sm:$0xf]
    %v856 = vld [vmem:[#allocation14 + $0xa8] sm:$0xff]
    %v857 = vld [vmem:[#allocation14 + $0xb0] sm:$0xf]
    %v858 = vld [vmem:[#allocation14 + $0xb4] sm:$0xff]
    %v859 = vld [vmem:[#allocation14 + $0xbc] sm:$0xf]
    %v860 = vld [vmem:[%s10] sm:$0x7]
    %v893 = vunpack.c.l.b16 %v828
    %v894 = vunpack.c.h.b16 %v828
    %v895 = vunpack.c.l.b16 %v829
    %v896 = vunpack.c.l.b16 %v830
    %v897 = vunpack.c.h.b16 %v830
    %v898 = vunpack.c.l.b16 %v831
    %v899 = vunpack.c.l.b16 %v832
    %v900 = vunpack.c.h.b16 %v832
    %v901 = vunpack.c.l.b16 %v833
    %v902 = vunpack.c.l.b16 %v834
    %v903 = vunpack.c.h.b16 %v834
    %v904 = vunpack.c.l.b16 %v835
    %v905 = vunpack.c.l.b16 %v836
    %v906 = vunpack.c.h.b16 %v836
    %v907 = vunpack.c.l.b16 %v837
    %v908 = vunpack.c.l.b16 %v838
    %v909 = vunpack.c.h.b16 %v838
    %v910 = vunpack.c.l.b16 %v839
    %v911 = vunpack.c.l.b16 %v840
    %v912 = vunpack.c.h.b16 %v840
    %v913 = vunpack.c.l.b16 %v841
    %v914 = vunpack.c.l.b16 %v842
    %v915 = vunpack.c.h.b16 %v842
    %v916 = vunpack.c.l.b16 %v843
    %v917 = vunpack.c.l.b16 %v844
    %v918 = vunpack.c.h.b16 %v844
    %v919 = vunpack.c.l.b16 %v845
    %v920 = vunpack.c.l.b16 %v846
    %v921 = vunpack.c.h.b16 %v846
    %v922 = vunpack.c.l.b16 %v847
    %v923 = vunpack.c.l.b16 %v848
    %v924 = vunpack.c.h.b16 %v848
    %v925 = vunpack.c.l.b16 %v849
    %v926 = vunpack.c.l.b16 %v850
    %v927 = vunpack.c.h.b16 %v850
    %v928 = vunpack.c.l.b16 %v851
    %v929 = vunpack.c.l.b16 %v852
    %v930 = vunpack.c.h.b16 %v852
    %v931 = vunpack.c.l.b16 %v853
    %v932 = vunpack.c.l.b16 %v854
    %v933 = vunpack.c.h.b16 %v854
    %v934 = vunpack.c.l.b16 %v855
    %v935 = vunpack.c.l.b16 %v856
    %v936 = vunpack.c.h.b16 %v856
    %v937 = vunpack.c.l.b16 %v857
    %v938 = vunpack.c.l.b16 %v858
    %v939 = vunpack.c.h.b16 %v858
    %v940 = vunpack.c.l.b16 %v859
    %v941 = vpack.c.b16 %v896, %v893
    %v942 = vpack.c.b16 %v897, %v894
    %v943 = vpack.c.b16 %v898, %v895
    %v944 = vpack.c.b16 %v902, %v899
    %v945 = vpack.c.b16 %v903, %v900
    %v946 = vpack.c.b16 %v904, %v901
    %v947 = vpack.c.b16 %v908, %v905
    %v948 = vpack.c.b16 %v909, %v906
    %v949 = vpack.c.b16 %v910, %v907
    %v950 = vpack.c.b16 %v914, %v911
    %v951 = vpack.c.b16 %v915, %v912
    %v952 = vpack.c.b16 %v916, %v913
    %v953 = vpack.c.b16 %v920, %v917
    %v954 = vpack.c.b16 %v921, %v918
    %v955 = vpack.c.b16 %v922, %v919
    %v956 = vpack.c.b16 %v926, %v923
    %v957 = vpack.c.b16 %v927, %v924
    %v958 = vpack.c.b16 %v928, %v925
    %v959 = vpack.c.b16 %v932, %v929
    %v960 = vpack.c.b16 %v933, %v930
    %v961 = vpack.c.b16 %v934, %v931
    %v962 = vpack.c.b16 %v938, %v935
    %v963 = vpack.c.b16 %v939, %v936
    %v964 = vpack.c.b16 %v940, %v937
    %v990 = vlaneseq
    %v991 = vshrl.u32 %v990, 7
    %v992 = vsub.s32 0, %v991
    %v993 = vrot.slane %v860, %v992
    %v994 = vlaneseq
    %v995 = vshrl.u32 %v994, 7
    %v996 = vsub.s32 1, %v995
    %v997 = vrot.slane %v860, %v996
    %v998 = vlaneseq
    %v999 = vshrl.u32 %v998, 7
    %v1000 = vsub.s32 2, %v999
    %v1001 = vrot.slane %v860, %v1000
    %1005 = vmatprep.subr.bf16.mxu0 %v942
    %1006 = vmatpush1.bf16.msra.mxu0 %v941
    %1007 = vmatprep.subr.bf16.mxu0 %v945
    %1008 = vmatpush1.bf16.msra.mxu0 %v944
    %1009 = vmatprep.subr.bf16.mxu0 %v948
    %1010 = vmatpush1.bf16.msra.mxu0 %v947
    %1011 = vmatprep.subr.bf16.mxu0 %v951
    %1012 = vmatpush1.bf16.msra.mxu0 %v950
    %1013 = vmatprep.subr.bf16.mxu0 %v954
    %1014 = vmatpush1.bf16.msra.mxu0 %v953
    %1015 = vmatprep.subr.bf16.mxu0 %v957
    %1016 = vmatpush1.bf16.msra.mxu0 %v956
    %1017 = vmatprep.subr.bf16.mxu0 %v960
    %1018 = vmatpush1.bf16.msra.mxu0 %v959
    %1019 = vmatprep.subr.bf16.mxu0 %v963
    %1020 = vmatpush1.bf16.msra.mxu0 %v962
    %1021 = vmatprep.subr.bf16.mxu0 0
    %1022 = vmatpush1.bf16.msra.mxu0 0
    %1023 = vmatprep.subr.bf16.mxu0 0
    %1024 = vmatpush1.bf16.msra.mxu0 0
    %1025 = vmatprep.subr.bf16.mxu0 0
    %1026 = vmatpush1.bf16.msra.mxu0 0
    %1027 = vmatprep.subr.bf16.mxu0 0
    %1028 = vmatpush1.bf16.msra.mxu0 0
    %1029 = vmatprep.subr.bf16.mxu0 0
    %1030 = vmatpush1.bf16.msra.mxu0 0
    %1031 = vmatprep.subr.bf16.mxu0 0
    %1032 = vmatpush1.bf16.msra.mxu0 0
    %1033 = vmatprep.subr.bf16.mxu0 0
    %1034 = vmatpush1.bf16.msra.mxu0 0
    %1035 = vmatprep.subr.bf16.mxu0 0
    %1036 = vmatpush1.bf16.msra.mxu0 0
    %1037 = vmatprep.mubr.bf16.mxu0 0
    %1038 = vmatmul.mubr.bf16.gmra.mrb[0].mxu0 %v827
    %v1039 = vpop.f32.mrb[0].mxu0
    %v1040 = vadd.f32 %v993, %v1039
    %v1041 = vpop.f32.mrb[0].mxu0
    %v1042 = vadd.f32 %v997, %v1041
    %v1043 = vpop.f32.mrb[0].mxu0
    %v1044 = vpop.f32.mrb[0].mxu0
    %1045 = vdwg.mxu0
    %1046 = vmatprep.subr.bf16.mxu0 0
    %1047 = vmatpush1.bf16.msra.mxu0 %v943
    %1048 = vmatprep.subr.bf16.mxu0 0
    %1049 = vmatpush1.bf16.msra.mxu0 %v946
    %1050 = vmatprep.subr.bf16.mxu0 0
    %1051 = vmatpush1.bf16.msra.mxu0 %v949
    %1052 = vmatprep.subr.bf16.mxu0 0
    %1053 = vmatpush1.bf16.msra.mxu0 %v952
    %1054 = vmatprep.subr.bf16.mxu0 0
    %1055 = vmatpush1.bf16.msra.mxu0 %v955
    %1056 = vmatprep.subr.bf16.mxu0 0
    %1057 = vmatpush1.bf16.msra.mxu0 %v958
    %1058 = vmatprep.subr.bf16.mxu0 0
    %1059 = vmatpush1.bf16.msra.mxu0 %v961
    %1060 = vmatprep.subr.bf16.mxu0 0
    %1061 = vmatpush1.bf16.msra.mxu0 %v964
    %1062 = vmatprep.subr.bf16.mxu0 0
    %1063 = vmatpush1.bf16.msra.mxu0 0
    %1064 = vmatprep.subr.bf16.mxu0 0
    %1065 = vmatpush1.bf16.msra.mxu0 0
    %1066 = vmatprep.subr.bf16.mxu0 0
    %1067 = vmatpush1.bf16.msra.mxu0 0
    %1068 = vmatprep.subr.bf16.mxu0 0
    %1069 = vmatpush1.bf16.msra.mxu0 0
    %1070 = vmatprep.subr.bf16.mxu0 0
    %1071 = vmatpush1.bf16.msra.mxu0 0
    %1072 = vmatprep.subr.bf16.mxu0 0
    %1073 = vmatpush1.bf16.msra.mxu0 0
    %1074 = vmatprep.subr.bf16.mxu0 0
    %1075 = vmatpush1.bf16.msra.mxu0 0
    %1076 = vmatprep.subr.bf16.mxu0 0
    %1077 = vmatpush1.bf16.msra.mxu0 0
    %1078 = vmatprep.mubr.bf16.mxu0 0
    %1079 = vmatmul.mubr.bf16.gmra.mrb[0].mxu0 %v827
    %v1080 = vpop.f32.mrb[0].mxu0
    %v1081 = vadd.f32 %v1001, %v1080
    %v1082 = vpop.f32.mrb[0].mxu0
    %v1083 = vpop.f32.mrb[0].mxu0
    %v1084 = vpop.f32.mrb[0].mxu0
    %1085 = vdwg.mxu0
    %v1086 = vadd.f32 %v1040, %v556
    %v1087 = vxor.u32 %v1086, 2147483648
    %v1088 = vmul.f32 %v1087, 1.442695
    %v1089 = vpow.pop %v1088
    %v1090 = vadd.f32 %v1089, 1.0
    %v1091 = vrcp.pop %v1090
    %v1092 = vmul.f32 1.0, %v1091
    %v1093 = vadd.f32 %v1042, %v595
    %v1094 = vxor.u32 %v1093, 2147483648
    %v1095 = vmul.f32 %v1094, 1.442695
    %v1096 = vpow.pop %v1095
    %v1097 = vadd.f32 %v1096, 1.0
    %v1098 = vrcp.pop %v1097
    %v1099 = vmul.f32 1.0, %v1098
    %v1100 = vmul.f32 %v1092, %v597
    %v1101 = vadd.f32 %v1081, %v1100
    %v1102 = vtanh.pop %v1101
    %v1103 = vsub.f32 1.0, %v1099
    %v1104 = vmul.f32 %v1103, %v1102
    %v1105 = vmul.f32 %v1099, %v152
    %v1106 = vadd.f32 %v1104, %v1105
    %1107 = vst [vmem:[#allocation2] sm:$0x1] %v1106
    %v1108 = vld [vmem:[#allocation3 + $0x1] sm:$0x1]
    %v1109 = vpack.c.bf16 %v1108, %v1108
    %v1110 = vld [vmem:[#allocation9] sm:$0xff]
    %v1111 = vld [vmem:[#allocation9 + $0x8] sm:$0xff]
    %v1112 = vld [vmem:[#allocation9 + $0x10] sm:$0xff]
    %v1113 = vld [vmem:[#allocation9 + $0x18] sm:$0xff]
    %v1114 = vld [vmem:[#allocation9 + $0x20] sm:$0xff]
    %v1115 = vld [vmem:[#allocation9 + $0x28] sm:$0xff]
    %v1116 = vld [vmem:[#allocation9 + $0x30] sm:$0xff]
    %v1117 = vld [vmem:[#allocation9 + $0x38] sm:$0xff]
    %v1118 = vld [vmem:[#allocation9 + $0x40] sm:$0xff]
    %v1119 = vld [vmem:[#allocation9 + $0x48] sm:$0xff]
    %v1120 = vld [vmem:[#allocation9 + $0x50] sm:$0xff]
    %v1121 = vld [vmem:[#allocation9 + $0x58] sm:$0xff]
    %v1122 = vld [vmem:[#allocation9 + $0x60] sm:$0xff]
    %v1123 = vld [vmem:[#allocation9 + $0x68] sm:$0xff]
    %v1124 = vld [vmem:[#allocation9 + $0x70] sm:$0xff]
    %v1125 = vld [vmem:[#allocation9 + $0x78] sm:$0xff]
    %v1126 = vld [vmem:[%s8] sm:$0x3]
    %v1143 = vunpack.c.l.b16 %v1110
    %v1144 = vunpack.c.h.b16 %v1110
    %v1145 = vunpack.c.l.b16 %v1111
    %v1146 = vunpack.c.h.b16 %v1111
    %v1147 = vunpack.c.l.b16 %v1112
    %v1148 = vunpack.c.h.b16 %v1112
    %v1149 = vunpack.c.l.b16 %v1113
    %v1150 = vunpack.c.h.b16 %v1113
    %v1151 = vunpack.c.l.b16 %v1114
    %v1152 = vunpack.c.h.b16 %v1114
    %v1153 = vunpack.c.l.b16 %v1115
    %v1154 = vunpack.c.h.b16 %v1115
    %v1155 = vunpack.c.l.b16 %v1116
    %v1156 = vunpack.c.h.b16 %v1116
    %v1157 = vunpack.c.l.b16 %v1117
    %v1158 = vunpack.c.h.b16 %v1117
    %v1159 = vunpack.c.l.b16 %v1118
    %v1160 = vunpack.c.h.b16 %v1118
    %v1161 = vunpack.c.l.b16 %v1119
    %v1162 = vunpack.c.h.b16 %v1119
    %v1163 = vunpack.c.l.b16 %v1120
    %v1164 = vunpack.c.h.b16 %v1120
    %v1165 = vunpack.c.l.b16 %v1121
    %v1166 = vunpack.c.h.b16 %v1121
    %v1167 = vunpack.c.l.b16 %v1122
    %v1168 = vunpack.c.h.b16 %v1122
    %v1169 = vunpack.c.l.b16 %v1123
    %v1170 = vunpack.c.h.b16 %v1123
    %v1171 = vunpack.c.l.b16 %v1124
    %v1172 = vunpack.c.h.b16 %v1124
    %v1173 = vunpack.c.l.b16 %v1125
    %v1174 = vunpack.c.h.b16 %v1125
    %v1175 = vpack.c.b16 %v1145, %v1143
    %v1176 = vpack.c.b16 %v1146, %v1144
    %v1177 = vpack.c.b16 %v1149, %v1147
    %v1178 = vpack.c.b16 %v1150, %v1148
    %v1179 = vpack.c.b16 %v1153, %v1151
    %v1180 = vpack.c.b16 %v1154, %v1152
    %v1181 = vpack.c.b16 %v1157, %v1155
    %v1182 = vpack.c.b16 %v1158, %v1156
    %v1183 = vpack.c.b16 %v1161, %v1159
    %v1184 = vpack.c.b16 %v1162, %v1160
    %v1185 = vpack.c.b16 %v1165, %v1163
    %v1186 = vpack.c.b16 %v1166, %v1164
    %v1187 = vpack.c.b16 %v1169, %v1167
    %v1188 = vpack.c.b16 %v1170, %v1168
    %v1189 = vpack.c.b16 %v1173, %v1171
    %v1190 = vpack.c.b16 %v1174, %v1172
    %v1208 = vlaneseq
    %v1209 = vshrl.u32 %v1208, 7
    %v1210 = vsub.s32 0, %v1209
    %v1211 = vrot.slane %v1126, %v1210
    %v1212 = vlaneseq
    %v1213 = vshrl.u32 %v1212, 7
    %v1214 = vsub.s32 1, %v1213
    %v1215 = vrot.slane %v1126, %v1214
    %1218 = vmatprep.subr.bf16.mxu0 %v1176
    %1219 = vmatpush1.bf16.msra.mxu0 %v1175
    %1220 = vmatprep.subr.bf16.mxu0 %v1178
    %1221 = vmatpush1.bf16.msra.mxu0 %v1177
    %1222 = vmatprep.subr.bf16.mxu0 %v1180
    %1223 = vmatpush1.bf16.msra.mxu0 %v1179
    %1224 = vmatprep.subr.bf16.mxu0 %v1182
    %1225 = vmatpush1.bf16.msra.mxu0 %v1181
    %1226 = vmatprep.subr.bf16.mxu0 %v1184
    %1227 = vmatpush1.bf16.msra.mxu0 %v1183
    %1228 = vmatprep.subr.bf16.mxu0 %v1186
    %1229 = vmatpush1.bf16.msra.mxu0 %v1185
    %1230 = vmatprep.subr.bf16.mxu0 %v1188
    %1231 = vmatpush1.bf16.msra.mxu0 %v1187
    %1232 = vmatprep.subr.bf16.mxu0 %v1190
    %1233 = vmatpush1.bf16.msra.mxu0 %v1189
    %1234 = vmatprep.subr.bf16.mxu0 0
    %1235 = vmatpush1.bf16.msra.mxu0 0
    %1236 = vmatprep.subr.bf16.mxu0 0
    %1237 = vmatpush1.bf16.msra.mxu0 0
    %1238 = vmatprep.subr.bf16.mxu0 0
    %1239 = vmatpush1.bf16.msra.mxu0 0
    %1240 = vmatprep.subr.bf16.mxu0 0
    %1241 = vmatpush1.bf16.msra.mxu0 0
    %1242 = vmatprep.subr.bf16.mxu0 0
    %1243 = vmatpush1.bf16.msra.mxu0 0
    %1244 = vmatprep.subr.bf16.mxu0 0
    %1245 = vmatpush1.bf16.msra.mxu0 0
    %1246 = vmatprep.subr.bf16.mxu0 0
    %1247 = vmatpush1.bf16.msra.mxu0 0
    %1248 = vmatprep.subr.bf16.mxu0 0
    %1249 = vmatpush1.bf16.msra.mxu0 0
    %1250 = vmatprep.mubr.bf16.mxu0 0
    %1251 = vmatmul.mubr.bf16.gmra.mrb[0].mxu0 %v1109
    %v1252 = vpop.f32.mrb[0].mxu0
    %v1253 = vadd.f32 %v1211, %v1252
    %v1254 = vpop.f32.mrb[0].mxu0
    %v1255 = vadd.f32 %v1215, %v1254
    %v1256 = vpop.f32.mrb[0].mxu0
    %v1257 = vpop.f32.mrb[0].mxu0
    %1258 = vdwg.mxu0
    %v1259 = vpack.c.bf16 %v1106, %v1106
    %v1260 = vld [vmem:[#allocation11] sm:$0xff]
    %v1261 = vld [vmem:[#allocation11 + $0x8] sm:$0xff]
    %v1262 = vld [vmem:[#allocation11 + $0x10] sm:$0xff]
    %v1263 = vld [vmem:[#allocation11 + $0x18] sm:$0xff]
    %v1264 = vld [vmem:[#allocation11 + $0x20] sm:$0xff]
    %v1265 = vld [vmem:[#allocation11 + $0x28] sm:$0xff]
    %v1266 = vld [vmem:[#allocation11 + $0x30] sm:$0xff]
    %v1267 = vld [vmem:[#allocation11 + $0x38] sm:$0xff]
    %v1268 = vld [vmem:[#allocation11 + $0x40] sm:$0xff]
    %v1269 = vld [vmem:[#allocation11 + $0x48] sm:$0xff]
    %v1270 = vld [vmem:[#allocation11 + $0x50] sm:$0xff]
    %v1271 = vld [vmem:[#allocation11 + $0x58] sm:$0xff]
    %v1272 = vld [vmem:[#allocation11 + $0x60] sm:$0xff]
    %v1273 = vld [vmem:[#allocation11 + $0x68] sm:$0xff]
    %v1274 = vld [vmem:[#allocation11 + $0x70] sm:$0xff]
    %v1275 = vld [vmem:[#allocation11 + $0x78] sm:$0xff]
    %v1276 = vld [vmem:[#allocation11 + $0x80] sm:$0xff]
    %v1277 = vld [vmem:[#allocation11 + $0x88] sm:$0xff]
    %v1278 = vld [vmem:[#allocation11 + $0x90] sm:$0xff]
    %v1279 = vld [vmem:[#allocation11 + $0x98] sm:$0xff]
    %v1280 = vld [vmem:[#allocation11 + $0xa0] sm:$0xff]
    %v1281 = vld [vmem:[#allocation11 + $0xa8] sm:$0xff]
    %v1282 = vld [vmem:[#allocation11 + $0xb0] sm:$0xff]
    %v1283 = vld [vmem:[#allocation11 + $0xb8] sm:$0xff]
    %v1284 = vld [vmem:[#allocation11 + $0xc0] sm:$0xff]
    %v1285 = vld [vmem:[#allocation11 + $0xc8] sm:$0xff]
    %v1286 = vld [vmem:[#allocation11 + $0xd0] sm:$0xff]
    %v1287 = vld [vmem:[#allocation11 + $0xd8] sm:$0xff]
    %v1288 = vld [vmem:[#allocation11 + $0xe0] sm:$0xff]
    %v1289 = vld [vmem:[#allocation11 + $0xe8] sm:$0xff]
    %v1290 = vld [vmem:[#allocation11 + $0xf0] sm:$0xff]
    %v1291 = vld [vmem:[#allocation11 + $0xf8] sm:$0xff]
    %v1292 = vld [vmem:[%s9] sm:$0xf]
    %v1325 = vunpack.c.l.b16 %v1260
    %v1326 = vunpack.c.h.b16 %v1260
    %v1327 = vunpack.c.l.b16 %v1261
    %v1328 = vunpack.c.h.b16 %v1261
    %v1329 = vunpack.c.l.b16 %v1262
    %v1330 = vunpack.c.h.b16 %v1262
    %v1331 = vunpack.c.l.b16 %v1263
    %v1332 = vunpack.c.h.b16 %v1263
    %v1333 = vunpack.c.l.b16 %v1264
    %v1334 = vunpack.c.h.b16 %v1264
    %v1335 = vunpack.c.l.b16 %v1265
    %v1336 = vunpack.c.h.b16 %v1265
    %v1337 = vunpack.c.l.b16 %v1266
    %v1338 = vunpack.c.h.b16 %v1266
    %v1339 = vunpack.c.l.b16 %v1267
    %v1340 = vunpack.c.h.b16 %v1267
    %v1341 = vunpack.c.l.b16 %v1268
    %v1342 = vunpack.c.h.b16 %v1268
    %v1343 = vunpack.c.l.b16 %v1269
    %v1344 = vunpack.c.h.b16 %v1269
    %v1345 = vunpack.c.l.b16 %v1270
    %v1346 = vunpack.c.h.b16 %v1270
    %v1347 = vunpack.c.l.b16 %v1271
    %v1348 = vunpack.c.h.b16 %v1271
    %v1349 = vunpack.c.l.b16 %v1272
    %v1350 = vunpack.c.h.b16 %v1272
    %v1351 = vunpack.c.l.b16 %v1273
    %v1352 = vunpack.c.h.b16 %v1273
    %v1353 = vunpack.c.l.b16 %v1274
    %v1354 = vunpack.c.h.b16 %v1274
    %v1355 = vunpack.c.l.b16 %v1275
    %v1356 = vunpack.c.h.b16 %v1275
    %v1357 = vunpack.c.l.b16 %v1276
    %v1358 = vunpack.c.h.b16 %v1276
    %v1359 = vunpack.c.l.b16 %v1277
    %v1360 = vunpack.c.h.b16 %v1277
    %v1361 = vunpack.c.l.b16 %v1278
    %v1362 = vunpack.c.h.b16 %v1278
    %v1363 = vunpack.c.l.b16 %v1279
    %v1364 = vunpack.c.h.b16 %v1279
    %v1365 = vunpack.c.l.b16 %v1280
    %v1366 = vunpack.c.h.b16 %v1280
    %v1367 = vunpack.c.l.b16 %v1281
    %v1368 = vunpack.c.h.b16 %v1281
    %v1369 = vunpack.c.l.b16 %v1282
    %v1370 = vunpack.c.h.b16 %v1282
    %v1371 = vunpack.c.l.b16 %v1283
    %v1372 = vunpack.c.h.b16 %v1283
    %v1373 = vunpack.c.l.b16 %v1284
    %v1374 = vunpack.c.h.b16 %v1284
    %v1375 = vunpack.c.l.b16 %v1285
    %v1376 = vunpack.c.h.b16 %v1285
    %v1377 = vunpack.c.l.b16 %v1286
    %v1378 = vunpack.c.h.b16 %v1286
    %v1379 = vunpack.c.l.b16 %v1287
    %v1380 = vunpack.c.h.b16 %v1287
    %v1381 = vunpack.c.l.b16 %v1288
    %v1382 = vunpack.c.h.b16 %v1288
    %v1383 = vunpack.c.l.b16 %v1289
    %v1384 = vunpack.c.h.b16 %v1289
    %v1385 = vunpack.c.l.b16 %v1290
    %v1386 = vunpack.c.h.b16 %v1290
    %v1387 = vunpack.c.l.b16 %v1291
    %v1388 = vunpack.c.h.b16 %v1291
    %v1389 = vpack.c.b16 %v1329, %v1325
    %v1390 = vpack.c.b16 %v1330, %v1326
    %v1391 = vpack.c.b16 %v1331, %v1327
    %v1392 = vpack.c.b16 %v1332, %v1328
    %v1393 = vpack.c.b16 %v1337, %v1333
    %v1394 = vpack.c.b16 %v1338, %v1334
    %v1395 = vpack.c.b16 %v1339, %v1335
    %v1396 = vpack.c.b16 %v1340, %v1336
    %v1397 = vpack.c.b16 %v1345, %v1341
    %v1398 = vpack.c.b16 %v1346, %v1342
    %v1399 = vpack.c.b16 %v1347, %v1343
    %v1400 = vpack.c.b16 %v1348, %v1344
    %v1401 = vpack.c.b16 %v1353, %v1349
    %v1402 = vpack.c.b16 %v1354, %v1350
    %v1403 = vpack.c.b16 %v1355, %v1351
    %v1404 = vpack.c.b16 %v1356, %v1352
    %v1405 = vpack.c.b16 %v1361, %v1357
    %v1406 = vpack.c.b16 %v1362, %v1358
    %v1407 = vpack.c.b16 %v1363, %v1359
    %v1408 = vpack.c.b16 %v1364, %v1360
    %v1409 = vpack.c.b16 %v1369, %v1365
    %v1410 = vpack.c.b16 %v1370, %v1366
    %v1411 = vpack.c.b16 %v1371, %v1367
    %v1412 = vpack.c.b16 %v1372, %v1368
    %v1413 = vpack.c.b16 %v1377, %v1373
    %v1414 = vpack.c.b16 %v1378, %v1374
    %v1415 = vpack.c.b16 %v1379, %v1375
    %v1416 = vpack.c.b16 %v1380, %v1376
    %v1417 = vpack.c.b16 %v1385, %v1381
    %v1418 = vpack.c.b16 %v1386, %v1382
    %v1419 = vpack.c.b16 %v1387, %v1383
    %v1420 = vpack.c.b16 %v1388, %v1384
    %v1454 = vlaneseq
    %v1455 = vshrl.u32 %v1454, 7
    %v1456 = vsub.s32 0, %v1455
    %v1457 = vrot.slane %v1292, %v1456
    %v1458 = vlaneseq
    %v1459 = vshrl.u32 %v1458, 7
    %v1460 = vsub.s32 1, %v1459
    %v1461 = vrot.slane %v1292, %v1460
    %v1462 = vlaneseq
    %v1463 = vshrl.u32 %v1462, 7
    %v1464 = vsub.s32 2, %v1463
    %v1465 = vrot.slane %v1292, %v1464
    %v1466 = vlaneseq
    %v1467 = vshrl.u32 %v1466, 7
    %v1468 = vsub.s32 3, %v1467
    %v1469 = vrot.slane %v1292, %v1468
    %1474 = vmatprep.subr.bf16.mxu0 %v1390
    %1475 = vmatpush1.bf16.msra.mxu0 %v1389
    %1476 = vmatprep.subr.bf16.mxu0 %v1394
    %1477 = vmatpush1.bf16.msra.mxu0 %v1393
    %1478 = vmatprep.subr.bf16.mxu0 %v1398
    %1479 = vmatpush1.bf16.msra.mxu0 %v1397
    %1480 = vmatprep.subr.bf16.mxu0 %v1402
    %1481 = vmatpush1.bf16.msra.mxu0 %v1401
    %1482 = vmatprep.subr.bf16.mxu0 %v1406
    %1483 = vmatpush1.bf16.msra.mxu0 %v1405
    %1484 = vmatprep.subr.bf16.mxu0 %v1410
    %1485 = vmatpush1.bf16.msra.mxu0 %v1409
    %1486 = vmatprep.subr.bf16.mxu0 %v1414
    %1487 = vmatpush1.bf16.msra.mxu0 %v1413
    %1488 = vmatprep.subr.bf16.mxu0 %v1418
    %1489 = vmatpush1.bf16.msra.mxu0 %v1417
    %1490 = vmatprep.subr.bf16.mxu0 0
    %1491 = vmatpush1.bf16.msra.mxu0 0
    %1492 = vmatprep.subr.bf16.mxu0 0
    %1493 = vmatpush1.bf16.msra.mxu0 0
    %1494 = vmatprep.subr.bf16.mxu0 0
    %1495 = vmatpush1.bf16.msra.mxu0 0
    %1496 = vmatprep.subr.bf16.mxu0 0
    %1497 = vmatpush1.bf16.msra.mxu0 0
    %1498 = vmatprep.subr.bf16.mxu0 0
    %1499 = vmatpush1.bf16.msra.mxu0 0
    %1500 = vmatprep.subr.bf16.mxu0 0
    %1501 = vmatpush1.bf16.msra.mxu0 0
    %1502 = vmatprep.subr.bf16.mxu0 0
    %1503 = vmatpush1.bf16.msra.mxu0 0
    %1504 = vmatprep.subr.bf16.mxu0 0
    %1505 = vmatpush1.bf16.msra.mxu0 0
    %1506 = vmatprep.mubr.bf16.mxu0 0
    %1507 = vmatmul.mubr.bf16.gmra.mrb[0].mxu0 %v1259
    %v1508 = vpop.f32.mrb[0].mxu0
    %v1509 = vadd.f32 %v1457, %v1508
    %v1510 = vpop.f32.mrb[0].mxu0
    %v1511 = vadd.f32 %v1461, %v1510
    %v1512 = vpop.f32.mrb[0].mxu0
    %v1513 = vpop.f32.mrb[0].mxu0
    %1514 = vdwg.mxu0
    %1515 = vmatprep.subr.bf16.mxu0 %v1392
    %1516 = vmatpush1.bf16.msra.mxu0 %v1391
    %1517 = vmatprep.subr.bf16.mxu0 %v1396
    %1518 = vmatpush1.bf16.msra.mxu0 %v1395
    %1519 = vmatprep.subr.bf16.mxu0 %v1400
    %1520 = vmatpush1.bf16.msra.mxu0 %v1399
    %1521 = vmatprep.subr.bf16.mxu0 %v1404
    %1522 = vmatpush1.bf16.msra.mxu0 %v1403
    %1523 = vmatprep.subr.bf16.mxu0 %v1408
    %1524 = vmatpush1.bf16.msra.mxu0 %v1407
    %1525 = vmatprep.subr.bf16.mxu0 %v1412
    %1526 = vmatpush1.bf16.msra.mxu0 %v1411
    %1527 = vmatprep.subr.bf16.mxu0 %v1416
    %1528 = vmatpush1.bf16.msra.mxu0 %v1415
    %1529 = vmatprep.subr.bf16.mxu0 %v1420
    %1530 = vmatpush1.bf16.msra.mxu0 %v1419
    %1531 = vmatprep.subr.bf16.mxu0 0
    %1532 = vmatpush1.bf16.msra.mxu0 0
    %1533 = vmatprep.subr.bf16.mxu0 0
    %1534 = vmatpush1.bf16.msra.mxu0 0
    %1535 = vmatprep.subr.bf16.mxu0 0
    %1536 = vmatpush1.bf16.msra.mxu0 0
    %1537 = vmatprep.subr.bf16.mxu0 0
    %1538 = vmatpush1.bf16.msra.mxu0 0
    %1539 = vmatprep.subr.bf16.mxu0 0
    %1540 = vmatpush1.bf16.msra.mxu0 0
    %1541 = vmatprep.subr.bf16.mxu0 0
    %1542 = vmatpush1.bf16.msra.mxu0 0
    %1543 = vmatprep.subr.bf16.mxu0 0
    %1544 = vmatpush1.bf16.msra.mxu0 0
    %1545 = vmatprep.subr.bf16.mxu0 0
    %1546 = vmatpush1.bf16.msra.mxu0 0
    %1547 = vmatprep.mubr.bf16.mxu0 0
    %1548 = vmatmul.mubr.bf16.gmra.mrb[0].mxu0 %v1259
    %v1549 = vpop.f32.mrb[0].mxu0
    %v1550 = vadd.f32 %v1465, %v1549
    %v1551 = vpop.f32.mrb[0].mxu0
    %v1552 = vadd.f32 %v1469, %v1551
    %v1553 = vpop.f32.mrb[0].mxu0
    %v1554 = vpop.f32.mrb[0].mxu0
    %1555 = vdwg.mxu0
    %v1556 = vadd.f32 %v1253, %v1509
    %v1557 = vsel %vm602, %v1556, -inf
    %1558 = vmax.xlane.f32.xlu0 %v1557
    %v1559 = vpop.xlane.xlu0 %1558
    %v1560 = vsub.f32 %v1556, %v1559
    %v1561 = vmul.f32 %v1560, 1.442695
    %v1562 = vpow.pop %v1561
    %v1563 = vsel %vm602, %v1562, 0.0
    %1564 = vadd.xlane.f32.xlu0 %v1563
    %v1565 = vpop.xlane.xlu0 %1564
    %v1566 = vrcp.pop %v1565
    %v1567 = vmul.f32 %v1562, %v1566
    %1568 = vst [vmem:[#allocation17 + $0x1] sm:$0x1] %v1567
    %v1569 = vpack.c.bf16 %v1567, %v1567
    %v1570 = vld [vmem:[#allocation8] sm:$0xf]
    %v1571 = vld [vmem:[#allocation8 + $0x4] sm:$0xf]
    %v1572 = vld [vmem:[#allocation8 + $0x8] sm:$0xf]
    %v1573 = vld [vmem:[#allocation8 + $0xc] sm:$0xf]
    %v1574 = vld [vmem:[#allocation8 + $0x10] sm:$0xf]
    %v1575 = vld [vmem:[#allocation8 + $0x14] sm:$0xf]
    %v1576 = vld [vmem:[#allocation8 + $0x18] sm:$0xf]
    %v1577 = vld [vmem:[#allocation8 + $0x1c] sm:$0xf]
    %v1578 = vld [vmem:[#allocation8 + $0x20] sm:$0xf]
    %v1579 = vld [vmem:[#allocation8 + $0x24] sm:$0xf]
    %v1580 = vld [vmem:[#allocation8 + $0x28] sm:$0xf]
    %v1581 = vld [vmem:[#allocation8 + $0x2c] sm:$0xf]
    %v1582 = vld [vmem:[#allocation8 + $0x30] sm:$0xf]
    %v1583 = vld [vmem:[#allocation8 + $0x34] sm:$0xf]
    %v1584 = vld [vmem:[#allocation8 + $0x38] sm:$0xf]
    %v1585 = vld [vmem:[#allocation8 + $0x3c] sm:$0xf]
    %v1602 = vunpack.c.l.b16 %v1570
    %v1603 = vunpack.c.l.b16 %v1571
    %v1604 = vunpack.c.l.b16 %v1572
    %v1605 = vunpack.c.l.b16 %v1573
    %v1606 = vunpack.c.l.b16 %v1574
    %v1607 = vunpack.c.l.b16 %v1575
    %v1608 = vunpack.c.l.b16 %v1576
    %v1609 = vunpack.c.l.b16 %v1577
    %v1610 = vunpack.c.l.b16 %v1578
    %v1611 = vunpack.c.l.b16 %v1579
    %v1612 = vunpack.c.l.b16 %v1580
    %v1613 = vunpack.c.l.b16 %v1581
    %v1614 = vunpack.c.l.b16 %v1582
    %v1615 = vunpack.c.l.b16 %v1583
    %v1616 = vunpack.c.l.b16 %v1584
    %v1617 = vunpack.c.l.b16 %v1585
    %v1618 = vpack.c.b16 %v1603, %v1602
    %v1619 = vpack.c.b16 %v1605, %v1604
    %v1620 = vpack.c.b16 %v1607, %v1606
    %v1621 = vpack.c.b16 %v1609, %v1608
    %v1622 = vpack.c.b16 %v1611, %v1610
    %v1623 = vpack.c.b16 %v1613, %v1612
    %v1624 = vpack.c.b16 %v1615, %v1614
    %v1625 = vpack.c.b16 %v1617, %v1616
    %1634 = vmatprep.subr.bf16.mxu0 0
    %1635 = vmatpush1.bf16.msra.mxu0 %v1618
    %1636 = vmatprep.subr.bf16.mxu0 0
    %1637 = vmatpush1.bf16.msra.mxu0 %v1619
    %1638 = vmatprep.subr.bf16.mxu0 0
    %1639 = vmatpush1.bf16.msra.mxu0 %v1620
    %1640 = vmatprep.subr.bf16.mxu0 0
    %1641 = vmatpush1.bf16.msra.mxu0 %v1621
    %1642 = vmatprep.subr.bf16.mxu0 0
    %1643 = vmatpush1.bf16.msra.mxu0 %v1622
    %1644 = vmatprep.subr.bf16.mxu0 0
    %1645 = vmatpush1.bf16.msra.mxu0 %v1623
    %1646 = vmatprep.subr.bf16.mxu0 0
    %1647 = vmatpush1.bf16.msra.mxu0 %v1624
    %1648 = vmatprep.subr.bf16.mxu0 0
    %1649 = vmatpush1.bf16.msra.mxu0 %v1625
    %1650 = vmatprep.subr.bf16.mxu0 0
    %1651 = vmatpush1.bf16.msra.mxu0 0
    %1652 = vmatprep.subr.bf16.mxu0 0
    %1653 = vmatpush1.bf16.msra.mxu0 0
    %1654 = vmatprep.subr.bf16.mxu0 0
    %1655 = vmatpush1.bf16.msra.mxu0 0
    %1656 = vmatprep.subr.bf16.mxu0 0
    %1657 = vmatpush1.bf16.msra.mxu0 0
    %1658 = vmatprep.subr.bf16.mxu0 0
    %1659 = vmatpush1.bf16.msra.mxu0 0
    %1660 = vmatprep.subr.bf16.mxu0 0
    %1661 = vmatpush1.bf16.msra.mxu0 0
    %1662 = vmatprep.subr.bf16.mxu0 0
    %1663 = vmatpush1.bf16.msra.mxu0 0
    %1664 = vmatprep.subr.bf16.mxu0 0
    %1665 = vmatpush1.bf16.msra.mxu0 0
    %1666 = vmatprep.mubr.bf16.mxu0 0
    %1667 = vmatmul.mubr.bf16.gmra.mrb[0].mxu0 %v1569
    %v1668 = vpop.f32.mrb[0].mxu0
    %v1669 = vadd.f32 0.0, %v1668
    %v1670 = vpop.f32.mrb[0].mxu0
    %v1671 = vpop.f32.mrb[0].mxu0
    %v1672 = vpop.f32.mrb[0].mxu0
    %1673 = vdwg.mxu0
    %v1674 = vpack.c.bf16 %v1669, %v1669
    %v1675 = vld [vmem:[#allocation12] sm:$0xf]
    %v1676 = vld [vmem:[#allocation12 + $0x4] sm:$0xf]
    %v1677 = vld [vmem:[#allocation12 + $0x8] sm:$0xf]
    %v1678 = vld [vmem:[#allocation12 + $0xc] sm:$0xf]
    %v1679 = vld [vmem:[#allocation12 + $0x10] sm:$0xf]
    %v1680 = vld [vmem:[#allocation12 + $0x14] sm:$0xf]
    %v1681 = vld [vmem:[#allocation12 + $0x18] sm:$0xf]
    %v1682 = vld [vmem:[#allocation12 + $0x1c] sm:$0xf]
    %v1683 = vld [vmem:[#allocation12 + $0x20] sm:$0xf]
    %v1684 = vld [vmem:[#allocation12 + $0x24] sm:$0xf]
    %v1685 = vld [vmem:[#allocation12 + $0x28] sm:$0xf]
    %v1686 = vld [vmem:[#allocation12 + $0x2c] sm:$0xf]
    %v1687 = vld [vmem:[#allocation12 + $0x30] sm:$0xf]
    %v1688 = vld [vmem:[#allocation12 + $0x34] sm:$0xf]
    %v1689 = vld [vmem:[#allocation12 + $0x38] sm:$0xf]
    %v1690 = vld [vmem:[#allocation12 + $0x3c] sm:$0xf]
    %v1707 = vunpack.c.l.b16 %v1675
    %v1708 = vunpack.c.l.b16 %v1676
    %v1709 = vunpack.c.l.b16 %v1677
    %v1710 = vunpack.c.l.b16 %v1678
    %v1711 = vunpack.c.l.b16 %v1679
    %v1712 = vunpack.c.l.b16 %v1680
    %v1713 = vunpack.c.l.b16 %v1681
    %v1714 = vunpack.c.l.b16 %v1682
    %v1715 = vunpack.c.l.b16 %v1683
    %v1716 = vunpack.c.l.b16 %v1684
    %v1717 = vunpack.c.l.b16 %v1685
    %v1718 = vunpack.c.l.b16 %v1686
    %v1719 = vunpack.c.l.b16 %v1687
    %v1720 = vunpack.c.l.b16 %v1688
    %v1721 = vunpack.c.l.b16 %v1689
    %v1722 = vunpack.c.l.b16 %v1690
    %v1723 = vpack.c.b16 %v1708, %v1707
    %v1724 = vpack.c.b16 %v1710, %v1709
    %v1725 = vpack.c.b16 %v1712, %v1711
    %v1726 = vpack.c.b16 %v1714, %v1713
    %v1727 = vpack.c.b16 %v1716, %v1715
    %v1728 = vpack.c.b16 %v1718, %v1717
    %v1729 = vpack.c.b16 %v1720, %v1719
    %v1730 = vpack.c.b16 %v1722, %v1721
    %1739 = vmatprep.subr.bf16.mxu0 0
    %1740 = vmatpush1.bf16.msra.mxu0 %v1723
    %1741 = vmatprep.subr.bf16.mxu0 0
    %1742 = vmatpush1.bf16.msra.mxu0 %v1724
    %1743 = vmatprep.subr.bf16.mxu0 0
    %1744 = vmatpush1.bf16.msra.mxu0 %v1725
    %1745 = vmatprep.subr.bf16.mxu0 0
    %1746 = vmatpush1.bf16.msra.mxu0 %v1726
    %1747 = vmatprep.subr.bf16.mxu0 0
    %1748 = vmatpush1.bf16.msra.mxu0 %v1727
    %1749 = vmatprep.subr.bf16.mxu0 0
    %1750 = vmatpush1.bf16.msra.mxu0 %v1728
    %1751 = vmatprep.subr.bf16.mxu0 0
    %1752 = vmatpush1.bf16.msra.mxu0 %v1729
    %1753 = vmatprep.subr.bf16.mxu0 0
    %1754 = vmatpush1.bf16.msra.mxu0 %v1730
    %1755 = vmatprep.subr.bf16.mxu0 0
    %1756 = vmatpush1.bf16.msra.mxu0 0
    %1757 = vmatprep.subr.bf16.mxu0 0
    %1758 = vmatpush1.bf16.msra.mxu0 0
    %1759 = vmatprep.subr.bf16.mxu0 0
    %1760 = vmatpush1.bf16.msra.mxu0 0
    %1761 = vmatprep.subr.bf16.mxu0 0
    %1762 = vmatpush1.bf16.msra.mxu0 0
    %1763 = vmatprep.subr.bf16.mxu0 0
    %1764 = vmatpush1.bf16.msra.mxu0 0
    %1765 = vmatprep.subr.bf16.mxu0 0
    %1766 = vmatpush1.bf16.msra.mxu0 0
    %1767 = vmatprep.subr.bf16.mxu0 0
    %1768 = vmatpush1.bf16.msra.mxu0 0
    %1769 = vmatprep.subr.bf16.mxu0 0
    %1770 = vmatpush1.bf16.msra.mxu0 0
    %1771 = vmatprep.mubr.bf16.mxu0 0
    %1772 = vmatmul.mubr.bf16.gmra.mrb[0].mxu0 %v1674
    %v1773 = vpop.f32.mrb[0].mxu0
    %v1774 = vadd.f32 0.0, %v1773
    %v1775 = vpop.f32.mrb[0].mxu0
    %v1776 = vpop.f32.mrb[0].mxu0
    %v1777 = vpop.f32.mrb[0].mxu0
    %1778 = vdwg.mxu0
    %v1779 = vadd.f32 %v1255, %v1774
    %v1780 = vmax.f32 %v1779, 0.0
    %v1781 = vpack.c.bf16 %v1780, %v1780
    %v1782 = vld [vmem:[#allocation14] sm:$0xff]
    %v1783 = vld [vmem:[#allocation14 + $0x8] sm:$0xf]
    %v1784 = vld [vmem:[#allocation14 + $0xc] sm:$0xff]
    %v1785 = vld [vmem:[#allocation14 + $0x14] sm:$0xf]
    %v1786 = vld [vmem:[#allocation14 + $0x18] sm:$0xff]
    %v1787 = vld [vmem:[#allocation14 + $0x20] sm:$0xf]
    %v1788 = vld [vmem:[#allocation14 + $0x24] sm:$0xff]
    %v1789 = vld [vmem:[#allocation14 + $0x2c] sm:$0xf]
    %v1790 = vld [vmem:[#allocation14 + $0x30] sm:$0xff]
    %v1791 = vld [vmem:[#allocation14 + $0x38] sm:$0xf]
    %v1792 = vld [vmem:[#allocation14 + $0x3c] sm:$0xff]
    %v1793 = vld [vmem:[#allocation14 + $0x44] sm:$0xf]
    %v1794 = vld [vmem:[#allocation14 + $0x48] sm:$0xff]
    %v1795 = vld [vmem:[#allocation14 + $0x50] sm:$0xf]
    %v1796 = vld [vmem:[#allocation14 + $0x54] sm:$0xff]
    %v1797 = vld [vmem:[#allocation14 + $0x5c] sm:$0xf]
    %v1798 = vld [vmem:[#allocation14 + $0x60] sm:$0xff]
    %v1799 = vld [vmem:[#allocation14 + $0x68] sm:$0xf]
    %v1800 = vld [vmem:[#allocation14 + $0x6c] sm:$0xff]
    %v1801 = vld [vmem:[#allocation14 + $0x74] sm:$0xf]
    %v1802 = vld [vmem:[#allocation14 + $0x78] sm:$0xff]
    %v1803 = vld [vmem:[#allocation14 + $0x80] sm:$0xf]
    %v1804 = vld [vmem:[#allocation14 + $0x84] sm:$0xff]
    %v1805 = vld [vmem:[#allocation14 + $0x8c] sm:$0xf]
    %v1806 = vld [vmem:[#allocation14 + $0x90] sm:$0xff]
    %v1807 = vld [vmem:[#allocation14 + $0x98] sm:$0xf]
    %v1808 = vld [vmem:[#allocation14 + $0x9c] sm:$0xff]
    %v1809 = vld [vmem:[#allocation14 + $0xa4] sm:$0xf]
    %v1810 = vld [vmem:[#allocation14 + $0xa8] sm:$0xff]
    %v1811 = vld [vmem:[#allocation14 + $0xb0] sm:$0xf]
    %v1812 = vld [vmem:[#allocation14 + $0xb4] sm:$0xff]
    %v1813 = vld [vmem:[#allocation14 + $0xbc] sm:$0xf]
    %v1814 = vld [vmem:[%s10] sm:$0x7]
    %v1847 = vunpack.c.l.b16 %v1782
    %v1848 = vunpack.c.h.b16 %v1782
    %v1849 = vunpack.c.l.b16 %v1783
    %v1850 = vunpack.c.l.b16 %v1784
    %v1851 = vunpack.c.h.b16 %v1784
    %v1852 = vunpack.c.l.b16 %v1785
    %v1853 = vunpack.c.l.b16 %v1786
    %v1854 = vunpack.c.h.b16 %v1786
    %v1855 = vunpack.c.l.b16 %v1787
    %v1856 = vunpack.c.l.b16 %v1788
    %v1857 = vunpack.c.h.b16 %v1788
    %v1858 = vunpack.c.l.b16 %v1789
    %v1859 = vunpack.c.l.b16 %v1790
    %v1860 = vunpack.c.h.b16 %v1790
    %v1861 = vunpack.c.l.b16 %v1791
    %v1862 = vunpack.c.l.b16 %v1792
    %v1863 = vunpack.c.h.b16 %v1792
    %v1864 = vunpack.c.l.b16 %v1793
    %v1865 = vunpack.c.l.b16 %v1794
    %v1866 = vunpack.c.h.b16 %v1794
    %v1867 = vunpack.c.l.b16 %v1795
    %v1868 = vunpack.c.l.b16 %v1796
    %v1869 = vunpack.c.h.b16 %v1796
    %v1870 = vunpack.c.l.b16 %v1797
    %v1871 = vunpack.c.l.b16 %v1798
    %v1872 = vunpack.c.h.b16 %v1798
    %v1873 = vunpack.c.l.b16 %v1799
    %v1874 = vunpack.c.l.b16 %v1800
    %v1875 = vunpack.c.h.b16 %v1800
    %v1876 = vunpack.c.l.b16 %v1801
    %v1877 = vunpack.c.l.b16 %v1802
    %v1878 = vunpack.c.h.b16 %v1802
    %v1879 = vunpack.c.l.b16 %v1803
    %v1880 = vunpack.c.l.b16 %v1804
    %v1881 = vunpack.c.h.b16 %v1804
    %v1882 = vunpack.c.l.b16 %v1805
    %v1883 = vunpack.c.l.b16 %v1806
    %v1884 = vunpack.c.h.b16 %v1806
    %v1885 = vunpack.c.l.b16 %v1807
    %v1886 = vunpack.c.l.b16 %v1808
    %v1887 = vunpack.c.h.b16 %v1808
    %v1888 = vunpack.c.l.b16 %v1809
    %v1889 = vunpack.c.l.b16 %v1810
    %v1890 = vunpack.c.h.b16 %v1810
    %v1891 = vunpack.c.l.b16 %v1811
    %v1892 = vunpack.c.l.b16 %v1812
    %v1893 = vunpack.c.h.b16 %v1812
    %v1894 = vunpack.c.l.b16 %v1813
    %v1895 = vpack.c.b16 %v1850, %v1847
    %v1896 = vpack.c.b16 %v1851, %v1848
    %v1897 = vpack.c.b16 %v1852, %v1849
    %v1898 = vpack.c.b16 %v1856, %v1853
    %v1899 = vpack.c.b16 %v1857, %v1854
    %v1900 = vpack.c.b16 %v1858, %v1855
    %v1901 = vpack.c.b16 %v1862, %v1859
    %v1902 = vpack.c.b16 %v1863, %v1860
    %v1903 = vpack.c.b16 %v1864, %v1861
    %v1904 = vpack.c.b16 %v1868, %v1865
    %v1905 = vpack.c.b16 %v1869, %v1866
    %v1906 = vpack.c.b16 %v1870, %v1867
    %v1907 = vpack.c.b16 %v1874, %v1871
    %v1908 = vpack.c.b16 %v1875, %v1872
    %v1909 = vpack.c.b16 %v1876, %v1873
    %v1910 = vpack.c.b16 %v1880, %v1877
    %v1911 = vpack.c.b16 %v1881, %v1878
    %v1912 = vpack.c.b16 %v1882, %v1879
    %v1913 = vpack.c.b16 %v1886, %v1883
    %v1914 = vpack.c.b16 %v1887, %v1884
    %v1915 = vpack.c.b16 %v1888, %v1885
    %v1916 = vpack.c.b16 %v1892, %v1889
    %v1917 = vpack.c.b16 %v1893, %v1890
    %v1918 = vpack.c.b16 %v1894, %v1891
    %v1944 = vlaneseq
    %v1945 = vshrl.u32 %v1944, 7
    %v1946 = vsub.s32 0, %v1945
    %v1947 = vrot.slane %v1814, %v1946
    %v1948 = vlaneseq
    %v1949 = vshrl.u32 %v1948, 7
    %v1950 = vsub.s32 1, %v1949
    %v1951 = vrot.slane %v1814, %v1950
    %v1952 = vlaneseq
    %v1953 = vshrl.u32 %v1952, 7
    %v1954 = vsub.s32 2, %v1953
    %v1955 = vrot.slane %v1814, %v1954
    %1959 = vmatprep.subr.bf16.mxu0 %v1896
    %1960 = vmatpush1.bf16.msra.mxu0 %v1895
    %1961 = vmatprep.subr.bf16.mxu0 %v1899
    %1962 = vmatpush1.bf16.msra.mxu0 %v1898
    %1963 = vmatprep.subr.bf16.mxu0 %v1902
    %1964 = vmatpush1.bf16.msra.mxu0 %v1901
    %1965 = vmatprep.subr.bf16.mxu0 %v1905
    %1966 = vmatpush1.bf16.msra.mxu0 %v1904
    %1967 = vmatprep.subr.bf16.mxu0 %v1908
    %1968 = vmatpush1.bf16.msra.mxu0 %v1907
    %1969 = vmatprep.subr.bf16.mxu0 %v1911
    %1970 = vmatpush1.bf16.msra.mxu0 %v1910
    %1971 = vmatprep.subr.bf16.mxu0 %v1914
    %1972 = vmatpush1.bf16.msra.mxu0 %v1913
    %1973 = vmatprep.subr.bf16.mxu0 %v1917
    %1974 = vmatpush1.bf16.msra.mxu0 %v1916
    %1975 = vmatprep.subr.bf16.mxu0 0
    %1976 = vmatpush1.bf16.msra.mxu0 0
    %1977 = vmatprep.subr.bf16.mxu0 0
    %1978 = vmatpush1.bf16.msra.mxu0 0
    %1979 = vmatprep.subr.bf16.mxu0 0
    %1980 = vmatpush1.bf16.msra.mxu0 0
    %1981 = vmatprep.subr.bf16.mxu0 0
    %1982 = vmatpush1.bf16.msra.mxu0 0
    %1983 = vmatprep.subr.bf16.mxu0 0
    %1984 = vmatpush1.bf16.msra.mxu0 0
    %1985 = vmatprep.subr.bf16.mxu0 0
    %1986 = vmatpush1.bf16.msra.mxu0 0
    %1987 = vmatprep.subr.bf16.mxu0 0
    %1988 = vmatpush1.bf16.msra.mxu0 0
    %1989 = vmatprep.subr.bf16.mxu0 0
    %1990 = vmatpush1.bf16.msra.mxu0 0
    %1991 = vmatprep.mubr.bf16.mxu0 0
    %1992 = vmatmul.mubr.bf16.gmra.mrb[0].mxu0 %v1781
    %v1993 = vpop.f32.mrb[0].mxu0
    %v1994 = vadd.f32 %v1947, %v1993
    %v1995 = vpop.f32.mrb[0].mxu0
    %v1996 = vadd.f32 %v1951, %v1995
    %v1997 = vpop.f32.mrb[0].mxu0
    %v1998 = vpop.f32.mrb[0].mxu0
    %1999 = vdwg.mxu0
    %2000 = vmatprep.subr.bf16.mxu0 0
    %2001 = vmatpush1.bf16.msra.mxu0 %v1897
    %2002 = vmatprep.subr.bf16.mxu0 0
    %2003 = vmatpush1.bf16.msra.mxu0 %v1900
    %2004 = vmatprep.subr.bf16.mxu0 0
    %2005 = vmatpush1.bf16.msra.mxu0 %v1903
    %2006 = vmatprep.subr.bf16.mxu0 0
    %2007 = vmatpush1.bf16.msra.mxu0 %v1906
    %2008 = vmatprep.subr.bf16.mxu0 0
    %2009 = vmatpush1.bf16.msra.mxu0 %v1909
    %2010 = vmatprep.subr.bf16.mxu0 0
    %2011 = vmatpush1.bf16.msra.mxu0 %v1912
    %2012 = vmatprep.subr.bf16.mxu0 0
    %2013 = vmatpush1.bf16.msra.mxu0 %v1915
    %2014 = vmatprep.subr.bf16.mxu0 0
    %2015 = vmatpush1.bf16.msra.mxu0 %v1918
    %2016 = vmatprep.subr.bf16.mxu0 0
    %2017 = vmatpush1.bf16.msra.mxu0 0
    %2018 = vmatprep.subr.bf16.mxu0 0
    %2019 = vmatpush1.bf16.msra.mxu0 0
    %2020 = vmatprep.subr.bf16.mxu0 0
    %2021 = vmatpush1.bf16.msra.mxu0 0
    %2022 = vmatprep.subr.bf16.mxu0 0
    %2023 = vmatpush1.bf16.msra.mxu0 0
    %2024 = vmatprep.subr.bf16.mxu0 0
    %2025 = vmatpush1.bf16.msra.mxu0 0
    %2026 = vmatprep.subr.bf16.mxu0 0
    %2027 = vmatpush1.bf16.msra.mxu0 0
    %2028 = vmatprep.subr.bf16.mxu0 0
    %2029 = vmatpush1.bf16.msra.mxu0 0
    %2030 = vmatprep.subr.bf16.mxu0 0
    %2031 = vmatpush1.bf16.msra.mxu0 0
    %2032 = vmatprep.mubr.bf16.mxu0 0
    %2033 = vmatmul.mubr.bf16.gmra.mrb[0].mxu0 %v1781
    %v2034 = vpop.f32.mrb[0].mxu0
    %v2035 = vadd.f32 %v1955, %v2034
    %v2036 = vpop.f32.mrb[0].mxu0
    %v2037 = vpop.f32.mrb[0].mxu0
    %v2038 = vpop.f32.mrb[0].mxu0
    %2039 = vdwg.mxu0
    %v2040 = vadd.f32 %v1994, %v1511
    %v2041 = vxor.u32 %v2040, 2147483648
    %v2042 = vmul.f32 %v2041, 1.442695
    %v2043 = vpow.pop %v2042
    %v2044 = vadd.f32 %v2043, 1.0
    %v2045 = vrcp.pop %v2044
    %v2046 = vmul.f32 1.0, %v2045
    %v2047 = vadd.f32 %v1996, %v1550
    %v2048 = vxor.u32 %v2047, 2147483648
    %v2049 = vmul.f32 %v2048, 1.442695
    %v2050 = vpow.pop %v2049
    %v2051 = vadd.f32 %v2050, 1.0
    %v2052 = vrcp.pop %v2051
    %v2053 = vmul.f32 1.0, %v2052
    %v2054 = vmul.f32 %v2046, %v1552
    %v2055 = vadd.f32 %v2035, %v2054
    %v2056 = vtanh.pop %v2055
    %v2057 = vsub.f32 1.0, %v2053
    %v2058 = vmul.f32 %v2057, %v2056
    %v2059 = vmul.f32 %v2053, %v1106
    %v2060 = vadd.f32 %v2058, %v2059
    %2061 = vst [vmem:[#allocation2 + $0x1] sm:$0x1] %v2060
    %v2062 = vld [vmem:[#allocation3 + $0x2] sm:$0x1]
    %v2063 = vpack.c.bf16 %v2062, %v2062
    %v2064 = vld [vmem:[#allocation9] sm:$0xff]
    %v2065 = vld [vmem:[#allocation9 + $0x8] sm:$0xff]
    %v2066 = vld [vmem:[#allocation9 + $0x10] sm:$0xff]
    %v2067 = vld [vmem:[#allocation9 + $0x18] sm:$0xff]
    %v2068 = vld [vmem:[#allocation9 + $0x20] sm:$0xff]
    %v2069 = vld [vmem:[#allocation9 + $0x28] sm:$0xff]
    %v2070 = vld [vmem:[#allocation9 + $0x30] sm:$0xff]
    %v2071 = vld [vmem:[#allocation9 + $0x38] sm:$0xff]
    %v2072 = vld [vmem:[#allocation9 + $0x40] sm:$0xff]
    %v2073 = vld [vmem:[#allocation9 + $0x48] sm:$0xff]
    %v2074 = vld [vmem:[#allocation9 + $0x50] sm:$0xff]
    %v2075 = vld [vmem:[#allocation9 + $0x58] sm:$0xff]
    %v2076 = vld [vmem:[#allocation9 + $0x60] sm:$0xff]
    %v2077 = vld [vmem:[#allocation9 + $0x68] sm:$0xff]
    %v2078 = vld [vmem:[#allocation9 + $0x70] sm:$0xff]
    %v2079 = vld [vmem:[#allocation9 + $0x78] sm:$0xff]
    %v2080 = vld [vmem:[%s8] sm:$0x3]
    %v2097 = vunpack.c.l.b16 %v2064
    %v2098 = vunpack.c.h.b16 %v2064
    %v2099 = vunpack.c.l.b16 %v2065
    %v2100 = vunpack.c.h.b16 %v2065
    %v2101 = vunpack.c.l.b16 %v2066
    %v2102 = vunpack.c.h.b16 %v2066
    %v2103 = vunpack.c.l.b16 %v2067
    %v2104 = vunpack.c.h.b16 %v2067
    %v2105 = vunpack.c.l.b16 %v2068
    %v2106 = vunpack.c.h.b16 %v2068
    %v2107 = vunpack.c.l.b16 %v2069
    %v2108 = vunpack.c.h.b16 %v2069
    %v2109 = vunpack.c.l.b16 %v2070
    %v2110 = vunpack.c.h.b16 %v2070
    %v2111 = vunpack.c.l.b16 %v2071
    %v2112 = vunpack.c.h.b16 %v2071
    %v2113 = vunpack.c.l.b16 %v2072
    %v2114 = vunpack.c.h.b16 %v2072
    %v2115 = vunpack.c.l.b16 %v2073
    %v2116 = vunpack.c.h.b16 %v2073
    %v2117 = vunpack.c.l.b16 %v2074
    %v2118 = vunpack.c.h.b16 %v2074
    %v2119 = vunpack.c.l.b16 %v2075
    %v2120 = vunpack.c.h.b16 %v2075
    %v2121 = vunpack.c.l.b16 %v2076
    %v2122 = vunpack.c.h.b16 %v2076
    %v2123 = vunpack.c.l.b16 %v2077
    %v2124 = vunpack.c.h.b16 %v2077
    %v2125 = vunpack.c.l.b16 %v2078
    %v2126 = vunpack.c.h.b16 %v2078
    %v2127 = vunpack.c.l.b16 %v2079
    %v2128 = vunpack.c.h.b16 %v2079
    %v2129 = vpack.c.b16 %v2099, %v2097
    %v2130 = vpack.c.b16 %v2100, %v2098
    %v2131 = vpack.c.b16 %v2103, %v2101
    %v2132 = vpack.c.b16 %v2104, %v2102
    %v2133 = vpack.c.b16 %v2107, %v2105
    %v2134 = vpack.c.b16 %v2108, %v2106
    %v2135 = vpack.c.b16 %v2111, %v2109
    %v2136 = vpack.c.b16 %v2112, %v2110
    %v2137 = vpack.c.b16 %v2115, %v2113
    %v2138 = vpack.c.b16 %v2116, %v2114
    %v2139 = vpack.c.b16 %v2119, %v2117
    %v2140 = vpack.c.b16 %v2120, %v2118
    %v2141 = vpack.c.b16 %v2123, %v2121
    %v2142 = vpack.c.b16 %v2124, %v2122
    %v2143 = vpack.c.b16 %v2127, %v2125
    %v2144 = vpack.c.b16 %v2128, %v2126
    %v2162 = vlaneseq
    %v2163 = vshrl.u32 %v2162, 7
    %v2164 = vsub.s32 0, %v2163
    %v2165 = vrot.slane %v2080, %v2164
    %v2166 = vlaneseq
    %v2167 = vshrl.u32 %v2166, 7
    %v2168 = vsub.s32 1, %v2167
    %v2169 = vrot.slane %v2080, %v2168
    %2172 = vmatprep.subr.bf16.mxu0 %v2130
    %2173 = vmatpush1.bf16.msra.mxu0 %v2129
    %2174 = vmatprep.subr.bf16.mxu0 %v2132
    %2175 = vmatpush1.bf16.msra.mxu0 %v2131
    %2176 = vmatprep.subr.bf16.mxu0 %v2134
    %2177 = vmatpush1.bf16.msra.mxu0 %v2133
    %2178 = vmatprep.subr.bf16.mxu0 %v2136
    %2179 = vmatpush1.bf16.msra.mxu0 %v2135
    %2180 = vmatprep.subr.bf16.mxu0 %v2138
    %2181 = vmatpush1.bf16.msra.mxu0 %v2137
    %2182 = vmatprep.subr.bf16.mxu0 %v2140
    %2183 = vmatpush1.bf16.msra.mxu0 %v2139
    %2184 = vmatprep.subr.bf16.mxu0 %v2142
    %2185 = vmatpush1.bf16.msra.mxu0 %v2141
    %2186 = vmatprep.subr.bf16.mxu0 %v2144
    %2187 = vmatpush1.bf16.msra.mxu0 %v2143
    %2188 = vmatprep.subr.bf16.mxu0 0
    %2189 = vmatpush1.bf16.msra.mxu0 0
    %2190 = vmatprep.subr.bf16.mxu0 0
    %2191 = vmatpush1.bf16.msra.mxu0 0
    %2192 = vmatprep.subr.bf16.mxu0 0
    %2193 = vmatpush1.bf16.msra.mxu0 0
    %2194 = vmatprep.subr.bf16.mxu0 0
    %2195 = vmatpush1.bf16.msra.mxu0 0
    %2196 = vmatprep.subr.bf16.mxu0 0
    %2197 = vmatpush1.bf16.msra.mxu0 0
    %2198 = vmatprep.subr.bf16.mxu0 0
    %2199 = vmatpush1.bf16.msra.mxu0 0
    %2200 = vmatprep.subr.bf16.mxu0 0
    %2201 = vmatpush1.bf16.msra.mxu0 0
    %2202 = vmatprep.subr.bf16.mxu0 0
    %2203 = vmatpush1.bf16.msra.mxu0 0
    %2204 = vmatprep.mubr.bf16.mxu0 0
    %2205 = vmatmul.mubr.bf16.gmra.mrb[0].mxu0 %v2063
    %v2206 = vpop.f32.mrb[0].mxu0
    %v2207 = vadd.f32 %v2165, %v2206
    %v2208 = vpop.f32.mrb[0].mxu0
    %v2209 = vadd.f32 %v2169, %v2208
    %v2210 = vpop.f32.mrb[0].mxu0
    %v2211 = vpop.f32.mrb[0].mxu0
    %2212 = vdwg.mxu0
    %v2213 = vpack.c.bf16 %v2060, %v2060
    %v2214 = vld [vmem:[#allocation11] sm:$0xff]
    %v2215 = vld [vmem:[#allocation11 + $0x8] sm:$0xff]
    %v2216 = vld [vmem:[#allocation11 + $0x10] sm:$0xff]
    %v2217 = vld [vmem:[#allocation11 + $0x18] sm:$0xff]
    %v2218 = vld [vmem:[#allocation11 + $0x20] sm:$0xff]
    %v2219 = vld [vmem:[#allocation11 + $0x28] sm:$0xff]
    %v2220 = vld [vmem:[#allocation11 + $0x30] sm:$0xff]
    %v2221 = vld [vmem:[#allocation11 + $0x38] sm:$0xff]
    %v2222 = vld [vmem:[#allocation11 + $0x40] sm:$0xff]
    %v2223 = vld [vmem:[#allocation11 + $0x48] sm:$0xff]
    %v2224 = vld [vmem:[#allocation11 + $0x50] sm:$0xff]
    %v2225 = vld [vmem:[#allocation11 + $0x58] sm:$0xff]
    %v2226 = vld [vmem:[#allocation11 + $0x60] sm:$0xff]
    %v2227 = vld [vmem:[#allocation11 + $0x68] sm:$0xff]
    %v2228 = vld [vmem:[#allocation11 + $0x70] sm:$0xff]
    %v2229 = vld [vmem:[#allocation11 + $0x78] sm:$0xff]
    %v2230 = vld [vmem:[#allocation11 + $0x80] sm:$0xff]
    %v2231 = vld [vmem:[#allocation11 + $0x88] sm:$0xff]
    %v2232 = vld [vmem:[#allocation11 + $0x90] sm:$0xff]
    %v2233 = vld [vmem:[#allocation11 + $0x98] sm:$0xff]
    %v2234 = vld [vmem:[#allocation11 + $0xa0] sm:$0xff]
    %v2235 = vld [vmem:[#allocation11 + $0xa8] sm:$0xff]
    %v2236 = vld [vmem:[#allocation11 + $0xb0] sm:$0xff]
    %v2237 = vld [vmem:[#allocation11 + $0xb8] sm:$0xff]
    %v2238 = vld [vmem:[#allocation11 + $0xc0] sm:$0xff]
    %v2239 = vld [vmem:[#allocation11 + $0xc8] sm:$0xff]
    %v2240 = vld [vmem:[#allocation11 + $0xd0] sm:$0xff]
    %v2241 = vld [vmem:[#allocation11 + $0xd8] sm:$0xff]
    %v2242 = vld [vmem:[#allocation11 + $0xe0] sm:$0xff]
    %v2243 = vld [vmem:[#allocation11 + $0xe8] sm:$0xff]
    %v2244 = vld [vmem:[#allocation11 + $0xf0] sm:$0xff]
    %v2245 = vld [vmem:[#allocation11 + $0xf8] sm:$0xff]
    %v2246 = vld [vmem:[%s9] sm:$0xf]
    %v2279 = vunpack.c.l.b16 %v2214
    %v2280 = vunpack.c.h.b16 %v2214
    %v2281 = vunpack.c.l.b16 %v2215
    %v2282 = vunpack.c.h.b16 %v2215
    %v2283 = vunpack.c.l.b16 %v2216
    %v2284 = vunpack.c.h.b16 %v2216
    %v2285 = vunpack.c.l.b16 %v2217
    %v2286 = vunpack.c.h.b16 %v2217
    %v2287 = vunpack.c.l.b16 %v2218
    %v2288 = vunpack.c.h.b16 %v2218
    %v2289 = vunpack.c.l.b16 %v2219
    %v2290 = vunpack.c.h.b16 %v2219
    %v2291 = vunpack.c.l.b16 %v2220
    %v2292 = vunpack.c.h.b16 %v2220
    %v2293 = vunpack.c.l.b16 %v2221
    %v2294 = vunpack.c.h.b16 %v2221
    %v2295 = vunpack.c.l.b16 %v2222
    %v2296 = vunpack.c.h.b16 %v2222
    %v2297 = vunpack.c.l.b16 %v2223
    %v2298 = vunpack.c.h.b16 %v2223
    %v2299 = vunpack.c.l.b16 %v2224
    %v2300 = vunpack.c.h.b16 %v2224
    %v2301 = vunpack.c.l.b16 %v2225
    %v2302 = vunpack.c.h.b16 %v2225
    %v2303 = vunpack.c.l.b16 %v2226
    %v2304 = vunpack.c.h.b16 %v2226
    %v2305 = vunpack.c.l.b16 %v2227
    %v2306 = vunpack.c.h.b16 %v2227
    %v2307 = vunpack.c.l.b16 %v2228
    %v2308 = vunpack.c.h.b16 %v2228
    %v2309 = vunpack.c.l.b16 %v2229
    %v2310 = vunpack.c.h.b16 %v2229
    %v2311 = vunpack.c.l.b16 %v2230
    %v2312 = vunpack.c.h.b16 %v2230
    %v2313 = vunpack.c.l.b16 %v2231
    %v2314 = vunpack.c.h.b16 %v2231
    %v2315 = vunpack.c.l.b16 %v2232
    %v2316 = vunpack.c.h.b16 %v2232
    %v2317 = vunpack.c.l.b16 %v2233
    %v2318 = vunpack.c.h.b16 %v2233
    %v2319 = vunpack.c.l.b16 %v2234
    %v2320 = vunpack.c.h.b16 %v2234
    %v2321 = vunpack.c.l.b16 %v2235
    %v2322 = vunpack.c.h.b16 %v2235
    %v2323 = vunpack.c.l.b16 %v2236
    %v2324 = vunpack.c.h.b16 %v2236
    %v2325 = vunpack.c.l.b16 %v2237
    %v2326 = vunpack.c.h.b16 %v2237
    %v2327 = vunpack.c.l.b16 %v2238
    %v2328 = vunpack.c.h.b16 %v2238
    %v2329 = vunpack.c.l.b16 %v2239
    %v2330 = vunpack.c.h.b16 %v2239
    %v2331 = vunpack.c.l.b16 %v2240
    %v2332 = vunpack.c.h.b16 %v2240
    %v2333 = vunpack.c.l.b16 %v2241
    %v2334 = vunpack.c.h.b16 %v2241
    %v2335 = vunpack.c.l.b16 %v2242
    %v2336 = vunpack.c.h.b16 %v2242
    %v2337 = vunpack.c.l.b16 %v2243
    %v2338 = vunpack.c.h.b16 %v2243
    %v2339 = vunpack.c.l.b16 %v2244
    %v2340 = vunpack.c.h.b16 %v2244
    %v2341 = vunpack.c.l.b16 %v2245
    %v2342 = vunpack.c.h.b16 %v2245
    %v2343 = vpack.c.b16 %v2283, %v2279
    %v2344 = vpack.c.b16 %v2284, %v2280
    %v2345 = vpack.c.b16 %v2285, %v2281
    %v2346 = vpack.c.b16 %v2286, %v2282
    %v2347 = vpack.c.b16 %v2291, %v2287
    %v2348 = vpack.c.b16 %v2292, %v2288
    %v2349 = vpack.c.b16 %v2293, %v2289
    %v2350 = vpack.c.b16 %v2294, %v2290
    %v2351 = vpack.c.b16 %v2299, %v2295
    %v2352 = vpack.c.b16 %v2300, %v2296
    %v2353 = vpack.c.b16 %v2301, %v2297
    %v2354 = vpack.c.b16 %v2302, %v2298
    %v2355 = vpack.c.b16 %v2307, %v2303
    %v2356 = vpack.c.b16 %v2308, %v2304
    %v2357 = vpack.c.b16 %v2309, %v2305
    %v2358 = vpack.c.b16 %v2310, %v2306
    %v2359 = vpack.c.b16 %v2315, %v2311
    %v2360 = vpack.c.b16 %v2316, %v2312
    %v2361 = vpack.c.b16 %v2317, %v2313
    %v2362 = vpack.c.b16 %v2318, %v2314
    %v2363 = vpack.c.b16 %v2323, %v2319
    %v2364 = vpack.c.b16 %v2324, %v2320
    %v2365 = vpack.c.b16 %v2325, %v2321
    %v2366 = vpack.c.b16 %v2326, %v2322
    %v2367 = vpack.c.b16 %v2331, %v2327
    %v2368 = vpack.c.b16 %v2332, %v2328
    %v2369 = vpack.c.b16 %v2333, %v2329
    %v2370 = vpack.c.b16 %v2334, %v2330
    %v2371 = vpack.c.b16 %v2339, %v2335
    %v2372 = vpack.c.b16 %v2340, %v2336
    %v2373 = vpack.c.b16 %v2341, %v2337
    %v2374 = vpack.c.b16 %v2342, %v2338
    %v2408 = vlaneseq
    %v2409 = vshrl.u32 %v2408, 7
    %v2410 = vsub.s32 0, %v2409
    %v2411 = vrot.slane %v2246, %v2410
    %v2412 = vlaneseq
    %v2413 = vshrl.u32 %v2412, 7
    %v2414 = vsub.s32 1, %v2413
    %v2415 = vrot.slane %v2246, %v2414
    %v2416 = vlaneseq
    %v2417 = vshrl.u32 %v2416, 7
    %v2418 = vsub.s32 2, %v2417
    %v2419 = vrot.slane %v2246, %v2418
    %v2420 = vlaneseq
    %v2421 = vshrl.u32 %v2420, 7
    %v2422 = vsub.s32 3, %v2421
    %v2423 = vrot.slane %v2246, %v2422
    %2428 = vmatprep.subr.bf16.mxu0 %v2344
    %2429 = vmatpush1.bf16.msra.mxu0 %v2343
    %2430 = vmatprep.subr.bf16.mxu0 %v2348
    %2431 = vmatpush1.bf16.msra.mxu0 %v2347
    %2432 = vmatprep.subr.bf16.mxu0 %v2352
    %2433 = vmatpush1.bf16.msra.mxu0 %v2351
    %2434 = vmatprep.subr.bf16.mxu0 %v2356
    %2435 = vmatpush1.bf16.msra.mxu0 %v2355
    %2436 = vmatprep.subr.bf16.mxu0 %v2360
    %2437 = vmatpush1.bf16.msra.mxu0 %v2359
    %2438 = vmatprep.subr.bf16.mxu0 %v2364
    %2439 = vmatpush1.bf16.msra.mxu0 %v2363
    %2440 = vmatprep.subr.bf16.mxu0 %v2368
    %2441 = vmatpush1.bf16.msra.mxu0 %v2367
    %2442 = vmatprep.subr.bf16.mxu0 %v2372
    %2443 = vmatpush1.bf16.msra.mxu0 %v2371
    %2444 = vmatprep.subr.bf16.mxu0 0
    %2445 = vmatpush1.bf16.msra.mxu0 0
    %2446 = vmatprep.subr.bf16.mxu0 0
    %2447 = vmatpush1.bf16.msra.mxu0 0
    %2448 = vmatprep.subr.bf16.mxu0 0
    %2449 = vmatpush1.bf16.msra.mxu0 0
    %2450 = vmatprep.subr.bf16.mxu0 0
    %2451 = vmatpush1.bf16.msra.mxu0 0
    %2452 = vmatprep.subr.bf16.mxu0 0
    %2453 = vmatpush1.bf16.msra.mxu0 0
    %2454 = vmatprep.subr.bf16.mxu0 0
    %2455 = vmatpush1.bf16.msra.mxu0 0
    %2456 = vmatprep.subr.bf16.mxu0 0
    %2457 = vmatpush1.bf16.msra.mxu0 0
    %2458 = vmatprep.subr.bf16.mxu0 0
    %2459 = vmatpush1.bf16.msra.mxu0 0
    %2460 = vmatprep.mubr.bf16.mxu0 0
    %2461 = vmatmul.mubr.bf16.gmra.mrb[0].mxu0 %v2213
    %v2462 = vpop.f32.mrb[0].mxu0
    %v2463 = vadd.f32 %v2411, %v2462
    %v2464 = vpop.f32.mrb[0].mxu0
    %v2465 = vadd.f32 %v2415, %v2464
    %v2466 = vpop.f32.mrb[0].mxu0
    %v2467 = vpop.f32.mrb[0].mxu0
    %2468 = vdwg.mxu0
    %2469 = vmatprep.subr.bf16.mxu0 %v2346
    %2470 = vmatpush1.bf16.msra.mxu0 %v2345
    %2471 = vmatprep.subr.bf16.mxu0 %v2350
    %2472 = vmatpush1.bf16.msra.mxu0 %v2349
    %2473 = vmatprep.subr.bf16.mxu0 %v2354
    %2474 = vmatpush1.bf16.msra.mxu0 %v2353
    %2475 = vmatprep.subr.bf16.mxu0 %v2358
    %2476 = vmatpush1.bf16.msra.mxu0 %v2357
    %2477 = vmatprep.subr.bf16.mxu0 %v2362
    %2478 = vmatpush1.bf16.msra.mxu0 %v2361
    %2479 = vmatprep.subr.bf16.mxu0 %v2366
    %2480 = vmatpush1.bf16.msra.mxu0 %v2365
    %2481 = vmatprep.subr.bf16.mxu0 %v2370
    %2482 = vmatpush1.bf16.msra.mxu0 %v2369
    %2483 = vmatprep.subr.bf16.mxu0 %v2374
    %2484 = vmatpush1.bf16.msra.mxu0 %v2373
    %2485 = vmatprep.subr.bf16.mxu0 0
    %2486 = vmatpush1.bf16.msra.mxu0 0
    %2487 = vmatprep.subr.bf16.mxu0 0
    %2488 = vmatpush1.bf16.msra.mxu0 0
    %2489 = vmatprep.subr.bf16.mxu0 0
    %2490 = vmatpush1.bf16.msra.mxu0 0
    %2491 = vmatprep.subr.bf16.mxu0 0
    %2492 = vmatpush1.bf16.msra.mxu0 0
    %2493 = vmatprep.subr.bf16.mxu0 0
    %2494 = vmatpush1.bf16.msra.mxu0 0
    %2495 = vmatprep.subr.bf16.mxu0 0
    %2496 = vmatpush1.bf16.msra.mxu0 0
    %2497 = vmatprep.subr.bf16.mxu0 0
    %2498 = vmatpush1.bf16.msra.mxu0 0
    %2499 = vmatprep.subr.bf16.mxu0 0
    %2500 = vmatpush1.bf16.msra.mxu0 0
    %2501 = vmatprep.mubr.bf16.mxu0 0
    %2502 = vmatmul.mubr.bf16.gmra.mrb[0].mxu0 %v2213
    %v2503 = vpop.f32.mrb[0].mxu0
    %v2504 = vadd.f32 %v2419, %v2503
    %v2505 = vpop.f32.mrb[0].mxu0
    %v2506 = vadd.f32 %v2423, %v2505
    %v2507 = vpop.f32.mrb[0].mxu0
    %v2508 = vpop.f32.mrb[0].mxu0
    %2509 = vdwg.mxu0
    %v2510 = vadd.f32 %v2207, %v2463
    %v2511 = vsel %vm602, %v2510, -inf
    %2512 = vmax.xlane.f32.xlu0 %v2511
    %v2513 = vpop.xlane.xlu0 %2512
    %v2514 = vsub.f32 %v2510, %v2513
    %v2515 = vmul.f32 %v2514, 1.442695
    %v2516 = vpow.pop %v2515
    %v2517 = vsel %vm602, %v2516, 0.0
    %2518 = vadd.xlane.f32.xlu0 %v2517
    %v2519 = vpop.xlane.xlu0 %2518
    %v2520 = vrcp.pop %v2519
    %v2521 = vmul.f32 %v2516, %v2520
    %2522 = vst [vmem:[#allocation17 + $0x2] sm:$0x1] %v2521
    %v2523 = vpack.c.bf16 %v2521, %v2521
    %v2524 = vld [vmem:[#allocation8] sm:$0xf]
    %v2525 = vld [vmem:[#allocation8 + $0x4] sm:$0xf]
    %v2526 = vld [vmem:[#allocation8 + $0x8] sm:$0xf]
    %v2527 = vld [vmem:[#allocation8 + $0xc] sm:$0xf]
    %v2528 = vld [vmem:[#allocation8 + $0x10] sm:$0xf]
    %v2529 = vld [vmem:[#allocation8 + $0x14] sm:$0xf]
    %v2530 = vld [vmem:[#allocation8 + $0x18] sm:$0xf]
    %v2531 = vld [vmem:[#allocation8 + $0x1c] sm:$0xf]
    %v2532 = vld [vmem:[#allocation8 + $0x20] sm:$0xf]
    %v2533 = vld [vmem:[#allocation8 + $0x24] sm:$0xf]
    %v2534 = vld [vmem:[#allocation8 + $0x28] sm:$0xf]
    %v2535 = vld [vmem:[#allocation8 + $0x2c] sm:$0xf]
    %v2536 = vld [vmem:[#allocation8 + $0x30] sm:$0xf]
    %v2537 = vld [vmem:[#allocation8 + $0x34] sm:$0xf]
    %v2538 = vld [vmem:[#allocation8 + $0x38] sm:$0xf]
    %v2539 = vld [vmem:[#allocation8 + $0x3c] sm:$0xf]
    %v2556 = vunpack.c.l.b16 %v2524
    %v2557 = vunpack.c.l.b16 %v2525
    %v2558 = vunpack.c.l.b16 %v2526
    %v2559 = vunpack.c.l.b16 %v2527
    %v2560 = vunpack.c.l.b16 %v2528
    %v2561 = vunpack.c.l.b16 %v2529
    %v2562 = vunpack.c.l.b16 %v2530
    %v2563 = vunpack.c.l.b16 %v2531
    %v2564 = vunpack.c.l.b16 %v2532
    %v2565 = vunpack.c.l.b16 %v2533
    %v2566 = vunpack.c.l.b16 %v2534
    %v2567 = vunpack.c.l.b16 %v2535
    %v2568 = vunpack.c.l.b16 %v2536
    %v2569 = vunpack.c.l.b16 %v2537
    %v2570 = vunpack.c.l.b16 %v2538
    %v2571 = vunpack.c.l.b16 %v2539
    %v2572 = vpack.c.b16 %v2557, %v2556
    %v2573 = vpack.c.b16 %v2559, %v2558
    %v2574 = vpack.c.b16 %v2561, %v2560
    %v2575 = vpack.c.b16 %v2563, %v2562
    %v2576 = vpack.c.b16 %v2565, %v2564
    %v2577 = vpack.c.b16 %v2567, %v2566
    %v2578 = vpack.c.b16 %v2569, %v2568
    %v2579 = vpack.c.b16 %v2571, %v2570
    %2588 = vmatprep.subr.bf16.mxu0 0
    %2589 = vmatpush1.bf16.msra.mxu0 %v2572
    %2590 = vmatprep.subr.bf16.mxu0 0
    %2591 = vmatpush1.bf16.msra.mxu0 %v2573
    %2592 = vmatprep.subr.bf16.mxu0 0
    %2593 = vmatpush1.bf16.msra.mxu0 %v2574
    %2594 = vmatprep.subr.bf16.mxu0 0
    %2595 = vmatpush1.bf16.msra.mxu0 %v2575
    %2596 = vmatprep.subr.bf16.mxu0 0
    %2597 = vmatpush1.bf16.msra.mxu0 %v2576
    %2598 = vmatprep.subr.bf16.mxu0 0
    %2599 = vmatpush1.bf16.msra.mxu0 %v2577
    %2600 = vmatprep.subr.bf16.mxu0 0
    %2601 = vmatpush1.bf16.msra.mxu0 %v2578
    %2602 = vmatprep.subr.bf16.mxu0 0
    %2603 = vmatpush1.bf16.msra.mxu0 %v2579
    %2604 = vmatprep.subr.bf16.mxu0 0
    %2605 = vmatpush1.bf16.msra.mxu0 0
    %2606 = vmatprep.subr.bf16.mxu0 0
    %2607 = vmatpush1.bf16.msra.mxu0 0
    %2608 = vmatprep.subr.bf16.mxu0 0
    %2609 = vmatpush1.bf16.msra.mxu0 0
    %2610 = vmatprep.subr.bf16.mxu0 0
    %2611 = vmatpush1.bf16.msra.mxu0 0
    %2612 = vmatprep.subr.bf16.mxu0 0
    %2613 = vmatpush1.bf16.msra.mxu0 0
    %2614 = vmatprep.subr.bf16.mxu0 0
    %2615 = vmatpush1.bf16.msra.mxu0 0
    %2616 = vmatprep.subr.bf16.mxu0 0
    %2617 = vmatpush1.bf16.msra.mxu0 0
    %2618 = vmatprep.subr.bf16.mxu0 0
    %2619 = vmatpush1.bf16.msra.mxu0 0
    %2620 = vmatprep.mubr.bf16.mxu0 0
    %2621 = vmatmul.mubr.bf16.gmra.mrb[0].mxu0 %v2523
    %v2622 = vpop.f32.mrb[0].mxu0
    %v2623 = vadd.f32 0.0, %v2622
    %v2624 = vpop.f32.mrb[0].mxu0
    %v2625 = vpop.f32.mrb[0].mxu0
    %v2626 = vpop.f32.mrb[0].mxu0
    %2627 = vdwg.mxu0
    %v2628 = vpack.c.bf16 %v2623, %v2623
    %v2629 = vld [vmem:[#allocation12] sm:$0xf]
    %v2630 = vld [vmem:[#allocation12 + $0x4] sm:$0xf]
    %v2631 = vld [vmem:[#allocation12 + $0x8] sm:$0xf]
    %v2632 = vld [vmem:[#allocation12 + $0xc] sm:$0xf]
    %v2633 = vld [vmem:[#allocation12 + $0x10] sm:$0xf]
    %v2634 = vld [vmem:[#allocation12 + $0x14] sm:$0xf]
    %v2635 = vld [vmem:[#allocation12 + $0x18] sm:$0xf]
    %v2636 = vld [vmem:[#allocation12 + $0x1c] sm:$0xf]
    %v2637 = vld [vmem:[#allocation12 + $0x20] sm:$0xf]
    %v2638 = vld [vmem:[#allocation12 + $0x24] sm:$0xf]
    %v2639 = vld [vmem:[#allocation12 + $0x28] sm:$0xf]
    %v2640 = vld [vmem:[#allocation12 + $0x2c] sm:$0xf]
    %v2641 = vld [vmem:[#allocation12 + $0x30] sm:$0xf]
    %v2642 = vld [vmem:[#allocation12 + $0x34] sm:$0xf]
    %v2643 = vld [vmem:[#allocation12 + $0x38] sm:$0xf]
    %v2644 = vld [vmem:[#allocation12 + $0x3c] sm:$0xf]
    %v2661 = vunpack.c.l.b16 %v2629
    %v2662 = vunpack.c.l.b16 %v2630
    %v2663 = vunpack.c.l.b16 %v2631
    %v2664 = vunpack.c.l.b16 %v2632
    %v2665 = vunpack.c.l.b16 %v2633
    %v2666 = vunpack.c.l.b16 %v2634
    %v2667 = vunpack.c.l.b16 %v2635
    %v2668 = vunpack.c.l.b16 %v2636
    %v2669 = vunpack.c.l.b16 %v2637
    %v2670 = vunpack.c.l.b16 %v2638
    %v2671 = vunpack.c.l.b16 %v2639
    %v2672 = vunpack.c.l.b16 %v2640
    %v2673 = vunpack.c.l.b16 %v2641
    %v2674 = vunpack.c.l.b16 %v2642
    %v2675 = vunpack.c.l.b16 %v2643
    %v2676 = vunpack.c.l.b16 %v2644
    %v2677 = vpack.c.b16 %v2662, %v2661
    %v2678 = vpack.c.b16 %v2664, %v2663
    %v2679 = vpack.c.b16 %v2666, %v2665
    %v2680 = vpack.c.b16 %v2668, %v2667
    %v2681 = vpack.c.b16 %v2670, %v2669
    %v2682 = vpack.c.b16 %v2672, %v2671
    %v2683 = vpack.c.b16 %v2674, %v2673
    %v2684 = vpack.c.b16 %v2676, %v2675
    %2693 = vmatprep.subr.bf16.mxu0 0
    %2694 = vmatpush1.bf16.msra.mxu0 %v2677
    %2695 = vmatprep.subr.bf16.mxu0 0
    %2696 = vmatpush1.bf16.msra.mxu0 %v2678
    %2697 = vmatprep.subr.bf16.mxu0 0
    %2698 = vmatpush1.bf16.msra.mxu0 %v2679
    %2699 = vmatprep.subr.bf16.mxu0 0
    %2700 = vmatpush1.bf16.msra.mxu0 %v2680
    %2701 = vmatprep.subr.bf16.mxu0 0
    %2702 = vmatpush1.bf16.msra.mxu0 %v2681
    %2703 = vmatprep.subr.bf16.mxu0 0
    %2704 = vmatpush1.bf16.msra.mxu0 %v2682
    %2705 = vmatprep.subr.bf16.mxu0 0
    %2706 = vmatpush1.bf16.msra.mxu0 %v2683
    %2707 = vmatprep.subr.bf16.mxu0 0
    %2708 = vmatpush1.bf16.msra.mxu0 %v2684
    %2709 = vmatprep.subr.bf16.mxu0 0
    %2710 = vmatpush1.bf16.msra.mxu0 0
    %2711 = vmatprep.subr.bf16.mxu0 0
    %2712 = vmatpush1.bf16.msra.mxu0 0
    %2713 = vmatprep.subr.bf16.mxu0 0
    %2714 = vmatpush1.bf16.msra.mxu0 0
    %2715 = vmatprep.subr.bf16.mxu0 0
    %2716 = vmatpush1.bf16.msra.mxu0 0
    %2717 = vmatprep.subr.bf16.mxu0 0
    %2718 = vmatpush1.bf16.msra.mxu0 0
    %2719 = vmatprep.subr.bf16.mxu0 0
    %2720 = vmatpush1.bf16.msra.mxu0 0
    %2721 = vmatprep.subr.bf16.mxu0 0
    %2722 = vmatpush1.bf16.msra.mxu0 0
    %2723 = vmatprep.subr.bf16.mxu0 0
    %2724 = vmatpush1.bf16.msra.mxu0 0
    %2725 = vmatprep.mubr.bf16.mxu0 0
    %2726 = vmatmul.mubr.bf16.gmra.mrb[0].mxu0 %v2628
    %v2727 = vpop.f32.mrb[0].mxu0
    %v2728 = vadd.f32 0.0, %v2727
    %v2729 = vpop.f32.mrb[0].mxu0
    %v2730 = vpop.f32.mrb[0].mxu0
    %v2731 = vpop.f32.mrb[0].mxu0
    %2732 = vdwg.mxu0
    %v2733 = vadd.f32 %v2209, %v2728
    %v2734 = vmax.f32 %v2733, 0.0
    %v2735 = vpack.c.bf16 %v2734, %v2734
    %v2736 = vld [vmem:[#allocation14] sm:$0xff]
    %v2737 = vld [vmem:[#allocation14 + $0x8] sm:$0xf]
    %v2738 = vld [vmem:[#allocation14 + $0xc] sm:$0xff]
    %v2739 = vld [vmem:[#allocation14 + $0x14] sm:$0xf]
    %v2740 = vld [vmem:[#allocation14 + $0x18] sm:$0xff]
    %v2741 = vld [vmem:[#allocation14 + $0x20] sm:$0xf]
    %v2742 = vld [vmem:[#allocation14 + $0x24] sm:$0xff]
    %v2743 = vld [vmem:[#allocation14 + $0x2c] sm:$0xf]
    %v2744 = vld [vmem:[#allocation14 + $0x30] sm:$0xff]
    %v2745 = vld [vmem:[#allocation14 + $0x38] sm:$0xf]
    %v2746 = vld [vmem:[#allocation14 + $0x3c] sm:$0xff]
    %v2747 = vld [vmem:[#allocation14 + $0x44] sm:$0xf]
    %v2748 = vld [vmem:[#allocation14 + $0x48] sm:$0xff]
    %v2749 = vld [vmem:[#allocation14 + $0x50] sm:$0xf]
    %v2750 = vld [vmem:[#allocation14 + $0x54] sm:$0xff]
    %v2751 = vld [vmem:[#allocation14 + $0x5c] sm:$0xf]
    %v2752 = vld [vmem:[#allocation14 + $0x60] sm:$0xff]
    %v2753 = vld [vmem:[#allocation14 + $0x68] sm:$0xf]
    %v2754 = vld [vmem:[#allocation14 + $0x6c] sm:$0xff]
    %v2755 = vld [vmem:[#allocation14 + $0x74] sm:$0xf]
    %v2756 = vld [vmem:[#allocation14 + $0x78] sm:$0xff]
    %v2757 = vld [vmem:[#allocation14 + $0x80] sm:$0xf]
    %v2758 = vld [vmem:[#allocation14 + $0x84] sm:$0xff]
    %v2759 = vld [vmem:[#allocation14 + $0x8c] sm:$0xf]
    %v2760 = vld [vmem:[#allocation14 + $0x90] sm:$0xff]
    %v2761 = vld [vmem:[#allocation14 + $0x98] sm:$0xf]
    %v2762 = vld [vmem:[#allocation14 + $0x9c] sm:$0xff]
    %v2763 = vld [vmem:[#allocation14 + $0xa4] sm:$0xf]
    %v2764 = vld [vmem:[#allocation14 + $0xa8] sm:$0xff]
    %v2765 = vld [vmem:[#allocation14 + $0xb0] sm:$0xf]
    %v2766 = vld [vmem:[#allocation14 + $0xb4] sm:$0xff]
    %v2767 = vld [vmem:[#allocation14 + $0xbc] sm:$0xf]
    %v2768 = vld [vmem:[%s10] sm:$0x7]
    %v2801 = vunpack.c.l.b16 %v2736
    %v2802 = vunpack.c.h.b16 %v2736
    %v2803 = vunpack.c.l.b16 %v2737
    %v2804 = vunpack.c.l.b16 %v2738
    %v2805 = vunpack.c.h.b16 %v2738
    %v2806 = vunpack.c.l.b16 %v2739
    %v2807 = vunpack.c.l.b16 %v2740
    %v2808 = vunpack.c.h.b16 %v2740
    %v2809 = vunpack.c.l.b16 %v2741
    %v2810 = vunpack.c.l.b16 %v2742
    %v2811 = vunpack.c.h.b16 %v2742
    %v2812 = vunpack.c.l.b16 %v2743
    %v2813 = vunpack.c.l.b16 %v2744
    %v2814 = vunpack.c.h.b16 %v2744
    %v2815 = vunpack.c.l.b16 %v2745
    %v2816 = vunpack.c.l.b16 %v2746
    %v2817 = vunpack.c.h.b16 %v2746
    %v2818 = vunpack.c.l.b16 %v2747
    %v2819 = vunpack.c.l.b16 %v2748
    %v2820 = vunpack.c.h.b16 %v2748
    %v2821 = vunpack.c.l.b16 %v2749
    %v2822 = vunpack.c.l.b16 %v2750
    %v2823 = vunpack.c.h.b16 %v2750
    %v2824 = vunpack.c.l.b16 %v2751
    %v2825 = vunpack.c.l.b16 %v2752
    %v2826 = vunpack.c.h.b16 %v2752
    %v2827 = vunpack.c.l.b16 %v2753
    %v2828 = vunpack.c.l.b16 %v2754
    %v2829 = vunpack.c.h.b16 %v2754
    %v2830 = vunpack.c.l.b16 %v2755
    %v2831 = vunpack.c.l.b16 %v2756
    %v2832 = vunpack.c.h.b16 %v2756
    %v2833 = vunpack.c.l.b16 %v2757
    %v2834 = vunpack.c.l.b16 %v2758
    %v2835 = vunpack.c.h.b16 %v2758
    %v2836 = vunpack.c.l.b16 %v2759
    %v2837 = vunpack.c.l.b16 %v2760
    %v2838 = vunpack.c.h.b16 %v2760
    %v2839 = vunpack.c.l.b16 %v2761
    %v2840 = vunpack.c.l.b16 %v2762
    %v2841 = vunpack.c.h.b16 %v2762
    %v2842 = vunpack.c.l.b16 %v2763
    %v2843 = vunpack.c.l.b16 %v2764
    %v2844 = vunpack.c.h.b16 %v2764
    %v2845 = vunpack.c.l.b16 %v2765
    %v2846 = vunpack.c.l.b16 %v2766
    %v2847 = vunpack.c.h.b16 %v2766
    %v2848 = vunpack.c.l.b16 %v2767
    %v2849 = vpack.c.b16 %v2804, %v2801
    %v2850 = vpack.c.b16 %v2805, %v2802
    %v2851 = vpack.c.b16 %v2806, %v2803
    %v2852 = vpack.c.b16 %v2810, %v2807
    %v2853 = vpack.c.b16 %v2811, %v2808
    %v2854 = vpack.c.b16 %v2812, %v2809
    %v2855 = vpack.c.b16 %v2816, %v2813
    %v2856 = vpack.c.b16 %v2817, %v2814
    %v2857 = vpack.c.b16 %v2818, %v2815
    %v2858 = vpack.c.b16 %v2822, %v2819
    %v2859 = vpack.c.b16 %v2823, %v2820
    %v2860 = vpack.c.b16 %v2824, %v2821
    %v2861 = vpack.c.b16 %v2828, %v2825
    %v2862 = vpack.c.b16 %v2829, %v2826
    %v2863 = vpack.c.b16 %v2830, %v2827
    %v2864 = vpack.c.b16 %v2834, %v2831
    %v2865 = vpack.c.b16 %v2835, %v2832
    %v2866 = vpack.c.b16 %v2836, %v2833
    %v2867 = vpack.c.b16 %v2840, %v2837
    %v2868 = vpack.c.b16 %v2841, %v2838
    %v2869 = vpack.c.b16 %v2842, %v2839
    %v2870 = vpack.c.b16 %v2846, %v2843
    %v2871 = vpack.c.b16 %v2847, %v2844
    %v2872 = vpack.c.b16 %v2848, %v2845
    %v2898 = vlaneseq
    %v2899 = vshrl.u32 %v2898, 7
    %v2900 = vsub.s32 0, %v2899
    %v2901 = vrot.slane %v2768, %v2900
    %v2902 = vlaneseq
    %v2903 = vshrl.u32 %v2902, 7
    %v2904 = vsub.s32 1, %v2903
    %v2905 = vrot.slane %v2768, %v2904
    %v2906 = vlaneseq
    %v2907 = vshrl.u32 %v2906, 7
    %v2908 = vsub.s32 2, %v2907
    %v2909 = vrot.slane %v2768, %v2908
    %2913 = vmatprep.subr.bf16.mxu0 %v2850
    %2914 = vmatpush1.bf16.msra.mxu0 %v2849
    %2915 = vmatprep.subr.bf16.mxu0 %v2853
    %2916 = vmatpush1.bf16.msra.mxu0 %v2852
    %2917 = vmatprep.subr.bf16.mxu0 %v2856
    %2918 = vmatpush1.bf16.msra.mxu0 %v2855
    %2919 = vmatprep.subr.bf16.mxu0 %v2859
    %2920 = vmatpush1.bf16.msra.mxu0 %v2858
    %2921 = vmatprep.subr.bf16.mxu0 %v2862
    %2922 = vmatpush1.bf16.msra.mxu0 %v2861
    %2923 = vmatprep.subr.bf16.mxu0 %v2865
    %2924 = vmatpush1.bf16.msra.mxu0 %v2864
    %2925 = vmatprep.subr.bf16.mxu0 %v2868
    %2926 = vmatpush1.bf16.msra.mxu0 %v2867
    %2927 = vmatprep.subr.bf16.mxu0 %v2871
    %2928 = vmatpush1.bf16.msra.mxu0 %v2870
    %2929 = vmatprep.subr.bf16.mxu0 0
    %2930 = vmatpush1.bf16.msra.mxu0 0
    %2931 = vmatprep.subr.bf16.mxu0 0
    %2932 = vmatpush1.bf16.msra.mxu0 0
    %2933 = vmatprep.subr.bf16.mxu0 0
    %2934 = vmatpush1.bf16.msra.mxu0 0
    %2935 = vmatprep.subr.bf16.mxu0 0
    %2936 = vmatpush1.bf16.msra.mxu0 0
    %2937 = vmatprep.subr.bf16.mxu0 0
    %2938 = vmatpush1.bf16.msra.mxu0 0
    %2939 = vmatprep.subr.bf16.mxu0 0
    %2940 = vmatpush1.bf16.msra.mxu0 0
    %2941 = vmatprep.subr.bf16.mxu0 0
    %2942 = vmatpush1.bf16.msra.mxu0 0
    %2943 = vmatprep.subr.bf16.mxu0 0
    %2944 = vmatpush1.bf16.msra.mxu0 0
    %2945 = vmatprep.mubr.bf16.mxu0 0
    %2946 = vmatmul.mubr.bf16.gmra.mrb[0].mxu0 %v2735
    %v2947 = vpop.f32.mrb[0].mxu0
    %v2948 = vadd.f32 %v2901, %v2947
    %v2949 = vpop.f32.mrb[0].mxu0
    %v2950 = vadd.f32 %v2905, %v2949
    %v2951 = vpop.f32.mrb[0].mxu0
    %v2952 = vpop.f32.mrb[0].mxu0
    %2953 = vdwg.mxu0
    %2954 = vmatprep.subr.bf16.mxu0 0
    %2955 = vmatpush1.bf16.msra.mxu0 %v2851
    %2956 = vmatprep.subr.bf16.mxu0 0
    %2957 = vmatpush1.bf16.msra.mxu0 %v2854
    %2958 = vmatprep.subr.bf16.mxu0 0
    %2959 = vmatpush1.bf16.msra.mxu0 %v2857
    %2960 = vmatprep.subr.bf16.mxu0 0
    %2961 = vmatpush1.bf16.msra.mxu0 %v2860
    %2962 = vmatprep.subr.bf16.mxu0 0
    %2963 = vmatpush1.bf16.msra.mxu0 %v2863
    %2964 = vmatprep.subr.bf16.mxu0 0
    %2965 = vmatpush1.bf16.msra.mxu0 %v2866
    %2966 = vmatprep.subr.bf16.mxu0 0
    %2967 = vmatpush1.bf16.msra.mxu0 %v2869
    %2968 = vmatprep.subr.bf16.mxu0 0
    %2969 = vmatpush1.bf16.msra.mxu0 %v2872
    %2970 = vmatprep.subr.bf16.mxu0 0
    %2971 = vmatpush1.bf16.msra.mxu0 0
    %2972 = vmatprep.subr.bf16.mxu0 0
    %2973 = vmatpush1.bf16.msra.mxu0 0
    %2974 = vmatprep.subr.bf16.mxu0 0
    %2975 = vmatpush1.bf16.msra.mxu0 0
    %2976 = vmatprep.subr.bf16.mxu0 0
    %2977 = vmatpush1.bf16.msra.mxu0 0
    %2978 = vmatprep.subr.bf16.mxu0 0
    %2979 = vmatpush1.bf16.msra.mxu0 0
    %2980 = vmatprep.subr.bf16.mxu0 0
    %2981 = vmatpush1.bf16.msra.mxu0 0
    %2982 = vmatprep.subr.bf16.mxu0 0
    %2983 = vmatpush1.bf16.msra.mxu0 0
    %2984 = vmatprep.subr.bf16.mxu0 0
    %2985 = vmatpush1.bf16.msra.mxu0 0
    %2986 = vmatprep.mubr.bf16.mxu0 0
    %2987 = vmatmul.mubr.bf16.gmra.mrb[0].mxu0 %v2735
    %v2988 = vpop.f32.mrb[0].mxu0
    %v2989 = vadd.f32 %v2909, %v2988
    %v2990 = vpop.f32.mrb[0].mxu0
    %v2991 = vpop.f32.mrb[0].mxu0
    %v2992 = vpop.f32.mrb[0].mxu0
    %2993 = vdwg.mxu0
    %v2994 = vadd.f32 %v2948, %v2465
    %v2995 = vxor.u32 %v2994, 2147483648
    %v2996 = vmul.f32 %v2995, 1.442695
    %v2997 = vpow.pop %v2996
    %v2998 = vadd.f32 %v2997, 1.0
    %v2999 = vrcp.pop %v2998
    %v3000 = vmul.f32 1.0, %v2999
    %v3001 = vadd.f32 %v2950, %v2504
    %v3002 = vxor.u32 %v3001, 2147483648
    %v3003 = vmul.f32 %v3002, 1.442695
    %v3004 = vpow.pop %v3003
    %v3005 = vadd.f32 %v3004, 1.0
    %v3006 = vrcp.pop %v3005
    %v3007 = vmul.f32 1.0, %v3006
    %v3008 = vmul.f32 %v3000, %v2506
    %v3009 = vadd.f32 %v2989, %v3008
    %v3010 = vtanh.pop %v3009
    %v3011 = vsub.f32 1.0, %v3007
    %v3012 = vmul.f32 %v3011, %v3010
    %v3013 = vmul.f32 %v3007, %v2060
    %v3014 = vadd.f32 %v3012, %v3013
    %3015 = vst [vmem:[#allocation2 + $0x2] sm:$0x1] %v3014
    %v3016 = vld [vmem:[#allocation3 + $0x3] sm:$0x1]
    %v3017 = vpack.c.bf16 %v3016, %v3016
    %v3018 = vld [vmem:[#allocation9] sm:$0xff]
    %v3019 = vld [vmem:[#allocation9 + $0x8] sm:$0xff]
    %v3020 = vld [vmem:[#allocation9 + $0x10] sm:$0xff]
    %v3021 = vld [vmem:[#allocation9 + $0x18] sm:$0xff]
    %v3022 = vld [vmem:[#allocation9 + $0x20] sm:$0xff]
    %v3023 = vld [vmem:[#allocation9 + $0x28] sm:$0xff]
    %v3024 = vld [vmem:[#allocation9 + $0x30] sm:$0xff]
    %v3025 = vld [vmem:[#allocation9 + $0x38] sm:$0xff]
    %v3026 = vld [vmem:[#allocation9 + $0x40] sm:$0xff]
    %v3027 = vld [vmem:[#allocation9 + $0x48] sm:$0xff]
    %v3028 = vld [vmem:[#allocation9 + $0x50] sm:$0xff]
    %v3029 = vld [vmem:[#allocation9 + $0x58] sm:$0xff]
    %v3030 = vld [vmem:[#allocation9 + $0x60] sm:$0xff]
    %v3031 = vld [vmem:[#allocation9 + $0x68] sm:$0xff]
    %v3032 = vld [vmem:[#allocation9 + $0x70] sm:$0xff]
    %v3033 = vld [vmem:[#allocation9 + $0x78] sm:$0xff]
    %v3034 = vld [vmem:[%s8] sm:$0x3]
    %v3051 = vunpack.c.l.b16 %v3018
    %v3052 = vunpack.c.h.b16 %v3018
    %v3053 = vunpack.c.l.b16 %v3019
    %v3054 = vunpack.c.h.b16 %v3019
    %v3055 = vunpack.c.l.b16 %v3020
    %v3056 = vunpack.c.h.b16 %v3020
    %v3057 = vunpack.c.l.b16 %v3021
    %v3058 = vunpack.c.h.b16 %v3021
    %v3059 = vunpack.c.l.b16 %v3022
    %v3060 = vunpack.c.h.b16 %v3022
    %v3061 = vunpack.c.l.b16 %v3023
    %v3062 = vunpack.c.h.b16 %v3023
    %v3063 = vunpack.c.l.b16 %v3024
    %v3064 = vunpack.c.h.b16 %v3024
    %v3065 = vunpack.c.l.b16 %v3025
    %v3066 = vunpack.c.h.b16 %v3025
    %v3067 = vunpack.c.l.b16 %v3026
    %v3068 = vunpack.c.h.b16 %v3026
    %v3069 = vunpack.c.l.b16 %v3027
    %v3070 = vunpack.c.h.b16 %v3027
    %v3071 = vunpack.c.l.b16 %v3028
    %v3072 = vunpack.c.h.b16 %v3028
    %v3073 = vunpack.c.l.b16 %v3029
    %v3074 = vunpack.c.h.b16 %v3029
    %v3075 = vunpack.c.l.b16 %v3030
    %v3076 = vunpack.c.h.b16 %v3030
    %v3077 = vunpack.c.l.b16 %v3031
    %v3078 = vunpack.c.h.b16 %v3031
    %v3079 = vunpack.c.l.b16 %v3032
    %v3080 = vunpack.c.h.b16 %v3032
    %v3081 = vunpack.c.l.b16 %v3033
    %v3082 = vunpack.c.h.b16 %v3033
    %v3083 = vpack.c.b16 %v3053, %v3051
    %v3084 = vpack.c.b16 %v3054, %v3052
    %v3085 = vpack.c.b16 %v3057, %v3055
    %v3086 = vpack.c.b16 %v3058, %v3056
    %v3087 = vpack.c.b16 %v3061, %v3059
    %v3088 = vpack.c.b16 %v3062, %v3060
    %v3089 = vpack.c.b16 %v3065, %v3063
    %v3090 = vpack.c.b16 %v3066, %v3064
    %v3091 = vpack.c.b16 %v3069, %v3067
    %v3092 = vpack.c.b16 %v3070, %v3068
    %v3093 = vpack.c.b16 %v3073, %v3071
    %v3094 = vpack.c.b16 %v3074, %v3072
    %v3095 = vpack.c.b16 %v3077, %v3075
    %v3096 = vpack.c.b16 %v3078, %v3076
    %v3097 = vpack.c.b16 %v3081, %v3079
    %v3098 = vpack.c.b16 %v3082, %v3080
    %v3116 = vlaneseq
    %v3117 = vshrl.u32 %v3116, 7
    %v3118 = vsub.s32 0, %v3117
    %v3119 = vrot.slane %v3034, %v3118
    %v3120 = vlaneseq
    %v3121 = vshrl.u32 %v3120, 7
    %v3122 = vsub.s32 1, %v3121
    %v3123 = vrot.slane %v3034, %v3122
    %3126 = vmatprep.subr.bf16.mxu0 %v3084
    %3127 = vmatpush1.bf16.msra.mxu0 %v3083
    %3128 = vmatprep.subr.bf16.mxu0 %v3086
    %3129 = vmatpush1.bf16.msra.mxu0 %v3085
    %3130 = vmatprep.subr.bf16.mxu0 %v3088
    %3131 = vmatpush1.bf16.msra.mxu0 %v3087
    %3132 = vmatprep.subr.bf16.mxu0 %v3090
    %3133 = vmatpush1.bf16.msra.mxu0 %v3089
    %3134 = vmatprep.subr.bf16.mxu0 %v3092
    %3135 = vmatpush1.bf16.msra.mxu0 %v3091
    %3136 = vmatprep.subr.bf16.mxu0 %v3094
    %3137 = vmatpush1.bf16.msra.mxu0 %v3093
    %3138 = vmatprep.subr.bf16.mxu0 %v3096
    %3139 = vmatpush1.bf16.msra.mxu0 %v3095
    %3140 = vmatprep.subr.bf16.mxu0 %v3098
    %3141 = vmatpush1.bf16.msra.mxu0 %v3097
    %3142 = vmatprep.subr.bf16.mxu0 0
    %3143 = vmatpush1.bf16.msra.mxu0 0
    %3144 = vmatprep.subr.bf16.mxu0 0
    %3145 = vmatpush1.bf16.msra.mxu0 0
    %3146 = vmatprep.subr.bf16.mxu0 0
    %3147 = vmatpush1.bf16.msra.mxu0 0
    %3148 = vmatprep.subr.bf16.mxu0 0
    %3149 = vmatpush1.bf16.msra.mxu0 0
    %3150 = vmatprep.subr.bf16.mxu0 0
    %3151 = vmatpush1.bf16.msra.mxu0 0
    %3152 = vmatprep.subr.bf16.mxu0 0
    %3153 = vmatpush1.bf16.msra.mxu0 0
    %3154 = vmatprep.subr.bf16.mxu0 0
    %3155 = vmatpush1.bf16.msra.mxu0 0
    %3156 = vmatprep.subr.bf16.mxu0 0
    %3157 = vmatpush1.bf16.msra.mxu0 0
    %3158 = vmatprep.mubr.bf16.mxu0 0
    %3159 = vmatmul.mubr.bf16.gmra.mrb[0].mxu0 %v3017
    %v3160 = vpop.f32.mrb[0].mxu0
    %v3161 = vadd.f32 %v3119, %v3160
    %v3162 = vpop.f32.mrb[0].mxu0
    %v3163 = vadd.f32 %v3123, %v3162
    %v3164 = vpop.f32.mrb[0].mxu0
    %v3165 = vpop.f32.mrb[0].mxu0
    %3166 = vdwg.mxu0
    %v3167 = vpack.c.bf16 %v3014, %v3014
    %v3168 = vld [vmem:[#allocation11] sm:$0xff]
    %v3169 = vld [vmem:[#allocation11 + $0x8] sm:$0xff]
    %v3170 = vld [vmem:[#allocation11 + $0x10] sm:$0xff]
    %v3171 = vld [vmem:[#allocation11 + $0x18] sm:$0xff]
    %v3172 = vld [vmem:[#allocation11 + $0x20] sm:$0xff]
    %v3173 = vld [vmem:[#allocation11 + $0x28] sm:$0xff]
    %v3174 = vld [vmem:[#allocation11 + $0x30] sm:$0xff]
    %v3175 = vld [vmem:[#allocation11 + $0x38] sm:$0xff]
    %v3176 = vld [vmem:[#allocation11 + $0x40] sm:$0xff]
    %v3177 = vld [vmem:[#allocation11 + $0x48] sm:$0xff]
    %v3178 = vld [vmem:[#allocation11 + $0x50] sm:$0xff]
    %v3179 = vld [vmem:[#allocation11 + $0x58] sm:$0xff]
    %v3180 = vld [vmem:[#allocation11 + $0x60] sm:$0xff]
    %v3181 = vld [vmem:[#allocation11 + $0x68] sm:$0xff]
    %v3182 = vld [vmem:[#allocation11 + $0x70] sm:$0xff]
    %v3183 = vld [vmem:[#allocation11 + $0x78] sm:$0xff]
    %v3184 = vld [vmem:[#allocation11 + $0x80] sm:$0xff]
    %v3185 = vld [vmem:[#allocation11 + $0x88] sm:$0xff]
    %v3186 = vld [vmem:[#allocation11 + $0x90] sm:$0xff]
    %v3187 = vld [vmem:[#allocation11 + $0x98] sm:$0xff]
    %v3188 = vld [vmem:[#allocation11 + $0xa0] sm:$0xff]
    %v3189 = vld [vmem:[#allocation11 + $0xa8] sm:$0xff]
    %v3190 = vld [vmem:[#allocation11 + $0xb0] sm:$0xff]
    %v3191 = vld [vmem:[#allocation11 + $0xb8] sm:$0xff]
    %v3192 = vld [vmem:[#allocation11 + $0xc0] sm:$0xff]
    %v3193 = vld [vmem:[#allocation11 + $0xc8] sm:$0xff]
    %v3194 = vld [vmem:[#allocation11 + $0xd0] sm:$0xff]
    %v3195 = vld [vmem:[#allocation11 + $0xd8] sm:$0xff]
    %v3196 = vld [vmem:[#allocation11 + $0xe0] sm:$0xff]
    %v3197 = vld [vmem:[#allocation11 + $0xe8] sm:$0xff]
    %v3198 = vld [vmem:[#allocation11 + $0xf0] sm:$0xff]
    %v3199 = vld [vmem:[#allocation11 + $0xf8] sm:$0xff]
    %v3200 = vld [vmem:[%s9] sm:$0xf]
    %v3233 = vunpack.c.l.b16 %v3168
    %v3234 = vunpack.c.h.b16 %v3168
    %v3235 = vunpack.c.l.b16 %v3169
    %v3236 = vunpack.c.h.b16 %v3169
    %v3237 = vunpack.c.l.b16 %v3170
    %v3238 = vunpack.c.h.b16 %v3170
    %v3239 = vunpack.c.l.b16 %v3171
    %v3240 = vunpack.c.h.b16 %v3171
    %v3241 = vunpack.c.l.b16 %v3172
    %v3242 = vunpack.c.h.b16 %v3172
    %v3243 = vunpack.c.l.b16 %v3173
    %v3244 = vunpack.c.h.b16 %v3173
    %v3245 = vunpack.c.l.b16 %v3174
    %v3246 = vunpack.c.h.b16 %v3174
    %v3247 = vunpack.c.l.b16 %v3175
    %v3248 = vunpack.c.h.b16 %v3175
    %v3249 = vunpack.c.l.b16 %v3176
    %v3250 = vunpack.c.h.b16 %v3176
    %v3251 = vunpack.c.l.b16 %v3177
    %v3252 = vunpack.c.h.b16 %v3177
    %v3253 = vunpack.c.l.b16 %v3178
    %v3254 = vunpack.c.h.b16 %v3178
    %v3255 = vunpack.c.l.b16 %v3179
    %v3256 = vunpack.c.h.b16 %v3179
    %v3257 = vunpack.c.l.b16 %v3180
    %v3258 = vunpack.c.h.b16 %v3180
    %v3259 = vunpack.c.l.b16 %v3181
    %v3260 = vunpack.c.h.b16 %v3181
    %v3261 = vunpack.c.l.b16 %v3182
    %v3262 = vunpack.c.h.b16 %v3182
    %v3263 = vunpack.c.l.b16 %v3183
    %v3264 = vunpack.c.h.b16 %v3183
    %v3265 = vunpack.c.l.b16 %v3184
    %v3266 = vunpack.c.h.b16 %v3184
    %v3267 = vunpack.c.l.b16 %v3185
    %v3268 = vunpack.c.h.b16 %v3185
    %v3269 = vunpack.c.l.b16 %v3186
    %v3270 = vunpack.c.h.b16 %v3186
    %v3271 = vunpack.c.l.b16 %v3187
    %v3272 = vunpack.c.h.b16 %v3187
    %v3273 = vunpack.c.l.b16 %v3188
    %v3274 = vunpack.c.h.b16 %v3188
    %v3275 = vunpack.c.l.b16 %v3189
    %v3276 = vunpack.c.h.b16 %v3189
    %v3277 = vunpack.c.l.b16 %v3190
    %v3278 = vunpack.c.h.b16 %v3190
    %v3279 = vunpack.c.l.b16 %v3191
    %v3280 = vunpack.c.h.b16 %v3191
    %v3281 = vunpack.c.l.b16 %v3192
    %v3282 = vunpack.c.h.b16 %v3192
    %v3283 = vunpack.c.l.b16 %v3193
    %v3284 = vunpack.c.h.b16 %v3193
    %v3285 = vunpack.c.l.b16 %v3194
    %v3286 = vunpack.c.h.b16 %v3194
    %v3287 = vunpack.c.l.b16 %v3195
    %v3288 = vunpack.c.h.b16 %v3195
    %v3289 = vunpack.c.l.b16 %v3196
    %v3290 = vunpack.c.h.b16 %v3196
    %v3291 = vunpack.c.l.b16 %v3197
    %v3292 = vunpack.c.h.b16 %v3197
    %v3293 = vunpack.c.l.b16 %v3198
    %v3294 = vunpack.c.h.b16 %v3198
    %v3295 = vunpack.c.l.b16 %v3199
    %v3296 = vunpack.c.h.b16 %v3199
    %v3297 = vpack.c.b16 %v3237, %v3233
    %v3298 = vpack.c.b16 %v3238, %v3234
    %v3299 = vpack.c.b16 %v3239, %v3235
    %v3300 = vpack.c.b16 %v3240, %v3236
    %v3301 = vpack.c.b16 %v3245, %v3241
    %v3302 = vpack.c.b16 %v3246, %v3242
    %v3303 = vpack.c.b16 %v3247, %v3243
    %v3304 = vpack.c.b16 %v3248, %v3244
    %v3305 = vpack.c.b16 %v3253, %v3249
    %v3306 = vpack.c.b16 %v3254, %v3250
    %v3307 = vpack.c.b16 %v3255, %v3251
    %v3308 = vpack.c.b16 %v3256, %v3252
    %v3309 = vpack.c.b16 %v3261, %v3257
    %v3310 = vpack.c.b16 %v3262, %v3258
    %v3311 = vpack.c.b16 %v3263, %v3259
    %v3312 = vpack.c.b16 %v3264, %v3260
    %v3313 = vpack.c.b16 %v3269, %v3265
    %v3314 = vpack.c.b16 %v3270, %v3266
    %v3315 = vpack.c.b16 %v3271, %v3267
    %v3316 = vpack.c.b16 %v3272, %v3268
    %v3317 = vpack.c.b16 %v3277, %v3273
    %v3318 = vpack.c.b16 %v3278, %v3274
    %v3319 = vpack.c.b16 %v3279, %v3275
    %v3320 = vpack.c.b16 %v3280, %v3276
    %v3321 = vpack.c.b16 %v3285, %v3281
    %v3322 = vpack.c.b16 %v3286, %v3282
    %v3323 = vpack.c.b16 %v3287, %v3283
    %v3324 = vpack.c.b16 %v3288, %v3284
    %v3325 = vpack.c.b16 %v3293, %v3289
    %v3326 = vpack.c.b16 %v3294, %v3290
    %v3327 = vpack.c.b16 %v3295, %v3291
    %v3328 = vpack.c.b16 %v3296, %v3292
    %v3362 = vlaneseq
    %v3363 = vshrl.u32 %v3362, 7
    %v3364 = vsub.s32 0, %v3363
    %v3365 = vrot.slane %v3200, %v3364
    %v3366 = vlaneseq
    %v3367 = vshrl.u32 %v3366, 7
    %v3368 = vsub.s32 1, %v3367
    %v3369 = vrot.slane %v3200, %v3368
    %v3370 = vlaneseq
    %v3371 = vshrl.u32 %v3370, 7
    %v3372 = vsub.s32 2, %v3371
    %v3373 = vrot.slane %v3200, %v3372
    %v3374 = vlaneseq
    %v3375 = vshrl.u32 %v3374, 7
    %v3376 = vsub.s32 3, %v3375
    %v3377 = vrot.slane %v3200, %v3376
    %3382 = vmatprep.subr.bf16.mxu0 %v3298
    %3383 = vmatpush1.bf16.msra.mxu0 %v3297
    %3384 = vmatprep.subr.bf16.mxu0 %v3302
    %3385 = vmatpush1.bf16.msra.mxu0 %v3301
    %3386 = vmatprep.subr.bf16.mxu0 %v3306
    %3387 = vmatpush1.bf16.msra.mxu0 %v3305
    %3388 = vmatprep.subr.bf16.mxu0 %v3310
    %3389 = vmatpush1.bf16.msra.mxu0 %v3309
    %3390 = vmatprep.subr.bf16.mxu0 %v3314
    %3391 = vmatpush1.bf16.msra.mxu0 %v3313
    %3392 = vmatprep.subr.bf16.mxu0 %v3318
    %3393 = vmatpush1.bf16.msra.mxu0 %v3317
    %3394 = vmatprep.subr.bf16.mxu0 %v3322
    %3395 = vmatpush1.bf16.msra.mxu0 %v3321
    %3396 = vmatprep.subr.bf16.mxu0 %v3326
    %3397 = vmatpush1.bf16.msra.mxu0 %v3325
    %3398 = vmatprep.subr.bf16.mxu0 0
    %3399 = vmatpush1.bf16.msra.mxu0 0
    %3400 = vmatprep.subr.bf16.mxu0 0
    %3401 = vmatpush1.bf16.msra.mxu0 0
    %3402 = vmatprep.subr.bf16.mxu0 0
    %3403 = vmatpush1.bf16.msra.mxu0 0
    %3404 = vmatprep.subr.bf16.mxu0 0
    %3405 = vmatpush1.bf16.msra.mxu0 0
    %3406 = vmatprep.subr.bf16.mxu0 0
    %3407 = vmatpush1.bf16.msra.mxu0 0
    %3408 = vmatprep.subr.bf16.mxu0 0
    %3409 = vmatpush1.bf16.msra.mxu0 0
    %3410 = vmatprep.subr.bf16.mxu0 0
    %3411 = vmatpush1.bf16.msra.mxu0 0
    %3412 = vmatprep.subr.bf16.mxu0 0
    %3413 = vmatpush1.bf16.msra.mxu0 0
    %3414 = vmatprep.mubr.bf16.mxu0 0
    %3415 = vmatmul.mubr.bf16.gmra.mrb[0].mxu0 %v3167
    %v3416 = vpop.f32.mrb[0].mxu0
    %v3417 = vadd.f32 %v3365, %v3416
    %v3418 = vpop.f32.mrb[0].mxu0
    %v3419 = vadd.f32 %v3369, %v3418
    %v3420 = vpop.f32.mrb[0].mxu0
    %v3421 = vpop.f32.mrb[0].mxu0
    %3422 = vdwg.mxu0
    %3423 = vmatprep.subr.bf16.mxu0 %v3300
    %3424 = vmatpush1.bf16.msra.mxu0 %v3299
    %3425 = vmatprep.subr.bf16.mxu0 %v3304
    %3426 = vmatpush1.bf16.msra.mxu0 %v3303
    %3427 = vmatprep.subr.bf16.mxu0 %v3308
    %3428 = vmatpush1.bf16.msra.mxu0 %v3307
    %3429 = vmatprep.subr.bf16.mxu0 %v3312
    %3430 = vmatpush1.bf16.msra.mxu0 %v3311
    %3431 = vmatprep.subr.bf16.mxu0 %v3316
    %3432 = vmatpush1.bf16.msra.mxu0 %v3315
    %3433 = vmatprep.subr.bf16.mxu0 %v3320
    %3434 = vmatpush1.bf16.msra.mxu0 %v3319
    %3435 = vmatprep.subr.bf16.mxu0 %v3324
    %3436 = vmatpush1.bf16.msra.mxu0 %v3323
    %3437 = vmatprep.subr.bf16.mxu0 %v3328
    %3438 = vmatpush1.bf16.msra.mxu0 %v3327
    %3439 = vmatprep.subr.bf16.mxu0 0
    %3440 = vmatpush1.bf16.msra.mxu0 0
    %3441 = vmatprep.subr.bf16.mxu0 0
    %3442 = vmatpush1.bf16.msra.mxu0 0
    %3443 = vmatprep.subr.bf16.mxu0 0
    %3444 = vmatpush1.bf16.msra.mxu0 0
    %3445 = vmatprep.subr.bf16.mxu0 0
    %3446 = vmatpush1.bf16.msra.mxu0 0
    %3447 = vmatprep.subr.bf16.mxu0 0
    %3448 = vmatpush1.bf16.msra.mxu0 0
    %3449 = vmatprep.subr.bf16.mxu0 0
    %3450 = vmatpush1.bf16.msra.mxu0 0
    %3451 = vmatprep.subr.bf16.mxu0 0
    %3452 = vmatpush1.bf16.msra.mxu0 0
    %3453 = vmatprep.subr.bf16.mxu0 0
    %3454 = vmatpush1.bf16.msra.mxu0 0
    %3455 = vmatprep.mubr.bf16.mxu0 0
    %3456 = vmatmul.mubr.bf16.gmra.mrb[0].mxu0 %v3167
    %v3457 = vpop.f32.mrb[0].mxu0
    %v3458 = vadd.f32 %v3373, %v3457
    %v3459 = vpop.f32.mrb[0].mxu0
    %v3460 = vadd.f32 %v3377, %v3459
    %v3461 = vpop.f32.mrb[0].mxu0
    %v3462 = vpop.f32.mrb[0].mxu0
    %3463 = vdwg.mxu0
    %v3464 = vadd.f32 %v3161, %v3417
    %v3465 = vsel %vm602, %v3464, -inf
    %3466 = vmax.xlane.f32.xlu0 %v3465
    %v3467 = vpop.xlane.xlu0 %3466
    %v3468 = vsub.f32 %v3464, %v3467
    %v3469 = vmul.f32 %v3468, 1.442695
    %v3470 = vpow.pop %v3469
    %v3471 = vsel %vm602, %v3470, 0.0
    %3472 = vadd.xlane.f32.xlu0 %v3471
    %v3473 = vpop.xlane.xlu0 %3472
    %v3474 = vrcp.pop %v3473
    %v3475 = vmul.f32 %v3470, %v3474
    %3476 = vst [vmem:[#allocation17 + $0x3] sm:$0x1] %v3475
    %v3477 = vpack.c.bf16 %v3475, %v3475
    %v3478 = vld [vmem:[#allocation8] sm:$0xf]
    %v3479 = vld [vmem:[#allocation8 + $0x4] sm:$0xf]
    %v3480 = vld [vmem:[#allocation8 + $0x8] sm:$0xf]
    %v3481 = vld [vmem:[#allocation8 + $0xc] sm:$0xf]
    %v3482 = vld [vmem:[#allocation8 + $0x10] sm:$0xf]
    %v3483 = vld [vmem:[#allocation8 + $0x14] sm:$0xf]
    %v3484 = vld [vmem:[#allocation8 + $0x18] sm:$0xf]
    %v3485 = vld [vmem:[#allocation8 + $0x1c] sm:$0xf]
    %v3486 = vld [vmem:[#allocation8 + $0x20] sm:$0xf]
    %v3487 = vld [vmem:[#allocation8 + $0x24] sm:$0xf]
    %v3488 = vld [vmem:[#allocation8 + $0x28] sm:$0xf]
    %v3489 = vld [vmem:[#allocation8 + $0x2c] sm:$0xf]
    %v3490 = vld [vmem:[#allocation8 + $0x30] sm:$0xf]
    %v3491 = vld [vmem:[#allocation8 + $0x34] sm:$0xf]
    %v3492 = vld [vmem:[#allocation8 + $0x38] sm:$0xf]
    %v3493 = vld [vmem:[#allocation8 + $0x3c] sm:$0xf]
    %v3510 = vunpack.c.l.b16 %v3478
    %v3511 = vunpack.c.l.b16 %v3479
    %v3512 = vunpack.c.l.b16 %v3480
    %v3513 = vunpack.c.l.b16 %v3481
    %v3514 = vunpack.c.l.b16 %v3482
    %v3515 = vunpack.c.l.b16 %v3483
    %v3516 = vunpack.c.l.b16 %v3484
    %v3517 = vunpack.c.l.b16 %v3485
    %v3518 = vunpack.c.l.b16 %v3486
    %v3519 = vunpack.c.l.b16 %v3487
    %v3520 = vunpack.c.l.b16 %v3488
    %v3521 = vunpack.c.l.b16 %v3489
    %v3522 = vunpack.c.l.b16 %v3490
    %v3523 = vunpack.c.l.b16 %v3491
    %v3524 = vunpack.c.l.b16 %v3492
    %v3525 = vunpack.c.l.b16 %v3493
    %v3526 = vpack.c.b16 %v3511, %v3510
    %v3527 = vpack.c.b16 %v3513, %v3512
    %v3528 = vpack.c.b16 %v3515, %v3514
    %v3529 = vpack.c.b16 %v3517, %v3516
    %v3530 = vpack.c.b16 %v3519, %v3518
    %v3531 = vpack.c.b16 %v3521, %v3520
    %v3532 = vpack.c.b16 %v3523, %v3522
    %v3533 = vpack.c.b16 %v3525, %v3524
    %3542 = vmatprep.subr.bf16.mxu0 0
    %3543 = vmatpush1.bf16.msra.mxu0 %v3526
    %3544 = vmatprep.subr.bf16.mxu0 0
    %3545 = vmatpush1.bf16.msra.mxu0 %v3527
    %3546 = vmatprep.subr.bf16.mxu0 0
    %3547 = vmatpush1.bf16.msra.mxu0 %v3528
    %3548 = vmatprep.subr.bf16.mxu0 0
    %3549 = vmatpush1.bf16.msra.mxu0 %v3529
    %3550 = vmatprep.subr.bf16.mxu0 0
    %3551 = vmatpush1.bf16.msra.mxu0 %v3530
    %3552 = vmatprep.subr.bf16.mxu0 0
    %3553 = vmatpush1.bf16.msra.mxu0 %v3531
    %3554 = vmatprep.subr.bf16.mxu0 0
    %3555 = vmatpush1.bf16.msra.mxu0 %v3532
    %3556 = vmatprep.subr.bf16.mxu0 0
    %3557 = vmatpush1.bf16.msra.mxu0 %v3533
    %3558 = vmatprep.subr.bf16.mxu0 0
    %3559 = vmatpush1.bf16.msra.mxu0 0
    %3560 = vmatprep.subr.bf16.mxu0 0
    %3561 = vmatpush1.bf16.msra.mxu0 0
    %3562 = vmatprep.subr.bf16.mxu0 0
    %3563 = vmatpush1.bf16.msra.mxu0 0
    %3564 = vmatprep.subr.bf16.mxu0 0
    %3565 = vmatpush1.bf16.msra.mxu0 0
    %3566 = vmatprep.subr.bf16.mxu0 0
    %3567 = vmatpush1.bf16.msra.mxu0 0
    %3568 = vmatprep.subr.bf16.mxu0 0
    %3569 = vmatpush1.bf16.msra.mxu0 0
    %3570 = vmatprep.subr.bf16.mxu0 0
    %3571 = vmatpush1.bf16.msra.mxu0 0
    %3572 = vmatprep.subr.bf16.mxu0 0
    %3573 = vmatpush1.bf16.msra.mxu0 0
    %3574 = vmatprep.mubr.bf16.mxu0 0
    %3575 = vmatmul.mubr.bf16.gmra.mrb[0].mxu0 %v3477
    %v3576 = vpop.f32.mrb[0].mxu0
    %v3577 = vadd.f32 0.0, %v3576
    %v3578 = vpop.f32.mrb[0].mxu0
    %v3579 = vpop.f32.mrb[0].mxu0
    %v3580 = vpop.f32.mrb[0].mxu0
    %3581 = vdwg.mxu0
    %v3582 = vpack.c.bf16 %v3577, %v3577
    %v3583 = vld [vmem:[#allocation12] sm:$0xf]
    %v3584 = vld [vmem:[#allocation12 + $0x4] sm:$0xf]
    %v3585 = vld [vmem:[#allocation12 + $0x8] sm:$0xf]
    %v3586 = vld [vmem:[#allocation12 + $0xc] sm:$0xf]
    %v3587 = vld [vmem:[#allocation12 + $0x10] sm:$0xf]
    %v3588 = vld [vmem:[#allocation12 + $0x14] sm:$0xf]
    %v3589 = vld [vmem:[#allocation12 + $0x18] sm:$0xf]
    %v3590 = vld [vmem:[#allocation12 + $0x1c] sm:$0xf]
    %v3591 = vld [vmem:[#allocation12 + $0x20] sm:$0xf]
    %v3592 = vld [vmem:[#allocation12 + $0x24] sm:$0xf]
    %v3593 = vld [vmem:[#allocation12 + $0x28] sm:$0xf]
    %v3594 = vld [vmem:[#allocation12 + $0x2c] sm:$0xf]
    %v3595 = vld [vmem:[#allocation12 + $0x30] sm:$0xf]
    %v3596 = vld [vmem:[#allocation12 + $0x34] sm:$0xf]
    %v3597 = vld [vmem:[#allocation12 + $0x38] sm:$0xf]
    %v3598 = vld [vmem:[#allocation12 + $0x3c] sm:$0xf]
    %v3615 = vunpack.c.l.b16 %v3583
    %v3616 = vunpack.c.l.b16 %v3584
    %v3617 = vunpack.c.l.b16 %v3585
    %v3618 = vunpack.c.l.b16 %v3586
    %v3619 = vunpack.c.l.b16 %v3587
    %v3620 = vunpack.c.l.b16 %v3588
    %v3621 = vunpack.c.l.b16 %v3589
    %v3622 = vunpack.c.l.b16 %v3590
    %v3623 = vunpack.c.l.b16 %v3591
    %v3624 = vunpack.c.l.b16 %v3592
    %v3625 = vunpack.c.l.b16 %v3593
    %v3626 = vunpack.c.l.b16 %v3594
    %v3627 = vunpack.c.l.b16 %v3595
    %v3628 = vunpack.c.l.b16 %v3596
    %v3629 = vunpack.c.l.b16 %v3597
    %v3630 = vunpack.c.l.b16 %v3598
    %v3631 = vpack.c.b16 %v3616, %v3615
    %v3632 = vpack.c.b16 %v3618, %v3617
    %v3633 = vpack.c.b16 %v3620, %v3619
    %v3634 = vpack.c.b16 %v3622, %v3621
    %v3635 = vpack.c.b16 %v3624, %v3623
    %v3636 = vpack.c.b16 %v3626, %v3625
    %v3637 = vpack.c.b16 %v3628, %v3627
    %v3638 = vpack.c.b16 %v3630, %v3629
    %3647 = vmatprep.subr.bf16.mxu0 0
    %3648 = vmatpush1.bf16.msra.mxu0 %v3631
    %3649 = vmatprep.subr.bf16.mxu0 0
    %3650 = vmatpush1.bf16.msra.mxu0 %v3632
    %3651 = vmatprep.subr.bf16.mxu0 0
    %3652 = vmatpush1.bf16.msra.mxu0 %v3633
    %3653 = vmatprep.subr.bf16.mxu0 0
    %3654 = vmatpush1.bf16.msra.mxu0 %v3634
    %3655 = vmatprep.subr.bf16.mxu0 0
    %3656 = vmatpush1.bf16.msra.mxu0 %v3635
    %3657 = vmatprep.subr.bf16.mxu0 0
    %3658 = vmatpush1.bf16.msra.mxu0 %v3636
    %3659 = vmatprep.subr.bf16.mxu0 0
    %3660 = vmatpush1.bf16.msra.mxu0 %v3637
    %3661 = vmatprep.subr.bf16.mxu0 0
    %3662 = vmatpush1.bf16.msra.mxu0 %v3638
    %3663 = vmatprep.subr.bf16.mxu0 0
    %3664 = vmatpush1.bf16.msra.mxu0 0
    %3665 = vmatprep.subr.bf16.mxu0 0
    %3666 = vmatpush1.bf16.msra.mxu0 0
    %3667 = vmatprep.subr.bf16.mxu0 0
    %3668 = vmatpush1.bf16.msra.mxu0 0
    %3669 = vmatprep.subr.bf16.mxu0 0
    %3670 = vmatpush1.bf16.msra.mxu0 0
    %3671 = vmatprep.subr.bf16.mxu0 0
    %3672 = vmatpush1.bf16.msra.mxu0 0
    %3673 = vmatprep.subr.bf16.mxu0 0
    %3674 = vmatpush1.bf16.msra.mxu0 0
    %3675 = vmatprep.subr.bf16.mxu0 0
    %3676 = vmatpush1.bf16.msra.mxu0 0
    %3677 = vmatprep.subr.bf16.mxu0 0
    %3678 = vmatpush1.bf16.msra.mxu0 0
    %3679 = vmatprep.mubr.bf16.mxu0 0
    %3680 = vmatmul.mubr.bf16.gmra.mrb[0].mxu0 %v3582
    %v3681 = vpop.f32.mrb[0].mxu0
    %v3682 = vadd.f32 0.0, %v3681
    %v3683 = vpop.f32.mrb[0].mxu0
    %v3684 = vpop.f32.mrb[0].mxu0
    %v3685 = vpop.f32.mrb[0].mxu0
    %3686 = vdwg.mxu0
    %v3687 = vadd.f32 %v3163, %v3682
    %v3688 = vmax.f32 %v3687, 0.0
    %v3689 = vpack.c.bf16 %v3688, %v3688
    %v3690 = vld [vmem:[#allocation14] sm:$0xff]
    %v3691 = vld [vmem:[#allocation14 + $0x8] sm:$0xf]
    %v3692 = vld [vmem:[#allocation14 + $0xc] sm:$0xff]
    %v3693 = vld [vmem:[#allocation14 + $0x14] sm:$0xf]
    %v3694 = vld [vmem:[#allocation14 + $0x18] sm:$0xff]
    %v3695 = vld [vmem:[#allocation14 + $0x20] sm:$0xf]
    %v3696 = vld [vmem:[#allocation14 + $0x24] sm:$0xff]
    %v3697 = vld [vmem:[#allocation14 + $0x2c] sm:$0xf]
    %v3698 = vld [vmem:[#allocation14 + $0x30] sm:$0xff]
    %v3699 = vld [vmem:[#allocation14 + $0x38] sm:$0xf]
    %v3700 = vld [vmem:[#allocation14 + $0x3c] sm:$0xff]
    %v3701 = vld [vmem:[#allocation14 + $0x44] sm:$0xf]
    %v3702 = vld [vmem:[#allocation14 + $0x48] sm:$0xff]
    %v3703 = vld [vmem:[#allocation14 + $0x50] sm:$0xf]
    %v3704 = vld [vmem:[#allocation14 + $0x54] sm:$0xff]
    %v3705 = vld [vmem:[#allocation14 + $0x5c] sm:$0xf]
    %v3706 = vld [vmem:[#allocation14 + $0x60] sm:$0xff]
    %v3707 = vld [vmem:[#allocation14 + $0x68] sm:$0xf]
    %v3708 = vld [vmem:[#allocation14 + $0x6c] sm:$0xff]
    %v3709 = vld [vmem:[#allocation14 + $0x74] sm:$0xf]
    %v3710 = vld [vmem:[#allocation14 + $0x78] sm:$0xff]
    %v3711 = vld [vmem:[#allocation14 + $0x80] sm:$0xf]
    %v3712 = vld [vmem:[#allocation14 + $0x84] sm:$0xff]
    %v3713 = vld [vmem:[#allocation14 + $0x8c] sm:$0xf]
    %v3714 = vld [vmem:[#allocation14 + $0x90] sm:$0xff]
    %v3715 = vld [vmem:[#allocation14 + $0x98] sm:$0xf]
    %v3716 = vld [vmem:[#allocation14 + $0x9c] sm:$0xff]
    %v3717 = vld [vmem:[#allocation14 + $0xa4] sm:$0xf]
    %v3718 = vld [vmem:[#allocation14 + $0xa8] sm:$0xff]
    %v3719 = vld [vmem:[#allocation14 + $0xb0] sm:$0xf]
    %v3720 = vld [vmem:[#allocation14 + $0xb4] sm:$0xff]
    %v3721 = vld [vmem:[#allocation14 + $0xbc] sm:$0xf]
    %v3722 = vld [vmem:[%s10] sm:$0x7]
    %v3755 = vunpack.c.l.b16 %v3690
    %v3756 = vunpack.c.h.b16 %v3690
    %v3757 = vunpack.c.l.b16 %v3691
    %v3758 = vunpack.c.l.b16 %v3692
    %v3759 = vunpack.c.h.b16 %v3692
    %v3760 = vunpack.c.l.b16 %v3693
    %v3761 = vunpack.c.l.b16 %v3694
    %v3762 = vunpack.c.h.b16 %v3694
    %v3763 = vunpack.c.l.b16 %v3695
    %v3764 = vunpack.c.l.b16 %v3696
    %v3765 = vunpack.c.h.b16 %v3696
    %v3766 = vunpack.c.l.b16 %v3697
    %v3767 = vunpack.c.l.b16 %v3698
    %v3768 = vunpack.c.h.b16 %v3698
    %v3769 = vunpack.c.l.b16 %v3699
    %v3770 = vunpack.c.l.b16 %v3700
    %v3771 = vunpack.c.h.b16 %v3700
    %v3772 = vunpack.c.l.b16 %v3701
    %v3773 = vunpack.c.l.b16 %v3702
    %v3774 = vunpack.c.h.b16 %v3702
    %v3775 = vunpack.c.l.b16 %v3703
    %v3776 = vunpack.c.l.b16 %v3704
    %v3777 = vunpack.c.h.b16 %v3704
    %v3778 = vunpack.c.l.b16 %v3705
    %v3779 = vunpack.c.l.b16 %v3706
    %v3780 = vunpack.c.h.b16 %v3706
    %v3781 = vunpack.c.l.b16 %v3707
    %v3782 = vunpack.c.l.b16 %v3708
    %v3783 = vunpack.c.h.b16 %v3708
    %v3784 = vunpack.c.l.b16 %v3709
    %v3785 = vunpack.c.l.b16 %v3710
    %v3786 = vunpack.c.h.b16 %v3710
    %v3787 = vunpack.c.l.b16 %v3711
    %v3788 = vunpack.c.l.b16 %v3712
    %v3789 = vunpack.c.h.b16 %v3712
    %v3790 = vunpack.c.l.b16 %v3713
    %v3791 = vunpack.c.l.b16 %v3714
    %v3792 = vunpack.c.h.b16 %v3714
    %v3793 = vunpack.c.l.b16 %v3715
    %v3794 = vunpack.c.l.b16 %v3716
    %v3795 = vunpack.c.h.b16 %v3716
    %v3796 = vunpack.c.l.b16 %v3717
    %v3797 = vunpack.c.l.b16 %v3718
    %v3798 = vunpack.c.h.b16 %v3718
    %v3799 = vunpack.c.l.b16 %v3719
    %v3800 = vunpack.c.l.b16 %v3720
    %v3801 = vunpack.c.h.b16 %v3720
    %v3802 = vunpack.c.l.b16 %v3721
    %v3803 = vpack.c.b16 %v3758, %v3755
    %v3804 = vpack.c.b16 %v3759, %v3756
    %v3805 = vpack.c.b16 %v3760, %v3757
    %v3806 = vpack.c.b16 %v3764, %v3761
    %v3807 = vpack.c.b16 %v3765, %v3762
    %v3808 = vpack.c.b16 %v3766, %v3763
    %v3809 = vpack.c.b16 %v3770, %v3767
    %v3810 = vpack.c.b16 %v3771, %v3768
    %v3811 = vpack.c.b16 %v3772, %v3769
    %v3812 = vpack.c.b16 %v3776, %v3773
    %v3813 = vpack.c.b16 %v3777, %v3774
    %v3814 = vpack.c.b16 %v3778, %v3775
    %v3815 = vpack.c.b16 %v3782, %v3779
    %v3816 = vpack.c.b16 %v3783, %v3780
    %v3817 = vpack.c.b16 %v3784, %v3781
    %v3818 = vpack.c.b16 %v3788, %v3785
    %v3819 = vpack.c.b16 %v3789, %v3786
    %v3820 = vpack.c.b16 %v3790, %v3787
    %v3821 = vpack.c.b16 %v3794, %v3791
    %v3822 = vpack.c.b16 %v3795, %v3792
    %v3823 = vpack.c.b16 %v3796, %v3793
    %v3824 = vpack.c.b16 %v3800, %v3797
    %v3825 = vpack.c.b16 %v3801, %v3798
    %v3826 = vpack.c.b16 %v3802, %v3799
    %v3852 = vlaneseq
    %v3853 = vshrl.u32 %v3852, 7
    %v3854 = vsub.s32 0, %v3853
    %v3855 = vrot.slane %v3722, %v3854
    %v3856 = vlaneseq
    %v3857 = vshrl.u32 %v3856, 7
    %v3858 = vsub.s32 1, %v3857
    %v3859 = vrot.slane %v3722, %v3858
    %v3860 = vlaneseq
    %v3861 = vshrl.u32 %v3860, 7
    %v3862 = vsub.s32 2, %v3861
    %v3863 = vrot.slane %v3722, %v3862
    %3867 = vmatprep.subr.bf16.mxu0 %v3804
    %3868 = vmatpush1.bf16.msra.mxu0 %v3803
    %3869 = vmatprep.subr.bf16.mxu0 %v3807
    %3870 = vmatpush1.bf16.msra.mxu0 %v3806
    %3871 = vmatprep.subr.bf16.mxu0 %v3810
    %3872 = vmatpush1.bf16.msra.mxu0 %v3809
    %3873 = vmatprep.subr.bf16.mxu0 %v3813
    %3874 = vmatpush1.bf16.msra.mxu0 %v3812
    %3875 = vmatprep.subr.bf16.mxu0 %v3816
    %3876 = vmatpush1.bf16.msra.mxu0 %v3815
    %3877 = vmatprep.subr.bf16.mxu0 %v3819
    %3878 = vmatpush1.bf16.msra.mxu0 %v3818
    %3879 = vmatprep.subr.bf16.mxu0 %v3822
    %3880 = vmatpush1.bf16.msra.mxu0 %v3821
    %3881 = vmatprep.subr.bf16.mxu0 %v3825
    %3882 = vmatpush1.bf16.msra.mxu0 %v3824
    %3883 = vmatprep.subr.bf16.mxu0 0
    %3884 = vmatpush1.bf16.msra.mxu0 0
    %3885 = vmatprep.subr.bf16.mxu0 0
    %3886 = vmatpush1.bf16.msra.mxu0 0
    %3887 = vmatprep.subr.bf16.mxu0 0
    %3888 = vmatpush1.bf16.msra.mxu0 0
    %3889 = vmatprep.subr.bf16.mxu0 0
    %3890 = vmatpush1.bf16.msra.mxu0 0
    %3891 = vmatprep.subr.bf16.mxu0 0
    %3892 = vmatpush1.bf16.msra.mxu0 0
    %3893 = vmatprep.subr.bf16.mxu0 0
    %3894 = vmatpush1.bf16.msra.mxu0 0
    %3895 = vmatprep.subr.bf16.mxu0 0
    %3896 = vmatpush1.bf16.msra.mxu0 0
    %3897 = vmatprep.subr.bf16.mxu0 0
    %3898 = vmatpush1.bf16.msra.mxu0 0
    %3899 = vmatprep.mubr.bf16.mxu0 0
    %3900 = vmatmul.mubr.bf16.gmra.mrb[0].mxu0 %v3689
    %v3901 = vpop.f32.mrb[0].mxu0
    %v3902 = vadd.f32 %v3855, %v3901
    %v3903 = vpop.f32.mrb[0].mxu0
    %v3904 = vadd.f32 %v3859, %v3903
    %v3905 = vpop.f32.mrb[0].mxu0
    %v3906 = vpop.f32.mrb[0].mxu0
    %3907 = vdwg.mxu0
    %3908 = vmatprep.subr.bf16.mxu0 0
    %3909 = vmatpush1.bf16.msra.mxu0 %v3805
    %3910 = vmatprep.subr.bf16.mxu0 0
    %3911 = vmatpush1.bf16.msra.mxu0 %v3808
    %3912 = vmatprep.subr.bf16.mxu0 0
    %3913 = vmatpush1.bf16.msra.mxu0 %v3811
    %3914 = vmatprep.subr.bf16.mxu0 0
    %3915 = vmatpush1.bf16.msra.mxu0 %v3814
    %3916 = vmatprep.subr.bf16.mxu0 0
    %3917 = vmatpush1.bf16.msra.mxu0 %v3817
    %3918 = vmatprep.subr.bf16.mxu0 0
    %3919 = vmatpush1.bf16.msra.mxu0 %v3820
    %3920 = vmatprep.subr.bf16.mxu0 0
    %3921 = vmatpush1.bf16.msra.mxu0 %v3823
    %3922 = vmatprep.subr.bf16.mxu0 0
    %3923 = vmatpush1.bf16.msra.mxu0 %v3826
    %3924 = vmatprep.subr.bf16.mxu0 0
    %3925 = vmatpush1.bf16.msra.mxu0 0
    %3926 = vmatprep.subr.bf16.mxu0 0
    %3927 = vmatpush1.bf16.msra.mxu0 0
    %3928 = vmatprep.subr.bf16.mxu0 0
    %3929 = vmatpush1.bf16.msra.mxu0 0
    %3930 = vmatprep.subr.bf16.mxu0 0
    %3931 = vmatpush1.bf16.msra.mxu0 0
    %3932 = vmatprep.subr.bf16.mxu0 0
    %3933 = vmatpush1.bf16.msra.mxu0 0
    %3934 = vmatprep.subr.bf16.mxu0 0
    %3935 = vmatpush1.bf16.msra.mxu0 0
    %3936 = vmatprep.subr.bf16.mxu0 0
    %3937 = vmatpush1.bf16.msra.mxu0 0
    %3938 = vmatprep.subr.bf16.mxu0 0
    %3939 = vmatpush1.bf16.msra.mxu0 0
    %3940 = vmatprep.mubr.bf16.mxu0 0
    %3941 = vmatmul.mubr.bf16.gmra.mrb[0].mxu0 %v3689
    %v3942 = vpop.f32.mrb[0].mxu0
    %v3943 = vadd.f32 %v3863, %v3942
    %v3944 = vpop.f32.mrb[0].mxu0
    %v3945 = vpop.f32.mrb[0].mxu0
    %v3946 = vpop.f32.mrb[0].mxu0
    %3947 = vdwg.mxu0
    %v3948 = vadd.f32 %v3902, %v3419
    %v3949 = vxor.u32 %v3948, 2147483648
    %v3950 = vmul.f32 %v3949, 1.442695
    %v3951 = vpow.pop %v3950
    %v3952 = vadd.f32 %v3951, 1.0
    %v3953 = vrcp.pop %v3952
    %v3954 = vmul.f32 1.0, %v3953
    %v3955 = vadd.f32 %v3904, %v3458
    %v3956 = vxor.u32 %v3955, 2147483648
    %v3957 = vmul.f32 %v3956, 1.442695
    %v3958 = vpow.pop %v3957
    %v3959 = vadd.f32 %v3958, 1.0
    %v3960 = vrcp.pop %v3959
    %v3961 = vmul.f32 1.0, %v3960
    %v3962 = vmul.f32 %v3954, %v3460
    %v3963 = vadd.f32 %v3943, %v3962
    %v3964 = vtanh.pop %v3963
    %v3965 = vsub.f32 1.0, %v3961
    %v3966 = vmul.f32 %v3965, %v3964
    %v3967 = vmul.f32 %v3961, %v3014
    %v3968 = vadd.f32 %v3966, %v3967
    %3969 = vst [vmem:[#allocation2 + $0x3] sm:$0x1] %v3968
    %3970 = vst [vmem:[#allocation20] sm:$0x1] %v3968
    %v3971 = vld [vmem:[#allocation2] sm:$0xf]
    %v3972 = vpack.c.bf16 %v3971, %v3971
    %v3973 = vld [vmem:[#allocation15] sm:$0xf]
    %v3974 = vld [vmem:[#allocation15 + $0x4] sm:$0xf]
    %v3975 = vld [vmem:[#allocation15 + $0x8] sm:$0xf]
    %v3976 = vld [vmem:[#allocation15 + $0xc] sm:$0xf]
    %v3977 = vld [vmem:[#allocation15 + $0x10] sm:$0xf]
    %v3978 = vld [vmem:[#allocation15 + $0x14] sm:$0xf]
    %v3979 = vld [vmem:[#allocation15 + $0x18] sm:$0xf]
    %v3980 = vld [vmem:[#allocation15 + $0x1c] sm:$0xf]
    %v3981 = vld [vmem:[#allocation15 + $0x20] sm:$0xf]
    %v3982 = vld [vmem:[#allocation15 + $0x24] sm:$0xf]
    %v3983 = vld [vmem:[#allocation15 + $0x28] sm:$0xf]
    %v3984 = vld [vmem:[#allocation15 + $0x2c] sm:$0xf]
    %v3985 = vld [vmem:[#allocation15 + $0x30] sm:$0xf]
    %v3986 = vld [vmem:[#allocation15 + $0x34] sm:$0xf]
    %v3987 = vld [vmem:[#allocation15 + $0x38] sm:$0xf]
    %v3988 = vld [vmem:[#allocation15 + $0x3c] sm:$0xf]
    %v3989 = vld [vmem:[%s11] sm:$0x1]
    %v3991 = vlaneseq
    %v3992 = vshrl.u32 %v3991, 7
    %v3993 = vsub.s32 0, %v3992
    %v3994 = vrot.slane %v3989, %v3993
    %v4012 = vunpack.c.l.b16 %v3973
    %v4013 = vunpack.c.l.b16 %v3974
    %v4014 = vunpack.c.l.b16 %v3975
    %v4015 = vunpack.c.l.b16 %v3976
    %v4016 = vunpack.c.l.b16 %v3977
    %v4017 = vunpack.c.l.b16 %v3978
    %v4018 = vunpack.c.l.b16 %v3979
    %v4019 = vunpack.c.l.b16 %v3980
    %v4020 = vunpack.c.l.b16 %v3981
    %v4021 = vunpack.c.l.b16 %v3982
    %v4022 = vunpack.c.l.b16 %v3983
    %v4023 = vunpack.c.l.b16 %v3984
    %v4024 = vunpack.c.l.b16 %v3985
    %v4025 = vunpack.c.l.b16 %v3986
    %v4026 = vunpack.c.l.b16 %v3987
    %v4027 = vunpack.c.l.b16 %v3988
    %v4028 = vpack.c.b16 %v4013, %v4012
    %v4029 = vpack.c.b16 %v4015, %v4014
    %v4030 = vpack.c.b16 %v4017, %v4016
    %v4031 = vpack.c.b16 %v4019, %v4018
    %v4032 = vpack.c.b16 %v4021, %v4020
    %v4033 = vpack.c.b16 %v4023, %v4022
    %v4034 = vpack.c.b16 %v4025, %v4024
    %v4035 = vpack.c.b16 %v4027, %v4026
    %4044 = vmatprep.subr.bf16.mxu0 0
    %4045 = vmatpush1.bf16.msra.mxu0 %v4028
    %4046 = vmatprep.subr.bf16.mxu0 0
    %4047 = vmatpush1.bf16.msra.mxu0 %v4029
    %4048 = vmatprep.subr.bf16.mxu0 0
    %4049 = vmatpush1.bf16.msra.mxu0 %v4030
    %4050 = vmatprep.subr.bf16.mxu0 0
    %4051 = vmatpush1.bf16.msra.mxu0 %v4031
    %4052 = vmatprep.subr.bf16.mxu0 0
    %4053 = vmatpush1.bf16.msra.mxu0 %v4032
    %4054 = vmatprep.subr.bf16.mxu0 0
    %4055 = vmatpush1.bf16.msra.mxu0 %v4033
    %4056 = vmatprep.subr.bf16.mxu0 0
    %4057 = vmatpush1.bf16.msra.mxu0 %v4034
    %4058 = vmatprep.subr.bf16.mxu0 0
    %4059 = vmatpush1.bf16.msra.mxu0 %v4035
    %4060 = vmatprep.subr.bf16.mxu0 0
    %4061 = vmatpush1.bf16.msra.mxu0 0
    %4062 = vmatprep.subr.bf16.mxu0 0
    %4063 = vmatpush1.bf16.msra.mxu0 0
    %4064 = vmatprep.subr.bf16.mxu0 0
    %4065 = vmatpush1.bf16.msra.mxu0 0
    %4066 = vmatprep.subr.bf16.mxu0 0
    %4067 = vmatpush1.bf16.msra.mxu0 0
    %4068 = vmatprep.subr.bf16.mxu0 0
    %4069 = vmatpush1.bf16.msra.mxu0 0
    %4070 = vmatprep.subr.bf16.mxu0 0
    %4071 = vmatpush1.bf16.msra.mxu0 0
    %4072 = vmatprep.subr.bf16.mxu0 0
    %4073 = vmatpush1.bf16.msra.mxu0 0
    %4074 = vmatprep.subr.bf16.mxu0 0
    %4075 = vmatpush1.bf16.msra.mxu0 0
    %4076 = vmatprep.mubr.bf16.mxu0 0
    %4077 = vmatmul.mubr.bf16.gmra.mrb[0].mxu0 %v3972
    %v4078 = vpop.f32.mrb[0].mxu0
    %v4079 = vadd.f32 %v3994, %v4078
    %v4080 = vpop.f32.mrb[0].mxu0
    %v4081 = vpop.f32.mrb[0].mxu0
    %v4082 = vpop.f32.mrb[0].mxu0
    %4083 = vdwg.mxu0
    %vm4084 = vcmask 1043456
    %v4085 = vsel %vm4084, %v4079, -inf
    %4086 = vmax.xlane.f32.xlu0 %v4085
    %v4087 = vpop.xlane.xlu0 %4086
    %v4088 = vsub.f32 %v4079, %v4087
    %v4089 = vmul.f32 %v4088, 1.442695
    %v4090 = vpow.pop %v4089
    %v4091 = vsel %vm4084, %v4090, 0.0
    %4092 = vadd.xlane.f32.xlu0 %v4091
    %v4093 = vpop.xlane.xlu0 %4092
    %v4094 = vlog2.pop %v4093
    %v4095 = vmul.f32 %v4094, 0.6931472
    %v4096 = vsub.f32 %v4088, %v4095
    %4097 = vst [vmem:[#allocation18] sm:$0xf] %v4096
    // Predicated region
    $region82: #{tpu_custom_call.1} parent=1 // pred_check
      _
    $region83: #{tpu_custom_call.1} parent=1 // pred_check_branch
      %4099 = sbr.rel (0) target = $region85
    $region84: #{tpu_custom_call.1} parent=1 // pred_region
      %s4101 = ssub.s32 64, 64
      %4102 = vsyncadd [#allocation5], %s4101
      %s4104 = sshll.u32 [#allocation17], 4
      %s4105 = int_to_ptr.vmem [resolvable:$true] %s4104
      %4107 = dma.vmem_to_hbm [thread:$0]  %s4105, 64, %s12, [#allocation5]
    $region85: #{tpu_custom_call.1} parent=1 // pred_fallthru
      _
    // Predicated region
    $region86: #{tpu_custom_call.1} parent=1 // pred_check
      _
    $region87: #{tpu_custom_call.1} parent=1 // pred_check_branch
      %4109 = sbr.rel (0) target = $region89
    $region88: #{tpu_custom_call.1} parent=1 // pred_region
      %s4111 = ssub.s32 64, 64
      %4112 = vsyncadd [#allocation19], %s4111
      %s4114 = sshll.u32 [#allocation18], 4
      %s4115 = int_to_ptr.vmem [resolvable:$true] %s4114
      %4117 = dma.vmem_to_hbm [thread:$0]  %s4115, 64, %s13, [#allocation19]
    $region89: #{tpu_custom_call.1} parent=1 // pred_fallthru
      _
    // Predicated region
    $region90: #{tpu_custom_call.1} parent=1 // pred_check
      _
    $region91: #{tpu_custom_call.1} parent=1 // pred_check_branch
      %4119 = sbr.rel (0) target = $region93
    $region92: #{tpu_custom_call.1} parent=1 // pred_region
      %s4121 = ssub.s32 16, 16
      %4122 = vsyncadd [#allocation19], %s4121
      %s4124 = sshll.u32 [#allocation20], 4
      %s4125 = int_to_ptr.vmem [resolvable:$true] %s4124
      %4127 = dma.vmem_to_hbm [thread:$0]  %s4125, 16, %s14, [#allocation19]
    $region93: #{tpu_custom_call.1} parent=1 // pred_fallthru
      _
    // Predicated region
    $region94: #{tpu_custom_call.1} parent=1 // pred_check
      _
    $region95: #{tpu_custom_call.1} parent=1 // pred_check_branch
      %4129 = sbr.rel (0) target = $region97
    $region96: #{tpu_custom_call.1} parent=1 // pred_region
      %4130 = dma.done [#allocation5], 64
    $region97: #{tpu_custom_call.1} parent=1 // pred_fallthru
      _
    // Predicated region
    $region98: #{tpu_custom_call.1} parent=1 // pred_check
      _
    $region99: #{tpu_custom_call.1} parent=1 // pred_check_branch
      %4132 = sbr.rel (0) target = $region101
    $region100: #{tpu_custom_call.1} parent=1 // pred_region
      %4133 = dma.done [#allocation19], 64
    $region101: #{tpu_custom_call.1} parent=1 // pred_fallthru
      _
    // Predicated region
    $region102: #{tpu_custom_call.1} parent=1 // pred_check
      _
    $region103: #{tpu_custom_call.1} parent=1 // pred_check_branch
      %4135 = sbr.rel (0) target = $region105
    $region104: #{tpu_custom_call.1} parent=1 // pred_region
      %4136 = dma.done [#allocation19], 16
    $region105: #{tpu_custom_call.1} parent=1 // pred_fallthru
      _
    %4137 = vsyncpa [#allocation4], 1
    %4138 = vsyncpa [#allocation7], 1
    %4139 = vsyncpa [#allocation10], 1
    %4140 = vsyncpa [#allocation13], 1
    %4141 = vsyncpa [#allocation16], 1
    %4142 = vsyncpa [#allocation5], 1
    %4143 = vsyncpa [#allocation19], 1

</llo_original>
